<compile_context>
chip_gen: v5e
topology: v5e:2x2
jax: 0.10.0
libtpu: 0.0.40
codegen_flags: <defaults>
</compile_context>

<pallas_src>
import functools

import jax
import jax.numpy as jnp
from jax.experimental import pallas as pl
from jax.experimental.pallas import tpu as pltpu

_BP = 8  # sublane-padded batch tile (one 8-row block of an (8,128) f32 vreg)


# ------------------------------------------------------------------
# Fused kernel: L LSTM layers + FC head, everything resident in VMEM
# ------------------------------------------------------------------
def _build_char_model_kernel(num_layers, num_hidden, seq_len, compute_dtype,
                             unroll_time):
    L, H, S, BP = num_layers, num_hidden, seq_len, _BP

    def kernel(*refs):
        # ---- unpack refs (inputs, outputs, scratch) ----------------------
        n_in = 3 + 3 * L + 2
        x_ref, h0_ref, c0_ref = refs[0:3]            # x: (S*BP, V)
        layer_refs = refs[3:3 + 3 * L]               # (wih, whh, b) per layer
        fcw_ref, fcb_ref = refs[3 + 3 * L:n_in]
        out_ref, hn_ref, cn_ref = refs[n_in:n_in + 3]
        gx_scr, hseq_scr = refs[n_in + 3:]

        def lstm_step(row, h, c, whh):
            """One timestep: only h @ W_hh is on the serial MXU path."""
            gates = gx_scr[pl.ds(row, BP), :] + jnp.dot(
                h.astype(compute_dtype), whh,
                preferred_element_type=jnp.float32)        # (BP, 4H) f32
            # 2 EUP passes for all four gates (+1 for tanh(c_new) below).
            sig = jax.nn.sigmoid(gates)
            tnh = jnp.tanh(gates)
            # PyTorch gate order: input, forget, cell(g), output
            i_g = sig[:, 0 * H:1 * H]
            f_g = sig[:, 1 * H:2 * H]
            o_g = sig[:, 3 * H:4 * H]
            g_g = tnh[:, 2 * H:3 * H]
            c_new = f_g * c + i_g * g_g
            h_new = o_g * jnp.tanh(c_new)
            # Full (8, H) sublane tile per step: no masked-store RMW.
            hseq_scr[pl.ds(row, BP), :] = h_new
            return h_new, c_new

        for layer in range(L):
            wih_ref = layer_refs[3 * layer + 0]
            whh_ref = layer_refs[3 * layer + 1]
            b_ref = layer_refs[3 * layer + 2]

            # Hoisted input projection + bias: one big MXU matmul per layer,
            # off the serial critical path.
            inp = x_ref[...] if layer == 0 else hseq_scr[...]
            gx_scr[...] = (jnp.dot(inp.astype(compute_dtype), wih_ref[...],
                                   preferred_element_type=jnp.float32)
                           + b_ref[...])                           # (S*BP, 4H)

            # Recurrent state carried in vregs, f32.
            h = h0_ref[layer]
            c = c0_ref[layer]
            whh = whh_ref[...]              # resident across the time loop
            # TODO(synk): pltpu.matmul_push_rhs to pin whh in MXU staging regs.

            if unroll_time:
                for t in range(S):          # static unroll (small, fixed S)
                    h, c = lstm_step(t * BP, h, c, whh)
            else:
                def body(t, hc):
                    return lstm_step(pl.multiple_of(t * BP, BP),
                                     hc[0], hc[1], whh)
                h, c = jax.lax.fori_loop(0, S, body, (h, c), unroll=8)

            hn_ref[layer] = h
            cn_ref[layer] = c

            # TODO(synk): inter-layer LSTM dropout (drop_prob) applies only
            # in training mode; eval semantics (identity) are used here.

        # ---- fused FC head epilogue (lane-dense 128-wide store) ----------
        # TODO(synk): self.dropout on lstm_output is training-only; identity.
        logits = jnp.dot(hseq_scr[...].astype(compute_dtype), fcw_ref[...],
                         preferred_element_type=jnp.float32) + fcb_ref[...]
        out_ref[...] = logits.astype(out_ref.dtype)

    return kernel


# ------------------------------------------------------------------
# Wrapper around pallas_call (eval-mode CharModel.forward)
# ------------------------------------------------------------------
def char_model_forward(x, hidden, params, num_layers, num_hidden,
                       compute_dtype=jnp.float32):
    """x: (B, S, V) one-hot, hidden = (h0, c0) each (L, B, H).
    Returns (final_out (B*S, V), (h_n, c_n))."""
    h0, c0 = hidden
    B, S, V = x.shape
    H, L, BP = num_hidden, num_layers, _BP
    nb = pl.cdiv(B, BP)          # batch blocks (grid, "parallel")
    Bp = nb * BP
    Vp = ((V + 127) // 128) * 128  # lane-dense logits width
    pad_b = Bp - B

    # Pad batch to the 8-sublane tile; rows inside batch block i are
    # (t*BP + b_local), i.e. time-major, sublane-aligned.
    xp = jnp.pad(x.astype(compute_dtype), ((0, pad_b), (0, 0), (0, 0)))
    x_tm = xp.reshape(nb, BP, S, V).transpose(0, 2, 1, 3).reshape(nb * S * BP, V)
    h0p = jnp.pad(h0, ((0, 0), (0, pad_b), (0, 0)))
    c0p = jnp.pad(c0, ((0, 0), (0, pad_b), (0, 0)))

    # Zero-pad FC weights to a 128-lane output (sliced back below).
    fc_w = jnp.pad(params["fc_w"].astype(compute_dtype), ((0, 0), (0, Vp - V)))
    fc_b = jnp.pad(params["fc_b"], ((0, Vp - V),)).reshape(1, Vp)

    flat_inputs = [x_tm, h0p, c0p]
    in_specs = [
        pl.BlockSpec((S * BP, V), lambda i: (i, 0)),
        pl.BlockSpec((L, BP, H), lambda i: (0, i, 0)),
        pl.BlockSpec((L, BP, H), lambda i: (0, i, 0)),
    ]
    for layer in range(L):
        in_size = V if layer == 0 else H
        flat_inputs += [params[f"wih_{layer}"].astype(compute_dtype),
                        params[f"whh_{layer}"].astype(compute_dtype),
                        params[f"b_{layer}"]]                       # bias f32
        in_specs += [pl.BlockSpec((in_size, 4 * H), lambda i: (0, 0)),
                     pl.BlockSpec((H, 4 * H), lambda i: (0, 0)),
                     pl.BlockSpec((1, 4 * H), lambda i: (0, 0))]
    flat_inputs += [fc_w, fc_b]
    in_specs += [pl.BlockSpec((H, Vp), lambda i: (0, 0)),
                 pl.BlockSpec((1, Vp), lambda i: (0, 0))]

    out_shape = (
        jax.ShapeDtypeStruct((nb * S * BP, Vp), jnp.float32),  # logits
        jax.ShapeDtypeStruct((L, Bp, H), jnp.float32),         # h_n
        jax.ShapeDtypeStruct((L, Bp, H), jnp.float32),         # c_n
    )
    out_specs = (
        pl.BlockSpec((S * BP, Vp), lambda i: (i, 0)),
        pl.BlockSpec((L, BP, H), lambda i: (0, i, 0)),
        pl.BlockSpec((L, BP, H), lambda i: (0, i, 0)),
    )
    scratch_shapes = [
        pltpu.VMEM((S * BP, 4 * H), jnp.float32),   # hoisted input projections
        pltpu.VMEM((S * BP, H), jnp.float32),       # per-layer hidden sequence
    ]

    kernel = _build_char_model_kernel(L, H, S, compute_dtype,
                                      unroll_time=(S <= 32))

    out_tm, hnp, cnp = pl.pallas_call(
        kernel,
        grid=(nb,),
        in_specs=in_specs,
        out_specs=out_specs,
        out_shape=out_shape,
        scratch_shapes=scratch_shapes,
        compiler_params=pltpu.CompilerParams(
            dimension_semantics=("parallel",)),
    )(*flat_inputs)

    # Kernel logits rows are (block, t, b_local); PyTorch's .view(-1, H) of a
    # batch_first output expects rows (b*S + t).  Tiny reorder, fused by XLA.
    out = out_tm.reshape(nb, S, BP, Vp).transpose(0, 2, 1, 3)
    final_out = out.reshape(Bp, S, Vp)[:B, :, :V].reshape(B * S, V)
    return final_out, (hnp[:, :B], cnp[:, :B])


# ------------------------------------------------------------------
# Pure-JAX reference (same dtype policy) for sanity check
# ------------------------------------------------------------------
def _reference_forward(x, hidden, params, num_layers, num_hidden,
                       compute_dtype=jnp.float32):
    h0, c0 = hidden
    B, S, V = x.shape
    H = num_hidden
    layer_in = jnp.transpose(x, (1, 0, 2)).astype(compute_dtype)   # (S, B, V)
    h_n, c_n = [], []
    for layer in range(num_layers):
        wih = params[f"wih_{layer}"].astype(compute_dtype)
        whh = params[f"whh_{layer}"].astype(compute_dtype)
        b = params[f"b_{layer}"]
        h, c = h0[layer], c0[layer]
        outs = []
        for t in range(S):
            gates = (jnp.dot(layer_in[t], wih, preferred_element_type=jnp.float32)
                     + jnp.dot(h.astype(compute_dtype), whh,
                               preferred_element_type=jnp.float32)
                     + b)
            i_g = jax.nn.sigmoid(gates[:, 0 * H:1 * H])
            f_g = jax.nn.sigmoid(gates[:, 1 * H:2 * H])
            g_g = jnp.tanh(gates[:, 2 * H:3 * H])
            o_g = jax.nn.sigmoid(gates[:, 3 * H:4 * H])
            c = f_g * c + i_g * g_g
            h = o_g * jnp.tanh(c)
            outs.append(h.astype(compute_dtype))
        layer_in = jnp.stack(outs)                                  # (S, B, H)
        h_n.append(h)
        c_n.append(c)
    flat = jnp.transpose(layer_in, (1, 0, 2)).reshape(-1, H)
    logits = (jnp.dot(flat, params["fc_w"].astype(compute_dtype),
                      preferred_element_type=jnp.float32)
              + params["fc_b"].reshape(1, -1))
    return logits, (jnp.stack(h_n), jnp.stack(c_n))


# ------------------------------------------------------------------
# Deterministic parameter init (matches nn.LSTM / nn.Linear shapes,
# stored pre-transposed for right-multiplication)
# ------------------------------------------------------------------
def init_params(key, vocab, num_hidden, num_layers):
    params = {}
    bound = 1.0 / jnp.sqrt(jnp.float32(num_hidden))
    for layer in range(num_layers):
        in_size = vocab if layer == 0 else num_hidden
        key, k1, k2, k3, k4 = jax.random.split(key, 5)
        params[f"wih_{layer}"] = jax.random.uniform(
            k1, (in_size, 4 * num_hidden), jnp.float32, -bound, bound)
        params[f"whh_{layer}"] = jax.random.uniform(
            k2, (num_hidden, 4 * num_hidden), jnp.float32, -bound, bound)
        b_ih = jax.random.uniform(k3, (4 * num_hidden,), jnp.float32, -bound, bound)
        b_hh = jax.random.uniform(k4, (4 * num_hidden,), jnp.float32, -bound, bound)
        params[f"b_{layer}"] = (b_ih + b_hh).reshape(1, 4 * num_hidden)
    key, k5, k6 = jax.random.split(key, 3)
    params["fc_w"] = jax.random.uniform(
        k5, (num_hidden, vocab), jnp.float32, -bound, bound)
    params["fc_b"] = jax.random.uniform(k6, (vocab,), jnp.float32, -bound, bound)
    return params


# ------------------------------------------------------------------
if __name__ == "__main__":
    batch, seq, vocab = 2, 8, 16
    num_hidden, num_layers = 32, 4

    key = jax.random.PRNGKey(0)
    key, kx, kp = jax.random.split(key, 3)

    # Deterministic one-hot input (like one_hot_encoder over random char ids).
    char_ids = jax.random.randint(kx, (batch, seq), 0, vocab)
    x = jax.nn.one_hot(char_ids, vocab, dtype=jnp.float32)       # (B, S, V)

    # hidden_state(batch_size): zeros of shape (num_layers, batch, num_hidden)
    h0 = jnp.zeros((num_layers, batch, num_hidden), jnp.float32)
    c0 = jnp.zeros((num_layers, batch, num_hidden), jnp.float32)

    params = init_params(kp, vocab, num_hidden, num_layers)

    fwd = jax.jit(functools.partial(char_model_forward,
                                    num_layers=num_layers,
                                    num_hidden=num_hidden))
    final_out, (h_n, c_n) = fwd(x, (h0, c0), params)
    jax.block_until_ready((final_out, h_n, c_n))

    assert final_out.shape == (batch * seq, vocab)
    assert h_n.shape == (num_layers, batch, num_hidden)
    assert c_n.shape == (num_layers, batch, num_hidden)

    # Correctness check against a pure-JAX f32 reference.
    ref_out, (ref_h, ref_c) = _reference_forward(
        x, (h0, c0), params, num_layers, num_hidden)
    assert jnp.allclose(final_out, ref_out, atol=1e-2, rtol=1e-2), (
        "logits mismatch, max abs err = "
        + str(float(jnp.max(jnp.abs(final_out - ref_out)))))
    assert jnp.allclose(h_n, ref_h, atol=1e-2, rtol=1e-2)
    assert jnp.allclose(c_n, ref_c, atol=1e-2, rtol=1e-2)

    print("KERNEL_OK")
</pallas_src>

<mosaic_0001>
module attributes {stable_mosaic.version = 11 : i64} {
  func.func @kernel(%arg0: i32, %arg1: memref<64x16xf32, #tpu.memory_space<vmem>>, %arg2: memref<4x8x32xf32, #tpu.memory_space<vmem>>, %arg3: memref<4x8x32xf32, #tpu.memory_space<vmem>>, %arg4: memref<16x128xf32, #tpu.memory_space<vmem>>, %arg5: memref<32x128xf32, #tpu.memory_space<vmem>>, %arg6: memref<1x128xf32, #tpu.memory_space<vmem>>, %arg7: memref<32x128xf32, #tpu.memory_space<vmem>>, %arg8: memref<32x128xf32, #tpu.memory_space<vmem>>, %arg9: memref<1x128xf32, #tpu.memory_space<vmem>>, %arg10: memref<32x128xf32, #tpu.memory_space<vmem>>, %arg11: memref<32x128xf32, #tpu.memory_space<vmem>>, %arg12: memref<1x128xf32, #tpu.memory_space<vmem>>, %arg13: memref<32x128xf32, #tpu.memory_space<vmem>>, %arg14: memref<32x128xf32, #tpu.memory_space<vmem>>, %arg15: memref<1x128xf32, #tpu.memory_space<vmem>>, %arg16: memref<32x128xf32, #tpu.memory_space<vmem>>, %arg17: memref<1x128xf32, #tpu.memory_space<vmem>>, %arg18: memref<64x128xf32, #tpu.memory_space<vmem>>, %arg19: memref<4x8x32xf32, #tpu.memory_space<vmem>>, %arg20: memref<4x8x32xf32, #tpu.memory_space<vmem>>, %arg21: memref<64x128xf32, #tpu.memory_space<vmem>>, %arg22: memref<64x32xf32, #tpu.memory_space<vmem>>) attributes {dimension_semantics = [#tpu.dimension_semantics<parallel>], iteration_bounds = array<i64: 1>, scalar_prefetch = 0 : i64, scratch_operands = 2 : i64, tpu.core_type = #tpu.core_type<tc>, window_params = [{transform_indices = @transform_0, window_bounds = array<i64: 64, 16>}, {transform_indices = @transform_1, window_bounds = array<i64: 4, 8, 32>}, {transform_indices = @transform_2, window_bounds = array<i64: 4, 8, 32>}, {pipeline_mode = #tpu.pipeline_mode<synchronous>, transform_indices = @transform_3, window_bounds = array<i64: 16, 128>}, {pipeline_mode = #tpu.pipeline_mode<synchronous>, transform_indices = @transform_4, window_bounds = array<i64: 32, 128>}, {pipeline_mode = #tpu.pipeline_mode<synchronous>, transform_indices = @transform_5, window_bounds = array<i64: 1, 128>}, {pipeline_mode = #tpu.pipeline_mode<synchronous>, transform_indices = @transform_6, window_bounds = array<i64: 32, 128>}, {pipeline_mode = #tpu.pipeline_mode<synchronous>, transform_indices = @transform_7, window_bounds = array<i64: 32, 128>}, {pipeline_mode = #tpu.pipeline_mode<synchronous>, transform_indices = @transform_8, window_bounds = array<i64: 1, 128>}, {pipeline_mode = #tpu.pipeline_mode<synchronous>, transform_indices = @transform_9, window_bounds = array<i64: 32, 128>}, {pipeline_mode = #tpu.pipeline_mode<synchronous>, transform_indices = @transform_10, window_bounds = array<i64: 32, 128>}, {pipeline_mode = #tpu.pipeline_mode<synchronous>, transform_indices = @transform_11, window_bounds = array<i64: 1, 128>}, {pipeline_mode = #tpu.pipeline_mode<synchronous>, transform_indices = @transform_12, window_bounds = array<i64: 32, 128>}, {pipeline_mode = #tpu.pipeline_mode<synchronous>, transform_indices = @transform_13, window_bounds = array<i64: 32, 128>}, {pipeline_mode = #tpu.pipeline_mode<synchronous>, transform_indices = @transform_14, window_bounds = array<i64: 1, 128>}, {pipeline_mode = #tpu.pipeline_mode<synchronous>, transform_indices = @transform_15, window_bounds = array<i64: 32, 128>}, {pipeline_mode = #tpu.pipeline_mode<synchronous>, transform_indices = @transform_16, window_bounds = array<i64: 1, 128>}, {transform_indices = @transform_17, window_bounds = array<i64: 64, 128>}, {transform_indices = @transform_18, window_bounds = array<i64: 4, 8, 32>}, {transform_indices = @transform_19, window_bounds = array<i64: 4, 8, 32>}]} {
    %c0 = arith.constant 0 : index
    %c0_0 = arith.constant 0 : index
    %0 = vector.load %arg1[%c0, %c0_0] : memref<64x16xf32, #tpu.memory_space<vmem>>, vector<64x16xf32>
    %c0_1 = arith.constant 0 : index
    %c0_2 = arith.constant 0 : index
    %1 = vector.load %arg4[%c0_1, %c0_2] : memref<16x128xf32, #tpu.memory_space<vmem>>, vector<16x128xf32>
    %cst = arith.constant dense<0.000000e+00> : vector<64x128xf32>
    %2 = tpu.matmul %0, %1, %cst {dimension_numbers = #tpu.dot_dimension_numbers<[1], [0], [0], [1], [0, 0, 1, 1], [], []>} : vector<64x16xf32>, vector<16x128xf32>, vector<64x128xf32> -> vector<64x128xf32>
    %c0_3 = arith.constant 0 : index
    %c0_4 = arith.constant 0 : index
    %3 = vector.load %arg6[%c0_3, %c0_4] : memref<1x128xf32, #tpu.memory_space<vmem>>, vector<1x128xf32>
    %4 = vector.broadcast %3 : vector<1x128xf32> to vector<64x128xf32>
    %5 = arith.addf %2, %4 : vector<64x128xf32>
    %c0_5 = arith.constant 0 : index
    %c0_6 = arith.constant 0 : index
    %6 = vector.load %arg21[%c0_5, %c0_6] : memref<64x128xf32, #tpu.memory_space<vmem>>, vector<64x128xf32>
    tpu.vector_store %arg21[%c0_5, %c0_6], %5 {strides = array<i32>} : memref<64x128xf32, #tpu.memory_space<vmem>>, vector<64x128xf32>,
    %c0_7 = arith.constant 0 : index
    %c0_8 = arith.constant 0 : index
    %c0_9 = arith.constant 0 : index
    %7 = vector.load %arg2[%c0_7, %c0_8, %c0_9] : memref<4x8x32xf32, #tpu.memory_space<vmem>>, vector<1x8x32xf32>
    %8 = vector.shape_cast %7 : vector<1x8x32xf32> to vector<8x32xf32>
    %c0_10 = arith.constant 0 : index
    %c0_11 = arith.constant 0 : index
    %c0_12 = arith.constant 0 : index
    %9 = vector.load %arg3[%c0_10, %c0_11, %c0_12] : memref<4x8x32xf32, #tpu.memory_space<vmem>>, vector<1x8x32xf32>
    %10 = vector.shape_cast %9 : vector<1x8x32xf32> to vector<8x32xf32>
    %c0_13 = arith.constant 0 : index
    %c0_14 = arith.constant 0 : index
    %11 = vector.load %arg5[%c0_13, %c0_14] : memref<32x128xf32, #tpu.memory_space<vmem>>, vector<32x128xf32>
    %c0_15 = arith.constant 0 : index
    %c0_16 = arith.constant 0 : index
    %12 = vector.load %arg21[%c0_15, %c0_16] : memref<64x128xf32, #tpu.memory_space<vmem>>, vector<8x128xf32>
    %cst_17 = arith.constant dense<0.000000e+00> : vector<8x128xf32>
    %13 = tpu.matmul %8, %11, %cst_17 {dimension_numbers = #tpu.dot_dimension_numbers<[1], [0], [0], [1], [0, 0, 1, 1], [], []>} : vector<8x32xf32>, vector<32x128xf32>, vector<8x128xf32> -> vector<8x128xf32>
    %14 = arith.addf %12, %13 : vector<8x128xf32>
    %15 = arith.negf %14 : vector<8x128xf32>
    %16 = math.exp %15 : vector<8x128xf32>
    %cst_18 = arith.constant 1.000000e+00 : f32
    %17 = vector.broadcast %cst_18 : f32 to vector<8x128xf32>
    %18 = arith.addf %17, %16 : vector<8x128xf32>
    %19 = arith.divf %17, %18 : vector<8x128xf32>
    %20 = math.tanh %14 : vector<8x128xf32>
    %21 = vector.extract_strided_slice %19 {offsets = [0, 0], sizes = [8, 32], strides = [1, 1]} : vector<8x128xf32> to vector<8x32xf32>
    %22 = vector.extract_strided_slice %19 {offsets = [0, 32], sizes = [8, 32], strides = [1, 1]} : vector<8x128xf32> to vector<8x32xf32>
    %23 = vector.extract_strided_slice %19 {offsets = [0, 96], sizes = [8, 32], strides = [1, 1]} : vector<8x128xf32> to vector<8x32xf32>
    %24 = vector.extract_strided_slice %20 {offsets = [0, 64], sizes = [8, 32], strides = [1, 1]} : vector<8x128xf32> to vector<8x32xf32>
    %25 = arith.mulf %22, %10 : vector<8x32xf32>
    %26 = arith.mulf %21, %24 : vector<8x32xf32>
    %27 = arith.addf %25, %26 : vector<8x32xf32>
    %28 = math.tanh %27 : vector<8x32xf32>
    %29 = arith.mulf %23, %28 : vector<8x32xf32>
    %c0_19 = arith.constant 0 : index
    %c0_20 = arith.constant 0 : index
    %30 = vector.load %arg22[%c0_19, %c0_20] : memref<64x32xf32, #tpu.memory_space<vmem>>, vector<8x32xf32>
    tpu.vector_store %arg22[%c0_19, %c0_20], %29 {strides = array<i32>} : memref<64x32xf32, #tpu.memory_space<vmem>>, vector<8x32xf32>,
    %c8 = arith.constant 8 : index
    %c0_21 = arith.constant 0 : index
    %31 = vector.load %arg21[%c8, %c0_21] : memref<64x128xf32, #tpu.memory_space<vmem>>, vector<8x128xf32>
    %cst_22 = arith.constant dense<0.000000e+00> : vector<8x128xf32>
    %32 = tpu.matmul %29, %11, %cst_22 {dimension_numbers = #tpu.dot_dimension_numbers<[1], [0], [0], [1], [0, 0, 1, 1], [], []>} : vector<8x32xf32>, vector<32x128xf32>, vector<8x128xf32> -> vector<8x128xf32>
    %33 = arith.addf %31, %32 : vector<8x128xf32>
    %34 = arith.negf %33 : vector<8x128xf32>
    %35 = math.exp %34 : vector<8x128xf32>
    %cst_23 = arith.constant 1.000000e+00 : f32
    %36 = vector.broadcast %cst_23 : f32 to vector<8x128xf32>
    %37 = arith.addf %36, %35 : vector<8x128xf32>
    %38 = arith.divf %36, %37 : vector<8x128xf32>
    %39 = math.tanh %33 : vector<8x128xf32>
    %40 = vector.extract_strided_slice %38 {offsets = [0, 0], sizes = [8, 32], strides = [1, 1]} : vector<8x128xf32> to vector<8x32xf32>
    %41 = vector.extract_strided_slice %38 {offsets = [0, 32], sizes = [8, 32], strides = [1, 1]} : vector<8x128xf32> to vector<8x32xf32>
    %42 = vector.extract_strided_slice %38 {offsets = [0, 96], sizes = [8, 32], strides = [1, 1]} : vector<8x128xf32> to vector<8x32xf32>
    %43 = vector.extract_strided_slice %39 {offsets = [0, 64], sizes = [8, 32], strides = [1, 1]} : vector<8x128xf32> to vector<8x32xf32>
    %44 = arith.mulf %41, %27 : vector<8x32xf32>
    %45 = arith.mulf %40, %43 : vector<8x32xf32>
    %46 = arith.addf %44, %45 : vector<8x32xf32>
    %47 = math.tanh %46 : vector<8x32xf32>
    %48 = arith.mulf %42, %47 : vector<8x32xf32>
    %c8_24 = arith.constant 8 : index
    %c0_25 = arith.constant 0 : index
    %49 = vector.load %arg22[%c8_24, %c0_25] : memref<64x32xf32, #tpu.memory_space<vmem>>, vector<8x32xf32>
    tpu.vector_store %arg22[%c8_24, %c0_25], %48 {strides = array<i32>} : memref<64x32xf32, #tpu.memory_space<vmem>>, vector<8x32xf32>,
    %c16 = arith.constant 16 : index
    %c0_26 = arith.constant 0 : index
    %50 = vector.load %arg21[%c16, %c0_26] : memref<64x128xf32, #tpu.memory_space<vmem>>, vector<8x128xf32>
    %cst_27 = arith.constant dense<0.000000e+00> : vector<8x128xf32>
    %51 = tpu.matmul %48, %11, %cst_27 {dimension_numbers = #tpu.dot_dimension_numbers<[1], [0], [0], [1], [0, 0, 1, 1], [], []>} : vector<8x32xf32>, vector<32x128xf32>, vector<8x128xf32> -> vector<8x128xf32>
    %52 = arith.addf %50, %51 : vector<8x128xf32>
    %53 = arith.negf %52 : vector<8x128xf32>
    %54 = math.exp %53 : vector<8x128xf32>
    %cst_28 = arith.constant 1.000000e+00 : f32
    %55 = vector.broadcast %cst_28 : f32 to vector<8x128xf32>
    %56 = arith.addf %55, %54 : vector<8x128xf32>
    %57 = arith.divf %55, %56 : vector<8x128xf32>
    %58 = math.tanh %52 : vector<8x128xf32>
    %59 = vector.extract_strided_slice %57 {offsets = [0, 0], sizes = [8, 32], strides = [1, 1]} : vector<8x128xf32> to vector<8x32xf32>
    %60 = vector.extract_strided_slice %57 {offsets = [0, 32], sizes = [8, 32], strides = [1, 1]} : vector<8x128xf32> to vector<8x32xf32>
    %61 = vector.extract_strided_slice %57 {offsets = [0, 96], sizes = [8, 32], strides = [1, 1]} : vector<8x128xf32> to vector<8x32xf32>
    %62 = vector.extract_strided_slice %58 {offsets = [0, 64], sizes = [8, 32], strides = [1, 1]} : vector<8x128xf32> to vector<8x32xf32>
    %63 = arith.mulf %60, %46 : vector<8x32xf32>
    %64 = arith.mulf %59, %62 : vector<8x32xf32>
    %65 = arith.addf %63, %64 : vector<8x32xf32>
    %66 = math.tanh %65 : vector<8x32xf32>
    %67 = arith.mulf %61, %66 : vector<8x32xf32>
    %c16_29 = arith.constant 16 : index
    %c0_30 = arith.constant 0 : index
    %68 = vector.load %arg22[%c16_29, %c0_30] : memref<64x32xf32, #tpu.memory_space<vmem>>, vector<8x32xf32>
    tpu.vector_store %arg22[%c16_29, %c0_30], %67 {strides = array<i32>} : memref<64x32xf32, #tpu.memory_space<vmem>>, vector<8x32xf32>,
    %c24 = arith.constant 24 : index
    %c0_31 = arith.constant 0 : index
    %69 = vector.load %arg21[%c24, %c0_31] : memref<64x128xf32, #tpu.memory_space<vmem>>, vector<8x128xf32>
    %cst_32 = arith.constant dense<0.000000e+00> : vector<8x128xf32>
    %70 = tpu.matmul %67, %11, %cst_32 {dimension_numbers = #tpu.dot_dimension_numbers<[1], [0], [0], [1], [0, 0, 1, 1], [], []>} : vector<8x32xf32>, vector<32x128xf32>, vector<8x128xf32> -> vector<8x128xf32>
    %71 = arith.addf %69, %70 : vector<8x128xf32>
    %72 = arith.negf %71 : vector<8x128xf32>
    %73 = math.exp %72 : vector<8x128xf32>
    %cst_33 = arith.constant 1.000000e+00 : f32
    %74 = vector.broadcast %cst_33 : f32 to vector<8x128xf32>
    %75 = arith.addf %74, %73 : vector<8x128xf32>
    %76 = arith.divf %74, %75 : vector<8x128xf32>
    %77 = math.tanh %71 : vector<8x128xf32>
    %78 = vector.extract_strided_slice %76 {offsets = [0, 0], sizes = [8, 32], strides = [1, 1]} : vector<8x128xf32> to vector<8x32xf32>
    %79 = vector.extract_strided_slice %76 {offsets = [0, 32], sizes = [8, 32], strides = [1, 1]} : vector<8x128xf32> to vector<8x32xf32>
    %80 = vector.extract_strided_slice %76 {offsets = [0, 96], sizes = [8, 32], strides = [1, 1]} : vector<8x128xf32> to vector<8x32xf32>
    %81 = vector.extract_strided_slice %77 {offsets = [0, 64], sizes = [8, 32], strides = [1, 1]} : vector<8x128xf32> to vector<8x32xf32>
    %82 = arith.mulf %79, %65 : vector<8x32xf32>
    %83 = arith.mulf %78, %81 : vector<8x32xf32>
    %84 = arith.addf %82, %83 : vector<8x32xf32>
    %85 = math.tanh %84 : vector<8x32xf32>
    %86 = arith.mulf %80, %85 : vector<8x32xf32>
    %c24_34 = arith.constant 24 : index
    %c0_35 = arith.constant 0 : index
    %87 = vector.load %arg22[%c24_34, %c0_35] : memref<64x32xf32, #tpu.memory_space<vmem>>, vector<8x32xf32>
    tpu.vector_store %arg22[%c24_34, %c0_35], %86 {strides = array<i32>} : memref<64x32xf32, #tpu.memory_space<vmem>>, vector<8x32xf32>,
    %c32 = arith.constant 32 : index
    %c0_36 = arith.constant 0 : index
    %88 = vector.load %arg21[%c32, %c0_36] : memref<64x128xf32, #tpu.memory_space<vmem>>, vector<8x128xf32>
    %cst_37 = arith.constant dense<0.000000e+00> : vector<8x128xf32>
    %89 = tpu.matmul %86, %11, %cst_37 {dimension_numbers = #tpu.dot_dimension_numbers<[1], [0], [0], [1], [0, 0, 1, 1], [], []>} : vector<8x32xf32>, vector<32x128xf32>, vector<8x128xf32> -> vector<8x128xf32>
    %90 = arith.addf %88, %89 : vector<8x128xf32>
    %91 = arith.negf %90 : vector<8x128xf32>
    %92 = math.exp %91 : vector<8x128xf32>
    %cst_38 = arith.constant 1.000000e+00 : f32
    %93 = vector.broadcast %cst_38 : f32 to vector<8x128xf32>
    %94 = arith.addf %93, %92 : vector<8x128xf32>
    %95 = arith.divf %93, %94 : vector<8x128xf32>
    %96 = math.tanh %90 : vector<8x128xf32>
    %97 = vector.extract_strided_slice %95 {offsets = [0, 0], sizes = [8, 32], strides = [1, 1]} : vector<8x128xf32> to vector<8x32xf32>
    %98 = vector.extract_strided_slice %95 {offsets = [0, 32], sizes = [8, 32], strides = [1, 1]} : vector<8x128xf32> to vector<8x32xf32>
    %99 = vector.extract_strided_slice %95 {offsets = [0, 96], sizes = [8, 32], strides = [1, 1]} : vector<8x128xf32> to vector<8x32xf32>
    %100 = vector.extract_strided_slice %96 {offsets = [0, 64], sizes = [8, 32], strides = [1, 1]} : vector<8x128xf32> to vector<8x32xf32>
    %101 = arith.mulf %98, %84 : vector<8x32xf32>
    %102 = arith.mulf %97, %100 : vector<8x32xf32>
    %103 = arith.addf %101, %102 : vector<8x32xf32>
    %104 = math.tanh %103 : vector<8x32xf32>
    %105 = arith.mulf %99, %104 : vector<8x32xf32>
    %c32_39 = arith.constant 32 : index
    %c0_40 = arith.constant 0 : index
    %106 = vector.load %arg22[%c32_39, %c0_40] : memref<64x32xf32, #tpu.memory_space<vmem>>, vector<8x32xf32>
    tpu.vector_store %arg22[%c32_39, %c0_40], %105 {strides = array<i32>} : memref<64x32xf32, #tpu.memory_space<vmem>>, vector<8x32xf32>,
    %c40 = arith.constant 40 : index
    %c0_41 = arith.constant 0 : index
    %107 = vector.load %arg21[%c40, %c0_41] : memref<64x128xf32, #tpu.memory_space<vmem>>, vector<8x128xf32>
    %cst_42 = arith.constant dense<0.000000e+00> : vector<8x128xf32>
    %108 = tpu.matmul %105, %11, %cst_42 {dimension_numbers = #tpu.dot_dimension_numbers<[1], [0], [0], [1], [0, 0, 1, 1], [], []>} : vector<8x32xf32>, vector<32x128xf32>, vector<8x128xf32> -> vector<8x128xf32>
    %109 = arith.addf %107, %108 : vector<8x128xf32>
    %110 = arith.negf %109 : vector<8x128xf32>
    %111 = math.exp %110 : vector<8x128xf32>
    %cst_43 = arith.constant 1.000000e+00 : f32
    %112 = vector.broadcast %cst_43 : f32 to vector<8x128xf32>
    %113 = arith.addf %112, %111 : vector<8x128xf32>
    %114 = arith.divf %112, %113 : vector<8x128xf32>
    %115 = math.tanh %109 : vector<8x128xf32>
    %116 = vector.extract_strided_slice %114 {offsets = [0, 0], sizes = [8, 32], strides = [1, 1]} : vector<8x128xf32> to vector<8x32xf32>
    %117 = vector.extract_strided_slice %114 {offsets = [0, 32], sizes = [8, 32], strides = [1, 1]} : vector<8x128xf32> to vector<8x32xf32>
    %118 = vector.extract_strided_slice %114 {offsets = [0, 96], sizes = [8, 32], strides = [1, 1]} : vector<8x128xf32> to vector<8x32xf32>
    %119 = vector.extract_strided_slice %115 {offsets = [0, 64], sizes = [8, 32], strides = [1, 1]} : vector<8x128xf32> to vector<8x32xf32>
    %120 = arith.mulf %117, %103 : vector<8x32xf32>
    %121 = arith.mulf %116, %119 : vector<8x32xf32>
    %122 = arith.addf %120, %121 : vector<8x32xf32>
    %123 = math.tanh %122 : vector<8x32xf32>
    %124 = arith.mulf %118, %123 : vector<8x32xf32>
    %c40_44 = arith.constant 40 : index
    %c0_45 = arith.constant 0 : index
    %125 = vector.load %arg22[%c40_44, %c0_45] : memref<64x32xf32, #tpu.memory_space<vmem>>, vector<8x32xf32>
    tpu.vector_store %arg22[%c40_44, %c0_45], %124 {strides = array<i32>} : memref<64x32xf32, #tpu.memory_space<vmem>>, vector<8x32xf32>,
    %c48 = arith.constant 48 : index
    %c0_46 = arith.constant 0 : index
    %126 = vector.load %arg21[%c48, %c0_46] : memref<64x128xf32, #tpu.memory_space<vmem>>, vector<8x128xf32>
    %cst_47 = arith.constant dense<0.000000e+00> : vector<8x128xf32>
    %127 = tpu.matmul %124, %11, %cst_47 {dimension_numbers = #tpu.dot_dimension_numbers<[1], [0], [0], [1], [0, 0, 1, 1], [], []>} : vector<8x32xf32>, vector<32x128xf32>, vector<8x128xf32> -> vector<8x128xf32>
    %128 = arith.addf %126, %127 : vector<8x128xf32>
    %129 = arith.negf %128 : vector<8x128xf32>
    %130 = math.exp %129 : vector<8x128xf32>
    %cst_48 = arith.constant 1.000000e+00 : f32
    %131 = vector.broadcast %cst_48 : f32 to vector<8x128xf32>
    %132 = arith.addf %131, %130 : vector<8x128xf32>
    %133 = arith.divf %131, %132 : vector<8x128xf32>
    %134 = math.tanh %128 : vector<8x128xf32>
    %135 = vector.extract_strided_slice %133 {offsets = [0, 0], sizes = [8, 32], strides = [1, 1]} : vector<8x128xf32> to vector<8x32xf32>
    %136 = vector.extract_strided_slice %133 {offsets = [0, 32], sizes = [8, 32], strides = [1, 1]} : vector<8x128xf32> to vector<8x32xf32>
    %137 = vector.extract_strided_slice %133 {offsets = [0, 96], sizes = [8, 32], strides = [1, 1]} : vector<8x128xf32> to vector<8x32xf32>
    %138 = vector.extract_strided_slice %134 {offsets = [0, 64], sizes = [8, 32], strides = [1, 1]} : vector<8x128xf32> to vector<8x32xf32>
    %139 = arith.mulf %136, %122 : vector<8x32xf32>
    %140 = arith.mulf %135, %138 : vector<8x32xf32>
    %141 = arith.addf %139, %140 : vector<8x32xf32>
    %142 = math.tanh %141 : vector<8x32xf32>
    %143 = arith.mulf %137, %142 : vector<8x32xf32>
    %c48_49 = arith.constant 48 : index
    %c0_50 = arith.constant 0 : index
    %144 = vector.load %arg22[%c48_49, %c0_50] : memref<64x32xf32, #tpu.memory_space<vmem>>, vector<8x32xf32>
    tpu.vector_store %arg22[%c48_49, %c0_50], %143 {strides = array<i32>} : memref<64x32xf32, #tpu.memory_space<vmem>>, vector<8x32xf32>,
    %c56 = arith.constant 56 : index
    %c0_51 = arith.constant 0 : index
    %145 = vector.load %arg21[%c56, %c0_51] : memref<64x128xf32, #tpu.memory_space<vmem>>, vector<8x128xf32>
    %cst_52 = arith.constant dense<0.000000e+00> : vector<8x128xf32>
    %146 = tpu.matmul %143, %11, %cst_52 {dimension_numbers = #tpu.dot_dimension_numbers<[1], [0], [0], [1], [0, 0, 1, 1], [], []>} : vector<8x32xf32>, vector<32x128xf32>, vector<8x128xf32> -> vector<8x128xf32>
    %147 = arith.addf %145, %146 : vector<8x128xf32>
    %148 = arith.negf %147 : vector<8x128xf32>
    %149 = math.exp %148 : vector<8x128xf32>
    %cst_53 = arith.constant 1.000000e+00 : f32
    %150 = vector.broadcast %cst_53 : f32 to vector<8x128xf32>
    %151 = arith.addf %150, %149 : vector<8x128xf32>
    %152 = arith.divf %150, %151 : vector<8x128xf32>
    %153 = math.tanh %147 : vector<8x128xf32>
    %154 = vector.extract_strided_slice %152 {offsets = [0, 0], sizes = [8, 32], strides = [1, 1]} : vector<8x128xf32> to vector<8x32xf32>
    %155 = vector.extract_strided_slice %152 {offsets = [0, 32], sizes = [8, 32], strides = [1, 1]} : vector<8x128xf32> to vector<8x32xf32>
    %156 = vector.extract_strided_slice %152 {offsets = [0, 96], sizes = [8, 32], strides = [1, 1]} : vector<8x128xf32> to vector<8x32xf32>
    %157 = vector.extract_strided_slice %153 {offsets = [0, 64], sizes = [8, 32], strides = [1, 1]} : vector<8x128xf32> to vector<8x32xf32>
    %158 = arith.mulf %155, %141 : vector<8x32xf32>
    %159 = arith.mulf %154, %157 : vector<8x32xf32>
    %160 = arith.addf %158, %159 : vector<8x32xf32>
    %161 = math.tanh %160 : vector<8x32xf32>
    %162 = arith.mulf %156, %161 : vector<8x32xf32>
    %c56_54 = arith.constant 56 : index
    %c0_55 = arith.constant 0 : index
    %163 = vector.load %arg22[%c56_54, %c0_55] : memref<64x32xf32, #tpu.memory_space<vmem>>, vector<8x32xf32>
    tpu.vector_store %arg22[%c56_54, %c0_55], %162 {strides = array<i32>} : memref<64x32xf32, #tpu.memory_space<vmem>>, vector<8x32xf32>,
    %c0_56 = arith.constant 0 : index
    %c0_57 = arith.constant 0 : index
    %c0_58 = arith.constant 0 : index
    %164 = vector.load %arg19[%c0_56, %c0_57, %c0_58] : memref<4x8x32xf32, #tpu.memory_space<vmem>>, vector<1x8x32xf32>
    %165 = vector.shape_cast %164 : vector<1x8x32xf32> to vector<8x32xf32>
    %166 = vector.shape_cast %162 : vector<8x32xf32> to vector<1x8x32xf32>
    tpu.vector_store %arg19[%c0_56, %c0_57, %c0_58], %166 {strides = array<i32>} : memref<4x8x32xf32, #tpu.memory_space<vmem>>, vector<1x8x32xf32>,
    %c0_59 = arith.constant 0 : index
    %c0_60 = arith.constant 0 : index
    %c0_61 = arith.constant 0 : index
    %167 = vector.load %arg20[%c0_59, %c0_60, %c0_61] : memref<4x8x32xf32, #tpu.memory_space<vmem>>, vector<1x8x32xf32>
    %168 = vector.shape_cast %167 : vector<1x8x32xf32> to vector<8x32xf32>
    %169 = vector.shape_cast %160 : vector<8x32xf32> to vector<1x8x32xf32>
    tpu.vector_store %arg20[%c0_59, %c0_60, %c0_61], %169 {strides = array<i32>} : memref<4x8x32xf32, #tpu.memory_space<vmem>>, vector<1x8x32xf32>,
    %c0_62 = arith.constant 0 : index
    %c0_63 = arith.constant 0 : index
    %170 = vector.load %arg22[%c0_62, %c0_63] : memref<64x32xf32, #tpu.memory_space<vmem>>, vector<64x32xf32>
    %c0_64 = arith.constant 0 : index
    %c0_65 = arith.constant 0 : index
    %171 = vector.load %arg7[%c0_64, %c0_65] : memref<32x128xf32, #tpu.memory_space<vmem>>, vector<32x128xf32>
    %cst_66 = arith.constant dense<0.000000e+00> : vector<64x128xf32>
    %172 = tpu.matmul %170, %171, %cst_66 {dimension_numbers = #tpu.dot_dimension_numbers<[1], [0], [0], [1], [0, 0, 1, 1], [], []>} : vector<64x32xf32>, vector<32x128xf32>, vector<64x128xf32> -> vector<64x128xf32>
    %c0_67 = arith.constant 0 : index
    %c0_68 = arith.constant 0 : index
    %173 = vector.load %arg9[%c0_67, %c0_68] : memref<1x128xf32, #tpu.memory_space<vmem>>, vector<1x128xf32>
    %174 = vector.broadcast %173 : vector<1x128xf32> to vector<64x128xf32>
    %175 = arith.addf %172, %174 : vector<64x128xf32>
    %c0_69 = arith.constant 0 : index
    %c0_70 = arith.constant 0 : index
    %176 = vector.load %arg21[%c0_69, %c0_70] : memref<64x128xf32, #tpu.memory_space<vmem>>, vector<64x128xf32>
    tpu.vector_store %arg21[%c0_69, %c0_70], %175 {strides = array<i32>} : memref<64x128xf32, #tpu.memory_space<vmem>>, vector<64x128xf32>,
    %c1 = arith.constant 1 : index
    %c0_71 = arith.constant 0 : index
    %c0_72 = arith.constant 0 : index
    %177 = vector.load %arg2[%c1, %c0_71, %c0_72] : memref<4x8x32xf32, #tpu.memory_space<vmem>>, vector<1x8x32xf32>
    %178 = vector.shape_cast %177 : vector<1x8x32xf32> to vector<8x32xf32>
    %c1_73 = arith.constant 1 : index
    %c0_74 = arith.constant 0 : index
    %c0_75 = arith.constant 0 : index
    %179 = vector.load %arg3[%c1_73, %c0_74, %c0_75] : memref<4x8x32xf32, #tpu.memory_space<vmem>>, vector<1x8x32xf32>
    %180 = vector.shape_cast %179 : vector<1x8x32xf32> to vector<8x32xf32>
    %c0_76 = arith.constant 0 : index
    %c0_77 = arith.constant 0 : index
    %181 = vector.load %arg8[%c0_76, %c0_77] : memref<32x128xf32, #tpu.memory_space<vmem>>, vector<32x128xf32>
    %c0_78 = arith.constant 0 : index
    %c0_79 = arith.constant 0 : index
    %182 = vector.load %arg21[%c0_78, %c0_79] : memref<64x128xf32, #tpu.memory_space<vmem>>, vector<8x128xf32>
    %cst_80 = arith.constant dense<0.000000e+00> : vector<8x128xf32>
    %183 = tpu.matmul %178, %181, %cst_80 {dimension_numbers = #tpu.dot_dimension_numbers<[1], [0], [0], [1], [0, 0, 1, 1], [], []>} : vector<8x32xf32>, vector<32x128xf32>, vector<8x128xf32> -> vector<8x128xf32>
    %184 = arith.addf %182, %183 : vector<8x128xf32>
    %185 = arith.negf %184 : vector<8x128xf32>
    %186 = math.exp %185 : vector<8x128xf32>
    %cst_81 = arith.constant 1.000000e+00 : f32
    %187 = vector.broadcast %cst_81 : f32 to vector<8x128xf32>
    %188 = arith.addf %187, %186 : vector<8x128xf32>
    %189 = arith.divf %187, %188 : vector<8x128xf32>
    %190 = math.tanh %184 : vector<8x128xf32>
    %191 = vector.extract_strided_slice %189 {offsets = [0, 0], sizes = [8, 32], strides = [1, 1]} : vector<8x128xf32> to vector<8x32xf32>
    %192 = vector.extract_strided_slice %189 {offsets = [0, 32], sizes = [8, 32], strides = [1, 1]} : vector<8x128xf32> to vector<8x32xf32>
    %193 = vector.extract_strided_slice %189 {offsets = [0, 96], sizes = [8, 32], strides = [1, 1]} : vector<8x128xf32> to vector<8x32xf32>
    %194 = vector.extract_strided_slice %190 {offsets = [0, 64], sizes = [8, 32], strides = [1, 1]} : vector<8x128xf32> to vector<8x32xf32>
    %195 = arith.mulf %192, %180 : vector<8x32xf32>
    %196 = arith.mulf %191, %194 : vector<8x32xf32>
    %197 = arith.addf %195, %196 : vector<8x32xf32>
    %198 = math.tanh %197 : vector<8x32xf32>
    %199 = arith.mulf %193, %198 : vector<8x32xf32>
    %c0_82 = arith.constant 0 : index
    %c0_83 = arith.constant 0 : index
    %200 = vector.load %arg22[%c0_82, %c0_83] : memref<64x32xf32, #tpu.memory_space<vmem>>, vector<8x32xf32>
    tpu.vector_store %arg22[%c0_82, %c0_83], %199 {strides = array<i32>} : memref<64x32xf32, #tpu.memory_space<vmem>>, vector<8x32xf32>,
    %c8_84 = arith.constant 8 : index
    %c0_85 = arith.constant 0 : index
    %201 = vector.load %arg21[%c8_84, %c0_85] : memref<64x128xf32, #tpu.memory_space<vmem>>, vector<8x128xf32>
    %cst_86 = arith.constant dense<0.000000e+00> : vector<8x128xf32>
    %202 = tpu.matmul %199, %181, %cst_86 {dimension_numbers = #tpu.dot_dimension_numbers<[1], [0], [0], [1], [0, 0, 1, 1], [], []>} : vector<8x32xf32>, vector<32x128xf32>, vector<8x128xf32> -> vector<8x128xf32>
    %203 = arith.addf %201, %202 : vector<8x128xf32>
    %204 = arith.negf %203 : vector<8x128xf32>
    %205 = math.exp %204 : vector<8x128xf32>
    %cst_87 = arith.constant 1.000000e+00 : f32
    %206 = vector.broadcast %cst_87 : f32 to vector<8x128xf32>
    %207 = arith.addf %206, %205 : vector<8x128xf32>
    %208 = arith.divf %206, %207 : vector<8x128xf32>
    %209 = math.tanh %203 : vector<8x128xf32>
    %210 = vector.extract_strided_slice %208 {offsets = [0, 0], sizes = [8, 32], strides = [1, 1]} : vector<8x128xf32> to vector<8x32xf32>
    %211 = vector.extract_strided_slice %208 {offsets = [0, 32], sizes = [8, 32], strides = [1, 1]} : vector<8x128xf32> to vector<8x32xf32>
    %212 = vector.extract_strided_slice %208 {offsets = [0, 96], sizes = [8, 32], strides = [1, 1]} : vector<8x128xf32> to vector<8x32xf32>
    %213 = vector.extract_strided_slice %209 {offsets = [0, 64], sizes = [8, 32], strides = [1, 1]} : vector<8x128xf32> to vector<8x32xf32>
    %214 = arith.mulf %211, %197 : vector<8x32xf32>
    %215 = arith.mulf %210, %213 : vector<8x32xf32>
    %216 = arith.addf %214, %215 : vector<8x32xf32>
    %217 = math.tanh %216 : vector<8x32xf32>
    %218 = arith.mulf %212, %217 : vector<8x32xf32>
    %c8_88 = arith.constant 8 : index
    %c0_89 = arith.constant 0 : index
    %219 = vector.load %arg22[%c8_88, %c0_89] : memref<64x32xf32, #tpu.memory_space<vmem>>, vector<8x32xf32>
    tpu.vector_store %arg22[%c8_88, %c0_89], %218 {strides = array<i32>} : memref<64x32xf32, #tpu.memory_space<vmem>>, vector<8x32xf32>,
    %c16_90 = arith.constant 16 : index
    %c0_91 = arith.constant 0 : index
    %220 = vector.load %arg21[%c16_90, %c0_91] : memref<64x128xf32, #tpu.memory_space<vmem>>, vector<8x128xf32>
    %cst_92 = arith.constant dense<0.000000e+00> : vector<8x128xf32>
    %221 = tpu.matmul %218, %181, %cst_92 {dimension_numbers = #tpu.dot_dimension_numbers<[1], [0], [0], [1], [0, 0, 1, 1], [], []>} : vector<8x32xf32>, vector<32x128xf32>, vector<8x128xf32> -> vector<8x128xf32>
    %222 = arith.addf %220, %221 : vector<8x128xf32>
    %223 = arith.negf %222 : vector<8x128xf32>
    %224 = math.exp %223 : vector<8x128xf32>
    %cst_93 = arith.constant 1.000000e+00 : f32
    %225 = vector.broadcast %cst_93 : f32 to vector<8x128xf32>
    %226 = arith.addf %225, %224 : vector<8x128xf32>
    %227 = arith.divf %225, %226 : vector<8x128xf32>
    %228 = math.tanh %222 : vector<8x128xf32>
    %229 = vector.extract_strided_slice %227 {offsets = [0, 0], sizes = [8, 32], strides = [1, 1]} : vector<8x128xf32> to vector<8x32xf32>
    %230 = vector.extract_strided_slice %227 {offsets = [0, 32], sizes = [8, 32], strides = [1, 1]} : vector<8x128xf32> to vector<8x32xf32>
    %231 = vector.extract_strided_slice %227 {offsets = [0, 96], sizes = [8, 32], strides = [1, 1]} : vector<8x128xf32> to vector<8x32xf32>
    %232 = vector.extract_strided_slice %228 {offsets = [0, 64], sizes = [8, 32], strides = [1, 1]} : vector<8x128xf32> to vector<8x32xf32>
    %233 = arith.mulf %230, %216 : vector<8x32xf32>
    %234 = arith.mulf %229, %232 : vector<8x32xf32>
    %235 = arith.addf %233, %234 : vector<8x32xf32>
    %236 = math.tanh %235 : vector<8x32xf32>
    %237 = arith.mulf %231, %236 : vector<8x32xf32>
    %c16_94 = arith.constant 16 : index
    %c0_95 = arith.constant 0 : index
    %238 = vector.load %arg22[%c16_94, %c0_95] : memref<64x32xf32, #tpu.memory_space<vmem>>, vector<8x32xf32>
    tpu.vector_store %arg22[%c16_94, %c0_95], %237 {strides = array<i32>} : memref<64x32xf32, #tpu.memory_space<vmem>>, vector<8x32xf32>,
    %c24_96 = arith.constant 24 : index
    %c0_97 = arith.constant 0 : index
    %239 = vector.load %arg21[%c24_96, %c0_97] : memref<64x128xf32, #tpu.memory_space<vmem>>, vector<8x128xf32>
    %cst_98 = arith.constant dense<0.000000e+00> : vector<8x128xf32>
    %240 = tpu.matmul %237, %181, %cst_98 {dimension_numbers = #tpu.dot_dimension_numbers<[1], [0], [0], [1], [0, 0, 1, 1], [], []>} : vector<8x32xf32>, vector<32x128xf32>, vector<8x128xf32> -> vector<8x128xf32>
    %241 = arith.addf %239, %240 : vector<8x128xf32>
    %242 = arith.negf %241 : vector<8x128xf32>
    %243 = math.exp %242 : vector<8x128xf32>
    %cst_99 = arith.constant 1.000000e+00 : f32
    %244 = vector.broadcast %cst_99 : f32 to vector<8x128xf32>
    %245 = arith.addf %244, %243 : vector<8x128xf32>
    %246 = arith.divf %244, %245 : vector<8x128xf32>
    %247 = math.tanh %241 : vector<8x128xf32>
    %248 = vector.extract_strided_slice %246 {offsets = [0, 0], sizes = [8, 32], strides = [1, 1]} : vector<8x128xf32> to vector<8x32xf32>
    %249 = vector.extract_strided_slice %246 {offsets = [0, 32], sizes = [8, 32], strides = [1, 1]} : vector<8x128xf32> to vector<8x32xf32>
    %250 = vector.extract_strided_slice %246 {offsets = [0, 96], sizes = [8, 32], strides = [1, 1]} : vector<8x128xf32> to vector<8x32xf32>
    %251 = vector.extract_strided_slice %247 {offsets = [0, 64], sizes = [8, 32], strides = [1, 1]} : vector<8x128xf32> to vector<8x32xf32>
    %252 = arith.mulf %249, %235 : vector<8x32xf32>
    %253 = arith.mulf %248, %251 : vector<8x32xf32>
    %254 = arith.addf %252, %253 : vector<8x32xf32>
    %255 = math.tanh %254 : vector<8x32xf32>
    %256 = arith.mulf %250, %255 : vector<8x32xf32>
    %c24_100 = arith.constant 24 : index
    %c0_101 = arith.constant 0 : index
    %257 = vector.load %arg22[%c24_100, %c0_101] : memref<64x32xf32, #tpu.memory_space<vmem>>, vector<8x32xf32>
    tpu.vector_store %arg22[%c24_100, %c0_101], %256 {strides = array<i32>} : memref<64x32xf32, #tpu.memory_space<vmem>>, vector<8x32xf32>,
    %c32_102 = arith.constant 32 : index
    %c0_103 = arith.constant 0 : index
    %258 = vector.load %arg21[%c32_102, %c0_103] : memref<64x128xf32, #tpu.memory_space<vmem>>, vector<8x128xf32>
    %cst_104 = arith.constant dense<0.000000e+00> : vector<8x128xf32>
    %259 = tpu.matmul %256, %181, %cst_104 {dimension_numbers = #tpu.dot_dimension_numbers<[1], [0], [0], [1], [0, 0, 1, 1], [], []>} : vector<8x32xf32>, vector<32x128xf32>, vector<8x128xf32> -> vector<8x128xf32>
    %260 = arith.addf %258, %259 : vector<8x128xf32>
    %261 = arith.negf %260 : vector<8x128xf32>
    %262 = math.exp %261 : vector<8x128xf32>
    %cst_105 = arith.constant 1.000000e+00 : f32
    %263 = vector.broadcast %cst_105 : f32 to vector<8x128xf32>
    %264 = arith.addf %263, %262 : vector<8x128xf32>
    %265 = arith.divf %263, %264 : vector<8x128xf32>
    %266 = math.tanh %260 : vector<8x128xf32>
    %267 = vector.extract_strided_slice %265 {offsets = [0, 0], sizes = [8, 32], strides = [1, 1]} : vector<8x128xf32> to vector<8x32xf32>
    %268 = vector.extract_strided_slice %265 {offsets = [0, 32], sizes = [8, 32], strides = [1, 1]} : vector<8x128xf32> to vector<8x32xf32>
    %269 = vector.extract_strided_slice %265 {offsets = [0, 96], sizes = [8, 32], strides = [1, 1]} : vector<8x128xf32> to vector<8x32xf32>
    %270 = vector.extract_strided_slice %266 {offsets = [0, 64], sizes = [8, 32], strides = [1, 1]} : vector<8x128xf32> to vector<8x32xf32>
    %271 = arith.mulf %268, %254 : vector<8x32xf32>
    %272 = arith.mulf %267, %270 : vector<8x32xf32>
    %273 = arith.addf %271, %272 : vector<8x32xf32>
    %274 = math.tanh %273 : vector<8x32xf32>
    %275 = arith.mulf %269, %274 : vector<8x32xf32>
    %c32_106 = arith.constant 32 : index
    %c0_107 = arith.constant 0 : index
    %276 = vector.load %arg22[%c32_106, %c0_107] : memref<64x32xf32, #tpu.memory_space<vmem>>, vector<8x32xf32>
    tpu.vector_store %arg22[%c32_106, %c0_107], %275 {strides = array<i32>} : memref<64x32xf32, #tpu.memory_space<vmem>>, vector<8x32xf32>,
    %c40_108 = arith.constant 40 : index
    %c0_109 = arith.constant 0 : index
    %277 = vector.load %arg21[%c40_108, %c0_109] : memref<64x128xf32, #tpu.memory_space<vmem>>, vector<8x128xf32>
    %cst_110 = arith.constant dense<0.000000e+00> : vector<8x128xf32>
    %278 = tpu.matmul %275, %181, %cst_110 {dimension_numbers = #tpu.dot_dimension_numbers<[1], [0], [0], [1], [0, 0, 1, 1], [], []>} : vector<8x32xf32>, vector<32x128xf32>, vector<8x128xf32> -> vector<8x128xf32>
    %279 = arith.addf %277, %278 : vector<8x128xf32>
    %280 = arith.negf %279 : vector<8x128xf32>
    %281 = math.exp %280 : vector<8x128xf32>
    %cst_111 = arith.constant 1.000000e+00 : f32
    %282 = vector.broadcast %cst_111 : f32 to vector<8x128xf32>
    %283 = arith.addf %282, %281 : vector<8x128xf32>
    %284 = arith.divf %282, %283 : vector<8x128xf32>
    %285 = math.tanh %279 : vector<8x128xf32>
    %286 = vector.extract_strided_slice %284 {offsets = [0, 0], sizes = [8, 32], strides = [1, 1]} : vector<8x128xf32> to vector<8x32xf32>
    %287 = vector.extract_strided_slice %284 {offsets = [0, 32], sizes = [8, 32], strides = [1, 1]} : vector<8x128xf32> to vector<8x32xf32>
    %288 = vector.extract_strided_slice %284 {offsets = [0, 96], sizes = [8, 32], strides = [1, 1]} : vector<8x128xf32> to vector<8x32xf32>
    %289 = vector.extract_strided_slice %285 {offsets = [0, 64], sizes = [8, 32], strides = [1, 1]} : vector<8x128xf32> to vector<8x32xf32>
    %290 = arith.mulf %287, %273 : vector<8x32xf32>
    %291 = arith.mulf %286, %289 : vector<8x32xf32>
    %292 = arith.addf %290, %291 : vector<8x32xf32>
    %293 = math.tanh %292 : vector<8x32xf32>
    %294 = arith.mulf %288, %293 : vector<8x32xf32>
    %c40_112 = arith.constant 40 : index
    %c0_113 = arith.constant 0 : index
    %295 = vector.load %arg22[%c40_112, %c0_113] : memref<64x32xf32, #tpu.memory_space<vmem>>, vector<8x32xf32>
    tpu.vector_store %arg22[%c40_112, %c0_113], %294 {strides = array<i32>} : memref<64x32xf32, #tpu.memory_space<vmem>>, vector<8x32xf32>,
    %c48_114 = arith.constant 48 : index
    %c0_115 = arith.constant 0 : index
    %296 = vector.load %arg21[%c48_114, %c0_115] : memref<64x128xf32, #tpu.memory_space<vmem>>, vector<8x128xf32>
    %cst_116 = arith.constant dense<0.000000e+00> : vector<8x128xf32>
    %297 = tpu.matmul %294, %181, %cst_116 {dimension_numbers = #tpu.dot_dimension_numbers<[1], [0], [0], [1], [0, 0, 1, 1], [], []>} : vector<8x32xf32>, vector<32x128xf32>, vector<8x128xf32> -> vector<8x128xf32>
    %298 = arith.addf %296, %297 : vector<8x128xf32>
    %299 = arith.negf %298 : vector<8x128xf32>
    %300 = math.exp %299 : vector<8x128xf32>
    %cst_117 = arith.constant 1.000000e+00 : f32
    %301 = vector.broadcast %cst_117 : f32 to vector<8x128xf32>
    %302 = arith.addf %301, %300 : vector<8x128xf32>
    %303 = arith.divf %301, %302 : vector<8x128xf32>
    %304 = math.tanh %298 : vector<8x128xf32>
    %305 = vector.extract_strided_slice %303 {offsets = [0, 0], sizes = [8, 32], strides = [1, 1]} : vector<8x128xf32> to vector<8x32xf32>
    %306 = vector.extract_strided_slice %303 {offsets = [0, 32], sizes = [8, 32], strides = [1, 1]} : vector<8x128xf32> to vector<8x32xf32>
    %307 = vector.extract_strided_slice %303 {offsets = [0, 96], sizes = [8, 32], strides = [1, 1]} : vector<8x128xf32> to vector<8x32xf32>
    %308 = vector.extract_strided_slice %304 {offsets = [0, 64], sizes = [8, 32], strides = [1, 1]} : vector<8x128xf32> to vector<8x32xf32>
    %309 = arith.mulf %306, %292 : vector<8x32xf32>
    %310 = arith.mulf %305, %308 : vector<8x32xf32>
    %311 = arith.addf %309, %310 : vector<8x32xf32>
    %312 = math.tanh %311 : vector<8x32xf32>
    %313 = arith.mulf %307, %312 : vector<8x32xf32>
    %c48_118 = arith.constant 48 : index
    %c0_119 = arith.constant 0 : index
    %314 = vector.load %arg22[%c48_118, %c0_119] : memref<64x32xf32, #tpu.memory_space<vmem>>, vector<8x32xf32>
    tpu.vector_store %arg22[%c48_118, %c0_119], %313 {strides = array<i32>} : memref<64x32xf32, #tpu.memory_space<vmem>>, vector<8x32xf32>,
    %c56_120 = arith.constant 56 : index
    %c0_121 = arith.constant 0 : index
    %315 = vector.load %arg21[%c56_120, %c0_121] : memref<64x128xf32, #tpu.memory_space<vmem>>, vector<8x128xf32>
    %cst_122 = arith.constant dense<0.000000e+00> : vector<8x128xf32>
    %316 = tpu.matmul %313, %181, %cst_122 {dimension_numbers = #tpu.dot_dimension_numbers<[1], [0], [0], [1], [0, 0, 1, 1], [], []>} : vector<8x32xf32>, vector<32x128xf32>, vector<8x128xf32> -> vector<8x128xf32>
    %317 = arith.addf %315, %316 : vector<8x128xf32>
    %318 = arith.negf %317 : vector<8x128xf32>
    %319 = math.exp %318 : vector<8x128xf32>
    %cst_123 = arith.constant 1.000000e+00 : f32
    %320 = vector.broadcast %cst_123 : f32 to vector<8x128xf32>
    %321 = arith.addf %320, %319 : vector<8x128xf32>
    %322 = arith.divf %320, %321 : vector<8x128xf32>
    %323 = math.tanh %317 : vector<8x128xf32>
    %324 = vector.extract_strided_slice %322 {offsets = [0, 0], sizes = [8, 32], strides = [1, 1]} : vector<8x128xf32> to vector<8x32xf32>
    %325 = vector.extract_strided_slice %322 {offsets = [0, 32], sizes = [8, 32], strides = [1, 1]} : vector<8x128xf32> to vector<8x32xf32>
    %326 = vector.extract_strided_slice %322 {offsets = [0, 96], sizes = [8, 32], strides = [1, 1]} : vector<8x128xf32> to vector<8x32xf32>
    %327 = vector.extract_strided_slice %323 {offsets = [0, 64], sizes = [8, 32], strides = [1, 1]} : vector<8x128xf32> to vector<8x32xf32>
    %328 = arith.mulf %325, %311 : vector<8x32xf32>
    %329 = arith.mulf %324, %327 : vector<8x32xf32>
    %330 = arith.addf %328, %329 : vector<8x32xf32>
    %331 = math.tanh %330 : vector<8x32xf32>
    %332 = arith.mulf %326, %331 : vector<8x32xf32>
    %c56_124 = arith.constant 56 : index
    %c0_125 = arith.constant 0 : index
    %333 = vector.load %arg22[%c56_124, %c0_125] : memref<64x32xf32, #tpu.memory_space<vmem>>, vector<8x32xf32>
    tpu.vector_store %arg22[%c56_124, %c0_125], %332 {strides = array<i32>} : memref<64x32xf32, #tpu.memory_space<vmem>>, vector<8x32xf32>,
    %c1_126 = arith.constant 1 : index
    %c0_127 = arith.constant 0 : index
    %c0_128 = arith.constant 0 : index
    %334 = vector.load %arg19[%c1_126, %c0_127, %c0_128] : memref<4x8x32xf32, #tpu.memory_space<vmem>>, vector<1x8x32xf32>
    %335 = vector.shape_cast %334 : vector<1x8x32xf32> to vector<8x32xf32>
    %336 = vector.shape_cast %332 : vector<8x32xf32> to vector<1x8x32xf32>
    tpu.vector_store %arg19[%c1_126, %c0_127, %c0_128], %336 {strides = array<i32>} : memref<4x8x32xf32, #tpu.memory_space<vmem>>, vector<1x8x32xf32>,
    %c1_129 = arith.constant 1 : index
    %c0_130 = arith.constant 0 : index
    %c0_131 = arith.constant 0 : index
    %337 = vector.load %arg20[%c1_129, %c0_130, %c0_131] : memref<4x8x32xf32, #tpu.memory_space<vmem>>, vector<1x8x32xf32>
    %338 = vector.shape_cast %337 : vector<1x8x32xf32> to vector<8x32xf32>
    %339 = vector.shape_cast %330 : vector<8x32xf32> to vector<1x8x32xf32>
    tpu.vector_store %arg20[%c1_129, %c0_130, %c0_131], %339 {strides = array<i32>} : memref<4x8x32xf32, #tpu.memory_space<vmem>>, vector<1x8x32xf32>,
    %c0_132 = arith.constant 0 : index
    %c0_133 = arith.constant 0 : index
    %340 = vector.load %arg22[%c0_132, %c0_133] : memref<64x32xf32, #tpu.memory_space<vmem>>, vector<64x32xf32>
    %c0_134 = arith.constant 0 : index
    %c0_135 = arith.constant 0 : index
    %341 = vector.load %arg10[%c0_134, %c0_135] : memref<32x128xf32, #tpu.memory_space<vmem>>, vector<32x128xf32>
    %cst_136 = arith.constant dense<0.000000e+00> : vector<64x128xf32>
    %342 = tpu.matmul %340, %341, %cst_136 {dimension_numbers = #tpu.dot_dimension_numbers<[1], [0], [0], [1], [0, 0, 1, 1], [], []>} : vector<64x32xf32>, vector<32x128xf32>, vector<64x128xf32> -> vector<64x128xf32>
    %c0_137 = arith.constant 0 : index
    %c0_138 = arith.constant 0 : index
    %343 = vector.load %arg12[%c0_137, %c0_138] : memref<1x128xf32, #tpu.memory_space<vmem>>, vector<1x128xf32>
    %344 = vector.broadcast %343 : vector<1x128xf32> to vector<64x128xf32>
    %345 = arith.addf %342, %344 : vector<64x128xf32>
    %c0_139 = arith.constant 0 : index
    %c0_140 = arith.constant 0 : index
    %346 = vector.load %arg21[%c0_139, %c0_140] : memref<64x128xf32, #tpu.memory_space<vmem>>, vector<64x128xf32>
    tpu.vector_store %arg21[%c0_139, %c0_140], %345 {strides = array<i32>} : memref<64x128xf32, #tpu.memory_space<vmem>>, vector<64x128xf32>,
    %c2 = arith.constant 2 : index
    %c0_141 = arith.constant 0 : index
    %c0_142 = arith.constant 0 : index
    %347 = vector.load %arg2[%c2, %c0_141, %c0_142] : memref<4x8x32xf32, #tpu.memory_space<vmem>>, vector<1x8x32xf32>
    %348 = vector.shape_cast %347 : vector<1x8x32xf32> to vector<8x32xf32>
    %c2_143 = arith.constant 2 : index
    %c0_144 = arith.constant 0 : index
    %c0_145 = arith.constant 0 : index
    %349 = vector.load %arg3[%c2_143, %c0_144, %c0_145] : memref<4x8x32xf32, #tpu.memory_space<vmem>>, vector<1x8x32xf32>
    %350 = vector.shape_cast %349 : vector<1x8x32xf32> to vector<8x32xf32>
    %c0_146 = arith.constant 0 : index
    %c0_147 = arith.constant 0 : index
    %351 = vector.load %arg11[%c0_146, %c0_147] : memref<32x128xf32, #tpu.memory_space<vmem>>, vector<32x128xf32>
    %c0_148 = arith.constant 0 : index
    %c0_149 = arith.constant 0 : index
    %352 = vector.load %arg21[%c0_148, %c0_149] : memref<64x128xf32, #tpu.memory_space<vmem>>, vector<8x128xf32>
    %cst_150 = arith.constant dense<0.000000e+00> : vector<8x128xf32>
    %353 = tpu.matmul %348, %351, %cst_150 {dimension_numbers = #tpu.dot_dimension_numbers<[1], [0], [0], [1], [0, 0, 1, 1], [], []>} : vector<8x32xf32>, vector<32x128xf32>, vector<8x128xf32> -> vector<8x128xf32>
    %354 = arith.addf %352, %353 : vector<8x128xf32>
    %355 = arith.negf %354 : vector<8x128xf32>
    %356 = math.exp %355 : vector<8x128xf32>
    %cst_151 = arith.constant 1.000000e+00 : f32
    %357 = vector.broadcast %cst_151 : f32 to vector<8x128xf32>
    %358 = arith.addf %357, %356 : vector<8x128xf32>
    %359 = arith.divf %357, %358 : vector<8x128xf32>
    %360 = math.tanh %354 : vector<8x128xf32>
    %361 = vector.extract_strided_slice %359 {offsets = [0, 0], sizes = [8, 32], strides = [1, 1]} : vector<8x128xf32> to vector<8x32xf32>
    %362 = vector.extract_strided_slice %359 {offsets = [0, 32], sizes = [8, 32], strides = [1, 1]} : vector<8x128xf32> to vector<8x32xf32>
    %363 = vector.extract_strided_slice %359 {offsets = [0, 96], sizes = [8, 32], strides = [1, 1]} : vector<8x128xf32> to vector<8x32xf32>
    %364 = vector.extract_strided_slice %360 {offsets = [0, 64], sizes = [8, 32], strides = [1, 1]} : vector<8x128xf32> to vector<8x32xf32>
    %365 = arith.mulf %362, %350 : vector<8x32xf32>
    %366 = arith.mulf %361, %364 : vector<8x32xf32>
    %367 = arith.addf %365, %366 : vector<8x32xf32>
    %368 = math.tanh %367 : vector<8x32xf32>
    %369 = arith.mulf %363, %368 : vector<8x32xf32>
    %c0_152 = arith.constant 0 : index
    %c0_153 = arith.constant 0 : index
    %370 = vector.load %arg22[%c0_152, %c0_153] : memref<64x32xf32, #tpu.memory_space<vmem>>, vector<8x32xf32>
    tpu.vector_store %arg22[%c0_152, %c0_153], %369 {strides = array<i32>} : memref<64x32xf32, #tpu.memory_space<vmem>>, vector<8x32xf32>,
    %c8_154 = arith.constant 8 : index
    %c0_155 = arith.constant 0 : index
    %371 = vector.load %arg21[%c8_154, %c0_155] : memref<64x128xf32, #tpu.memory_space<vmem>>, vector<8x128xf32>
    %cst_156 = arith.constant dense<0.000000e+00> : vector<8x128xf32>
    %372 = tpu.matmul %369, %351, %cst_156 {dimension_numbers = #tpu.dot_dimension_numbers<[1], [0], [0], [1], [0, 0, 1, 1], [], []>} : vector<8x32xf32>, vector<32x128xf32>, vector<8x128xf32> -> vector<8x128xf32>
    %373 = arith.addf %371, %372 : vector<8x128xf32>
    %374 = arith.negf %373 : vector<8x128xf32>
    %375 = math.exp %374 : vector<8x128xf32>
    %cst_157 = arith.constant 1.000000e+00 : f32
    %376 = vector.broadcast %cst_157 : f32 to vector<8x128xf32>
    %377 = arith.addf %376, %375 : vector<8x128xf32>
    %378 = arith.divf %376, %377 : vector<8x128xf32>
    %379 = math.tanh %373 : vector<8x128xf32>
    %380 = vector.extract_strided_slice %378 {offsets = [0, 0], sizes = [8, 32], strides = [1, 1]} : vector<8x128xf32> to vector<8x32xf32>
    %381 = vector.extract_strided_slice %378 {offsets = [0, 32], sizes = [8, 32], strides = [1, 1]} : vector<8x128xf32> to vector<8x32xf32>
    %382 = vector.extract_strided_slice %378 {offsets = [0, 96], sizes = [8, 32], strides = [1, 1]} : vector<8x128xf32> to vector<8x32xf32>
    %383 = vector.extract_strided_slice %379 {offsets = [0, 64], sizes = [8, 32], strides = [1, 1]} : vector<8x128xf32> to vector<8x32xf32>
    %384 = arith.mulf %381, %367 : vector<8x32xf32>
    %385 = arith.mulf %380, %383 : vector<8x32xf32>
    %386 = arith.addf %384, %385 : vector<8x32xf32>
    %387 = math.tanh %386 : vector<8x32xf32>
    %388 = arith.mulf %382, %387 : vector<8x32xf32>
    %c8_158 = arith.constant 8 : index
    %c0_159 = arith.constant 0 : index
    %389 = vector.load %arg22[%c8_158, %c0_159] : memref<64x32xf32, #tpu.memory_space<vmem>>, vector<8x32xf32>
    tpu.vector_store %arg22[%c8_158, %c0_159], %388 {strides = array<i32>} : memref<64x32xf32, #tpu.memory_space<vmem>>, vector<8x32xf32>,
    %c16_160 = arith.constant 16 : index
    %c0_161 = arith.constant 0 : index
    %390 = vector.load %arg21[%c16_160, %c0_161] : memref<64x128xf32, #tpu.memory_space<vmem>>, vector<8x128xf32>
    %cst_162 = arith.constant dense<0.000000e+00> : vector<8x128xf32>
    %391 = tpu.matmul %388, %351, %cst_162 {dimension_numbers = #tpu.dot_dimension_numbers<[1], [0], [0], [1], [0, 0, 1, 1], [], []>} : vector<8x32xf32>, vector<32x128xf32>, vector<8x128xf32> -> vector<8x128xf32>
    %392 = arith.addf %390, %391 : vector<8x128xf32>
    %393 = arith.negf %392 : vector<8x128xf32>
    %394 = math.exp %393 : vector<8x128xf32>
    %cst_163 = arith.constant 1.000000e+00 : f32
    %395 = vector.broadcast %cst_163 : f32 to vector<8x128xf32>
    %396 = arith.addf %395, %394 : vector<8x128xf32>
    %397 = arith.divf %395, %396 : vector<8x128xf32>
    %398 = math.tanh %392 : vector<8x128xf32>
    %399 = vector.extract_strided_slice %397 {offsets = [0, 0], sizes = [8, 32], strides = [1, 1]} : vector<8x128xf32> to vector<8x32xf32>
    %400 = vector.extract_strided_slice %397 {offsets = [0, 32], sizes = [8, 32], strides = [1, 1]} : vector<8x128xf32> to vector<8x32xf32>
    %401 = vector.extract_strided_slice %397 {offsets = [0, 96], sizes = [8, 32], strides = [1, 1]} : vector<8x128xf32> to vector<8x32xf32>
    %402 = vector.extract_strided_slice %398 {offsets = [0, 64], sizes = [8, 32], strides = [1, 1]} : vector<8x128xf32> to vector<8x32xf32>
    %403 = arith.mulf %400, %386 : vector<8x32xf32>
    %404 = arith.mulf %399, %402 : vector<8x32xf32>
    %405 = arith.addf %403, %404 : vector<8x32xf32>
    %406 = math.tanh %405 : vector<8x32xf32>
    %407 = arith.mulf %401, %406 : vector<8x32xf32>
    %c16_164 = arith.constant 16 : index
    %c0_165 = arith.constant 0 : index
    %408 = vector.load %arg22[%c16_164, %c0_165] : memref<64x32xf32, #tpu.memory_space<vmem>>, vector<8x32xf32>
    tpu.vector_store %arg22[%c16_164, %c0_165], %407 {strides = array<i32>} : memref<64x32xf32, #tpu.memory_space<vmem>>, vector<8x32xf32>,
    %c24_166 = arith.constant 24 : index
    %c0_167 = arith.constant 0 : index
    %409 = vector.load %arg21[%c24_166, %c0_167] : memref<64x128xf32, #tpu.memory_space<vmem>>, vector<8x128xf32>
    %cst_168 = arith.constant dense<0.000000e+00> : vector<8x128xf32>
    %410 = tpu.matmul %407, %351, %cst_168 {dimension_numbers = #tpu.dot_dimension_numbers<[1], [0], [0], [1], [0, 0, 1, 1], [], []>} : vector<8x32xf32>, vector<32x128xf32>, vector<8x128xf32> -> vector<8x128xf32>
    %411 = arith.addf %409, %410 : vector<8x128xf32>
    %412 = arith.negf %411 : vector<8x128xf32>
    %413 = math.exp %412 : vector<8x128xf32>
    %cst_169 = arith.constant 1.000000e+00 : f32
    %414 = vector.broadcast %cst_169 : f32 to vector<8x128xf32>
    %415 = arith.addf %414, %413 : vector<8x128xf32>
    %416 = arith.divf %414, %415 : vector<8x128xf32>
    %417 = math.tanh %411 : vector<8x128xf32>
    %418 = vector.extract_strided_slice %416 {offsets = [0, 0], sizes = [8, 32], strides = [1, 1]} : vector<8x128xf32> to vector<8x32xf32>
    %419 = vector.extract_strided_slice %416 {offsets = [0, 32], sizes = [8, 32], strides = [1, 1]} : vector<8x128xf32> to vector<8x32xf32>
    %420 = vector.extract_strided_slice %416 {offsets = [0, 96], sizes = [8, 32], strides = [1, 1]} : vector<8x128xf32> to vector<8x32xf32>
    %421 = vector.extract_strided_slice %417 {offsets = [0, 64], sizes = [8, 32], strides = [1, 1]} : vector<8x128xf32> to vector<8x32xf32>
    %422 = arith.mulf %419, %405 : vector<8x32xf32>
    %423 = arith.mulf %418, %421 : vector<8x32xf32>
    %424 = arith.addf %422, %423 : vector<8x32xf32>
    %425 = math.tanh %424 : vector<8x32xf32>
    %426 = arith.mulf %420, %425 : vector<8x32xf32>
    %c24_170 = arith.constant 24 : index
    %c0_171 = arith.constant 0 : index
    %427 = vector.load %arg22[%c24_170, %c0_171] : memref<64x32xf32, #tpu.memory_space<vmem>>, vector<8x32xf32>
    tpu.vector_store %arg22[%c24_170, %c0_171], %426 {strides = array<i32>} : memref<64x32xf32, #tpu.memory_space<vmem>>, vector<8x32xf32>,
    %c32_172 = arith.constant 32 : index
    %c0_173 = arith.constant 0 : index
    %428 = vector.load %arg21[%c32_172, %c0_173] : memref<64x128xf32, #tpu.memory_space<vmem>>, vector<8x128xf32>
    %cst_174 = arith.constant dense<0.000000e+00> : vector<8x128xf32>
    %429 = tpu.matmul %426, %351, %cst_174 {dimension_numbers = #tpu.dot_dimension_numbers<[1], [0], [0], [1], [0, 0, 1, 1], [], []>} : vector<8x32xf32>, vector<32x128xf32>, vector<8x128xf32> -> vector<8x128xf32>
    %430 = arith.addf %428, %429 : vector<8x128xf32>
    %431 = arith.negf %430 : vector<8x128xf32>
    %432 = math.exp %431 : vector<8x128xf32>
    %cst_175 = arith.constant 1.000000e+00 : f32
    %433 = vector.broadcast %cst_175 : f32 to vector<8x128xf32>
    %434 = arith.addf %433, %432 : vector<8x128xf32>
    %435 = arith.divf %433, %434 : vector<8x128xf32>
    %436 = math.tanh %430 : vector<8x128xf32>
    %437 = vector.extract_strided_slice %435 {offsets = [0, 0], sizes = [8, 32], strides = [1, 1]} : vector<8x128xf32> to vector<8x32xf32>
    %438 = vector.extract_strided_slice %435 {offsets = [0, 32], sizes = [8, 32], strides = [1, 1]} : vector<8x128xf32> to vector<8x32xf32>
    %439 = vector.extract_strided_slice %435 {offsets = [0, 96], sizes = [8, 32], strides = [1, 1]} : vector<8x128xf32> to vector<8x32xf32>
    %440 = vector.extract_strided_slice %436 {offsets = [0, 64], sizes = [8, 32], strides = [1, 1]} : vector<8x128xf32> to vector<8x32xf32>
    %441 = arith.mulf %438, %424 : vector<8x32xf32>
    %442 = arith.mulf %437, %440 : vector<8x32xf32>
    %443 = arith.addf %441, %442 : vector<8x32xf32>
    %444 = math.tanh %443 : vector<8x32xf32>
    %445 = arith.mulf %439, %444 : vector<8x32xf32>
    %c32_176 = arith.constant 32 : index
    %c0_177 = arith.constant 0 : index
    %446 = vector.load %arg22[%c32_176, %c0_177] : memref<64x32xf32, #tpu.memory_space<vmem>>, vector<8x32xf32>
    tpu.vector_store %arg22[%c32_176, %c0_177], %445 {strides = array<i32>} : memref<64x32xf32, #tpu.memory_space<vmem>>, vector<8x32xf32>,
    %c40_178 = arith.constant 40 : index
    %c0_179 = arith.constant 0 : index
    %447 = vector.load %arg21[%c40_178, %c0_179] : memref<64x128xf32, #tpu.memory_space<vmem>>, vector<8x128xf32>
    %cst_180 = arith.constant dense<0.000000e+00> : vector<8x128xf32>
    %448 = tpu.matmul %445, %351, %cst_180 {dimension_numbers = #tpu.dot_dimension_numbers<[1], [0], [0], [1], [0, 0, 1, 1], [], []>} : vector<8x32xf32>, vector<32x128xf32>, vector<8x128xf32> -> vector<8x128xf32>
    %449 = arith.addf %447, %448 : vector<8x128xf32>
    %450 = arith.negf %449 : vector<8x128xf32>
    %451 = math.exp %450 : vector<8x128xf32>
    %cst_181 = arith.constant 1.000000e+00 : f32
    %452 = vector.broadcast %cst_181 : f32 to vector<8x128xf32>
    %453 = arith.addf %452, %451 : vector<8x128xf32>
    %454 = arith.divf %452, %453 : vector<8x128xf32>
    %455 = math.tanh %449 : vector<8x128xf32>
    %456 = vector.extract_strided_slice %454 {offsets = [0, 0], sizes = [8, 32], strides = [1, 1]} : vector<8x128xf32> to vector<8x32xf32>
    %457 = vector.extract_strided_slice %454 {offsets = [0, 32], sizes = [8, 32], strides = [1, 1]} : vector<8x128xf32> to vector<8x32xf32>
    %458 = vector.extract_strided_slice %454 {offsets = [0, 96], sizes = [8, 32], strides = [1, 1]} : vector<8x128xf32> to vector<8x32xf32>
    %459 = vector.extract_strided_slice %455 {offsets = [0, 64], sizes = [8, 32], strides = [1, 1]} : vector<8x128xf32> to vector<8x32xf32>
    %460 = arith.mulf %457, %443 : vector<8x32xf32>
    %461 = arith.mulf %456, %459 : vector<8x32xf32>
    %462 = arith.addf %460, %461 : vector<8x32xf32>
    %463 = math.tanh %462 : vector<8x32xf32>
    %464 = arith.mulf %458, %463 : vector<8x32xf32>
    %c40_182 = arith.constant 40 : index
    %c0_183 = arith.constant 0 : index
    %465 = vector.load %arg22[%c40_182, %c0_183] : memref<64x32xf32, #tpu.memory_space<vmem>>, vector<8x32xf32>
    tpu.vector_store %arg22[%c40_182, %c0_183], %464 {strides = array<i32>} : memref<64x32xf32, #tpu.memory_space<vmem>>, vector<8x32xf32>,
    %c48_184 = arith.constant 48 : index
    %c0_185 = arith.constant 0 : index
    %466 = vector.load %arg21[%c48_184, %c0_185] : memref<64x128xf32, #tpu.memory_space<vmem>>, vector<8x128xf32>
    %cst_186 = arith.constant dense<0.000000e+00> : vector<8x128xf32>
    %467 = tpu.matmul %464, %351, %cst_186 {dimension_numbers = #tpu.dot_dimension_numbers<[1], [0], [0], [1], [0, 0, 1, 1], [], []>} : vector<8x32xf32>, vector<32x128xf32>, vector<8x128xf32> -> vector<8x128xf32>
    %468 = arith.addf %466, %467 : vector<8x128xf32>
    %469 = arith.negf %468 : vector<8x128xf32>
    %470 = math.exp %469 : vector<8x128xf32>
    %cst_187 = arith.constant 1.000000e+00 : f32
    %471 = vector.broadcast %cst_187 : f32 to vector<8x128xf32>
    %472 = arith.addf %471, %470 : vector<8x128xf32>
    %473 = arith.divf %471, %472 : vector<8x128xf32>
    %474 = math.tanh %468 : vector<8x128xf32>
    %475 = vector.extract_strided_slice %473 {offsets = [0, 0], sizes = [8, 32], strides = [1, 1]} : vector<8x128xf32> to vector<8x32xf32>
    %476 = vector.extract_strided_slice %473 {offsets = [0, 32], sizes = [8, 32], strides = [1, 1]} : vector<8x128xf32> to vector<8x32xf32>
    %477 = vector.extract_strided_slice %473 {offsets = [0, 96], sizes = [8, 32], strides = [1, 1]} : vector<8x128xf32> to vector<8x32xf32>
    %478 = vector.extract_strided_slice %474 {offsets = [0, 64], sizes = [8, 32], strides = [1, 1]} : vector<8x128xf32> to vector<8x32xf32>
    %479 = arith.mulf %476, %462 : vector<8x32xf32>
    %480 = arith.mulf %475, %478 : vector<8x32xf32>
    %481 = arith.addf %479, %480 : vector<8x32xf32>
    %482 = math.tanh %481 : vector<8x32xf32>
    %483 = arith.mulf %477, %482 : vector<8x32xf32>
    %c48_188 = arith.constant 48 : index
    %c0_189 = arith.constant 0 : index
    %484 = vector.load %arg22[%c48_188, %c0_189] : memref<64x32xf32, #tpu.memory_space<vmem>>, vector<8x32xf32>
    tpu.vector_store %arg22[%c48_188, %c0_189], %483 {strides = array<i32>} : memref<64x32xf32, #tpu.memory_space<vmem>>, vector<8x32xf32>,
    %c56_190 = arith.constant 56 : index
    %c0_191 = arith.constant 0 : index
    %485 = vector.load %arg21[%c56_190, %c0_191] : memref<64x128xf32, #tpu.memory_space<vmem>>, vector<8x128xf32>
    %cst_192 = arith.constant dense<0.000000e+00> : vector<8x128xf32>
    %486 = tpu.matmul %483, %351, %cst_192 {dimension_numbers = #tpu.dot_dimension_numbers<[1], [0], [0], [1], [0, 0, 1, 1], [], []>} : vector<8x32xf32>, vector<32x128xf32>, vector<8x128xf32> -> vector<8x128xf32>
    %487 = arith.addf %485, %486 : vector<8x128xf32>
    %488 = arith.negf %487 : vector<8x128xf32>
    %489 = math.exp %488 : vector<8x128xf32>
    %cst_193 = arith.constant 1.000000e+00 : f32
    %490 = vector.broadcast %cst_193 : f32 to vector<8x128xf32>
    %491 = arith.addf %490, %489 : vector<8x128xf32>
    %492 = arith.divf %490, %491 : vector<8x128xf32>
    %493 = math.tanh %487 : vector<8x128xf32>
    %494 = vector.extract_strided_slice %492 {offsets = [0, 0], sizes = [8, 32], strides = [1, 1]} : vector<8x128xf32> to vector<8x32xf32>
    %495 = vector.extract_strided_slice %492 {offsets = [0, 32], sizes = [8, 32], strides = [1, 1]} : vector<8x128xf32> to vector<8x32xf32>
    %496 = vector.extract_strided_slice %492 {offsets = [0, 96], sizes = [8, 32], strides = [1, 1]} : vector<8x128xf32> to vector<8x32xf32>
    %497 = vector.extract_strided_slice %493 {offsets = [0, 64], sizes = [8, 32], strides = [1, 1]} : vector<8x128xf32> to vector<8x32xf32>
    %498 = arith.mulf %495, %481 : vector<8x32xf32>
    %499 = arith.mulf %494, %497 : vector<8x32xf32>
    %500 = arith.addf %498, %499 : vector<8x32xf32>
    %501 = math.tanh %500 : vector<8x32xf32>
    %502 = arith.mulf %496, %501 : vector<8x32xf32>
    %c56_194 = arith.constant 56 : index
    %c0_195 = arith.constant 0 : index
    %503 = vector.load %arg22[%c56_194, %c0_195] : memref<64x32xf32, #tpu.memory_space<vmem>>, vector<8x32xf32>
    tpu.vector_store %arg22[%c56_194, %c0_195], %502 {strides = array<i32>} : memref<64x32xf32, #tpu.memory_space<vmem>>, vector<8x32xf32>,
    %c2_196 = arith.constant 2 : index
    %c0_197 = arith.constant 0 : index
    %c0_198 = arith.constant 0 : index
    %504 = vector.load %arg19[%c2_196, %c0_197, %c0_198] : memref<4x8x32xf32, #tpu.memory_space<vmem>>, vector<1x8x32xf32>
    %505 = vector.shape_cast %504 : vector<1x8x32xf32> to vector<8x32xf32>
    %506 = vector.shape_cast %502 : vector<8x32xf32> to vector<1x8x32xf32>
    tpu.vector_store %arg19[%c2_196, %c0_197, %c0_198], %506 {strides = array<i32>} : memref<4x8x32xf32, #tpu.memory_space<vmem>>, vector<1x8x32xf32>,
    %c2_199 = arith.constant 2 : index
    %c0_200 = arith.constant 0 : index
    %c0_201 = arith.constant 0 : index
    %507 = vector.load %arg20[%c2_199, %c0_200, %c0_201] : memref<4x8x32xf32, #tpu.memory_space<vmem>>, vector<1x8x32xf32>
    %508 = vector.shape_cast %507 : vector<1x8x32xf32> to vector<8x32xf32>
    %509 = vector.shape_cast %500 : vector<8x32xf32> to vector<1x8x32xf32>
    tpu.vector_store %arg20[%c2_199, %c0_200, %c0_201], %509 {strides = array<i32>} : memref<4x8x32xf32, #tpu.memory_space<vmem>>, vector<1x8x32xf32>,
    %c0_202 = arith.constant 0 : index
    %c0_203 = arith.constant 0 : index
    %510 = vector.load %arg22[%c0_202, %c0_203] : memref<64x32xf32, #tpu.memory_space<vmem>>, vector<64x32xf32>
    %c0_204 = arith.constant 0 : index
    %c0_205 = arith.constant 0 : index
    %511 = vector.load %arg13[%c0_204, %c0_205] : memref<32x128xf32, #tpu.memory_space<vmem>>, vector<32x128xf32>
    %cst_206 = arith.constant dense<0.000000e+00> : vector<64x128xf32>
    %512 = tpu.matmul %510, %511, %cst_206 {dimension_numbers = #tpu.dot_dimension_numbers<[1], [0], [0], [1], [0, 0, 1, 1], [], []>} : vector<64x32xf32>, vector<32x128xf32>, vector<64x128xf32> -> vector<64x128xf32>
    %c0_207 = arith.constant 0 : index
    %c0_208 = arith.constant 0 : index
    %513 = vector.load %arg15[%c0_207, %c0_208] : memref<1x128xf32, #tpu.memory_space<vmem>>, vector<1x128xf32>
    %514 = vector.broadcast %513 : vector<1x128xf32> to vector<64x128xf32>
    %515 = arith.addf %512, %514 : vector<64x128xf32>
    %c0_209 = arith.constant 0 : index
    %c0_210 = arith.constant 0 : index
    %516 = vector.load %arg21[%c0_209, %c0_210] : memref<64x128xf32, #tpu.memory_space<vmem>>, vector<64x128xf32>
    tpu.vector_store %arg21[%c0_209, %c0_210], %515 {strides = array<i32>} : memref<64x128xf32, #tpu.memory_space<vmem>>, vector<64x128xf32>,
    %c3 = arith.constant 3 : index
    %c0_211 = arith.constant 0 : index
    %c0_212 = arith.constant 0 : index
    %517 = vector.load %arg2[%c3, %c0_211, %c0_212] : memref<4x8x32xf32, #tpu.memory_space<vmem>>, vector<1x8x32xf32>
    %518 = vector.shape_cast %517 : vector<1x8x32xf32> to vector<8x32xf32>
    %c3_213 = arith.constant 3 : index
    %c0_214 = arith.constant 0 : index
    %c0_215 = arith.constant 0 : index
    %519 = vector.load %arg3[%c3_213, %c0_214, %c0_215] : memref<4x8x32xf32, #tpu.memory_space<vmem>>, vector<1x8x32xf32>
    %520 = vector.shape_cast %519 : vector<1x8x32xf32> to vector<8x32xf32>
    %c0_216 = arith.constant 0 : index
    %c0_217 = arith.constant 0 : index
    %521 = vector.load %arg14[%c0_216, %c0_217] : memref<32x128xf32, #tpu.memory_space<vmem>>, vector<32x128xf32>
    %c0_218 = arith.constant 0 : index
    %c0_219 = arith.constant 0 : index
    %522 = vector.load %arg21[%c0_218, %c0_219] : memref<64x128xf32, #tpu.memory_space<vmem>>, vector<8x128xf32>
    %cst_220 = arith.constant dense<0.000000e+00> : vector<8x128xf32>
    %523 = tpu.matmul %518, %521, %cst_220 {dimension_numbers = #tpu.dot_dimension_numbers<[1], [0], [0], [1], [0, 0, 1, 1], [], []>} : vector<8x32xf32>, vector<32x128xf32>, vector<8x128xf32> -> vector<8x128xf32>
    %524 = arith.addf %522, %523 : vector<8x128xf32>
    %525 = arith.negf %524 : vector<8x128xf32>
    %526 = math.exp %525 : vector<8x128xf32>
    %cst_221 = arith.constant 1.000000e+00 : f32
    %527 = vector.broadcast %cst_221 : f32 to vector<8x128xf32>
    %528 = arith.addf %527, %526 : vector<8x128xf32>
    %529 = arith.divf %527, %528 : vector<8x128xf32>
    %530 = math.tanh %524 : vector<8x128xf32>
    %531 = vector.extract_strided_slice %529 {offsets = [0, 0], sizes = [8, 32], strides = [1, 1]} : vector<8x128xf32> to vector<8x32xf32>
    %532 = vector.extract_strided_slice %529 {offsets = [0, 32], sizes = [8, 32], strides = [1, 1]} : vector<8x128xf32> to vector<8x32xf32>
    %533 = vector.extract_strided_slice %529 {offsets = [0, 96], sizes = [8, 32], strides = [1, 1]} : vector<8x128xf32> to vector<8x32xf32>
    %534 = vector.extract_strided_slice %530 {offsets = [0, 64], sizes = [8, 32], strides = [1, 1]} : vector<8x128xf32> to vector<8x32xf32>
    %535 = arith.mulf %532, %520 : vector<8x32xf32>
    %536 = arith.mulf %531, %534 : vector<8x32xf32>
    %537 = arith.addf %535, %536 : vector<8x32xf32>
    %538 = math.tanh %537 : vector<8x32xf32>
    %539 = arith.mulf %533, %538 : vector<8x32xf32>
    %c0_222 = arith.constant 0 : index
    %c0_223 = arith.constant 0 : index
    %540 = vector.load %arg22[%c0_222, %c0_223] : memref<64x32xf32, #tpu.memory_space<vmem>>, vector<8x32xf32>
    tpu.vector_store %arg22[%c0_222, %c0_223], %539 {strides = array<i32>} : memref<64x32xf32, #tpu.memory_space<vmem>>, vector<8x32xf32>,
    %c8_224 = arith.constant 8 : index
    %c0_225 = arith.constant 0 : index
    %541 = vector.load %arg21[%c8_224, %c0_225] : memref<64x128xf32, #tpu.memory_space<vmem>>, vector<8x128xf32>
    %cst_226 = arith.constant dense<0.000000e+00> : vector<8x128xf32>
    %542 = tpu.matmul %539, %521, %cst_226 {dimension_numbers = #tpu.dot_dimension_numbers<[1], [0], [0], [1], [0, 0, 1, 1], [], []>} : vector<8x32xf32>, vector<32x128xf32>, vector<8x128xf32> -> vector<8x128xf32>
    %543 = arith.addf %541, %542 : vector<8x128xf32>
    %544 = arith.negf %543 : vector<8x128xf32>
    %545 = math.exp %544 : vector<8x128xf32>
    %cst_227 = arith.constant 1.000000e+00 : f32
    %546 = vector.broadcast %cst_227 : f32 to vector<8x128xf32>
    %547 = arith.addf %546, %545 : vector<8x128xf32>
    %548 = arith.divf %546, %547 : vector<8x128xf32>
    %549 = math.tanh %543 : vector<8x128xf32>
    %550 = vector.extract_strided_slice %548 {offsets = [0, 0], sizes = [8, 32], strides = [1, 1]} : vector<8x128xf32> to vector<8x32xf32>
    %551 = vector.extract_strided_slice %548 {offsets = [0, 32], sizes = [8, 32], strides = [1, 1]} : vector<8x128xf32> to vector<8x32xf32>
    %552 = vector.extract_strided_slice %548 {offsets = [0, 96], sizes = [8, 32], strides = [1, 1]} : vector<8x128xf32> to vector<8x32xf32>
    %553 = vector.extract_strided_slice %549 {offsets = [0, 64], sizes = [8, 32], strides = [1, 1]} : vector<8x128xf32> to vector<8x32xf32>
    %554 = arith.mulf %551, %537 : vector<8x32xf32>
    %555 = arith.mulf %550, %553 : vector<8x32xf32>
    %556 = arith.addf %554, %555 : vector<8x32xf32>
    %557 = math.tanh %556 : vector<8x32xf32>
    %558 = arith.mulf %552, %557 : vector<8x32xf32>
    %c8_228 = arith.constant 8 : index
    %c0_229 = arith.constant 0 : index
    %559 = vector.load %arg22[%c8_228, %c0_229] : memref<64x32xf32, #tpu.memory_space<vmem>>, vector<8x32xf32>
    tpu.vector_store %arg22[%c8_228, %c0_229], %558 {strides = array<i32>} : memref<64x32xf32, #tpu.memory_space<vmem>>, vector<8x32xf32>,
    %c16_230 = arith.constant 16 : index
    %c0_231 = arith.constant 0 : index
    %560 = vector.load %arg21[%c16_230, %c0_231] : memref<64x128xf32, #tpu.memory_space<vmem>>, vector<8x128xf32>
    %cst_232 = arith.constant dense<0.000000e+00> : vector<8x128xf32>
    %561 = tpu.matmul %558, %521, %cst_232 {dimension_numbers = #tpu.dot_dimension_numbers<[1], [0], [0], [1], [0, 0, 1, 1], [], []>} : vector<8x32xf32>, vector<32x128xf32>, vector<8x128xf32> -> vector<8x128xf32>
    %562 = arith.addf %560, %561 : vector<8x128xf32>
    %563 = arith.negf %562 : vector<8x128xf32>
    %564 = math.exp %563 : vector<8x128xf32>
    %cst_233 = arith.constant 1.000000e+00 : f32
    %565 = vector.broadcast %cst_233 : f32 to vector<8x128xf32>
    %566 = arith.addf %565, %564 : vector<8x128xf32>
    %567 = arith.divf %565, %566 : vector<8x128xf32>
    %568 = math.tanh %562 : vector<8x128xf32>
    %569 = vector.extract_strided_slice %567 {offsets = [0, 0], sizes = [8, 32], strides = [1, 1]} : vector<8x128xf32> to vector<8x32xf32>
    %570 = vector.extract_strided_slice %567 {offsets = [0, 32], sizes = [8, 32], strides = [1, 1]} : vector<8x128xf32> to vector<8x32xf32>
    %571 = vector.extract_strided_slice %567 {offsets = [0, 96], sizes = [8, 32], strides = [1, 1]} : vector<8x128xf32> to vector<8x32xf32>
    %572 = vector.extract_strided_slice %568 {offsets = [0, 64], sizes = [8, 32], strides = [1, 1]} : vector<8x128xf32> to vector<8x32xf32>
    %573 = arith.mulf %570, %556 : vector<8x32xf32>
    %574 = arith.mulf %569, %572 : vector<8x32xf32>
    %575 = arith.addf %573, %574 : vector<8x32xf32>
    %576 = math.tanh %575 : vector<8x32xf32>
    %577 = arith.mulf %571, %576 : vector<8x32xf32>
    %c16_234 = arith.constant 16 : index
    %c0_235 = arith.constant 0 : index
    %578 = vector.load %arg22[%c16_234, %c0_235] : memref<64x32xf32, #tpu.memory_space<vmem>>, vector<8x32xf32>
    tpu.vector_store %arg22[%c16_234, %c0_235], %577 {strides = array<i32>} : memref<64x32xf32, #tpu.memory_space<vmem>>, vector<8x32xf32>,
    %c24_236 = arith.constant 24 : index
    %c0_237 = arith.constant 0 : index
    %579 = vector.load %arg21[%c24_236, %c0_237] : memref<64x128xf32, #tpu.memory_space<vmem>>, vector<8x128xf32>
    %cst_238 = arith.constant dense<0.000000e+00> : vector<8x128xf32>
    %580 = tpu.matmul %577, %521, %cst_238 {dimension_numbers = #tpu.dot_dimension_numbers<[1], [0], [0], [1], [0, 0, 1, 1], [], []>} : vector<8x32xf32>, vector<32x128xf32>, vector<8x128xf32> -> vector<8x128xf32>
    %581 = arith.addf %579, %580 : vector<8x128xf32>
    %582 = arith.negf %581 : vector<8x128xf32>
    %583 = math.exp %582 : vector<8x128xf32>
    %cst_239 = arith.constant 1.000000e+00 : f32
    %584 = vector.broadcast %cst_239 : f32 to vector<8x128xf32>
    %585 = arith.addf %584, %583 : vector<8x128xf32>
    %586 = arith.divf %584, %585 : vector<8x128xf32>
    %587 = math.tanh %581 : vector<8x128xf32>
    %588 = vector.extract_strided_slice %586 {offsets = [0, 0], sizes = [8, 32], strides = [1, 1]} : vector<8x128xf32> to vector<8x32xf32>
    %589 = vector.extract_strided_slice %586 {offsets = [0, 32], sizes = [8, 32], strides = [1, 1]} : vector<8x128xf32> to vector<8x32xf32>
    %590 = vector.extract_strided_slice %586 {offsets = [0, 96], sizes = [8, 32], strides = [1, 1]} : vector<8x128xf32> to vector<8x32xf32>
    %591 = vector.extract_strided_slice %587 {offsets = [0, 64], sizes = [8, 32], strides = [1, 1]} : vector<8x128xf32> to vector<8x32xf32>
    %592 = arith.mulf %589, %575 : vector<8x32xf32>
    %593 = arith.mulf %588, %591 : vector<8x32xf32>
    %594 = arith.addf %592, %593 : vector<8x32xf32>
    %595 = math.tanh %594 : vector<8x32xf32>
    %596 = arith.mulf %590, %595 : vector<8x32xf32>
    %c24_240 = arith.constant 24 : index
    %c0_241 = arith.constant 0 : index
    %597 = vector.load %arg22[%c24_240, %c0_241] : memref<64x32xf32, #tpu.memory_space<vmem>>, vector<8x32xf32>
    tpu.vector_store %arg22[%c24_240, %c0_241], %596 {strides = array<i32>} : memref<64x32xf32, #tpu.memory_space<vmem>>, vector<8x32xf32>,
    %c32_242 = arith.constant 32 : index
    %c0_243 = arith.constant 0 : index
    %598 = vector.load %arg21[%c32_242, %c0_243] : memref<64x128xf32, #tpu.memory_space<vmem>>, vector<8x128xf32>
    %cst_244 = arith.constant dense<0.000000e+00> : vector<8x128xf32>
    %599 = tpu.matmul %596, %521, %cst_244 {dimension_numbers = #tpu.dot_dimension_numbers<[1], [0], [0], [1], [0, 0, 1, 1], [], []>} : vector<8x32xf32>, vector<32x128xf32>, vector<8x128xf32> -> vector<8x128xf32>
    %600 = arith.addf %598, %599 : vector<8x128xf32>
    %601 = arith.negf %600 : vector<8x128xf32>
    %602 = math.exp %601 : vector<8x128xf32>
    %cst_245 = arith.constant 1.000000e+00 : f32
    %603 = vector.broadcast %cst_245 : f32 to vector<8x128xf32>
    %604 = arith.addf %603, %602 : vector<8x128xf32>
    %605 = arith.divf %603, %604 : vector<8x128xf32>
    %606 = math.tanh %600 : vector<8x128xf32>
    %607 = vector.extract_strided_slice %605 {offsets = [0, 0], sizes = [8, 32], strides = [1, 1]} : vector<8x128xf32> to vector<8x32xf32>
    %608 = vector.extract_strided_slice %605 {offsets = [0, 32], sizes = [8, 32], strides = [1, 1]} : vector<8x128xf32> to vector<8x32xf32>
    %609 = vector.extract_strided_slice %605 {offsets = [0, 96], sizes = [8, 32], strides = [1, 1]} : vector<8x128xf32> to vector<8x32xf32>
    %610 = vector.extract_strided_slice %606 {offsets = [0, 64], sizes = [8, 32], strides = [1, 1]} : vector<8x128xf32> to vector<8x32xf32>
    %611 = arith.mulf %608, %594 : vector<8x32xf32>
    %612 = arith.mulf %607, %610 : vector<8x32xf32>
    %613 = arith.addf %611, %612 : vector<8x32xf32>
    %614 = math.tanh %613 : vector<8x32xf32>
    %615 = arith.mulf %609, %614 : vector<8x32xf32>
    %c32_246 = arith.constant 32 : index
    %c0_247 = arith.constant 0 : index
    %616 = vector.load %arg22[%c32_246, %c0_247] : memref<64x32xf32, #tpu.memory_space<vmem>>, vector<8x32xf32>
    tpu.vector_store %arg22[%c32_246, %c0_247], %615 {strides = array<i32>} : memref<64x32xf32, #tpu.memory_space<vmem>>, vector<8x32xf32>,
    %c40_248 = arith.constant 40 : index
    %c0_249 = arith.constant 0 : index
    %617 = vector.load %arg21[%c40_248, %c0_249] : memref<64x128xf32, #tpu.memory_space<vmem>>, vector<8x128xf32>
    %cst_250 = arith.constant dense<0.000000e+00> : vector<8x128xf32>
    %618 = tpu.matmul %615, %521, %cst_250 {dimension_numbers = #tpu.dot_dimension_numbers<[1], [0], [0], [1], [0, 0, 1, 1], [], []>} : vector<8x32xf32>, vector<32x128xf32>, vector<8x128xf32> -> vector<8x128xf32>
    %619 = arith.addf %617, %618 : vector<8x128xf32>
    %620 = arith.negf %619 : vector<8x128xf32>
    %621 = math.exp %620 : vector<8x128xf32>
    %cst_251 = arith.constant 1.000000e+00 : f32
    %622 = vector.broadcast %cst_251 : f32 to vector<8x128xf32>
    %623 = arith.addf %622, %621 : vector<8x128xf32>
    %624 = arith.divf %622, %623 : vector<8x128xf32>
    %625 = math.tanh %619 : vector<8x128xf32>
    %626 = vector.extract_strided_slice %624 {offsets = [0, 0], sizes = [8, 32], strides = [1, 1]} : vector<8x128xf32> to vector<8x32xf32>
    %627 = vector.extract_strided_slice %624 {offsets = [0, 32], sizes = [8, 32], strides = [1, 1]} : vector<8x128xf32> to vector<8x32xf32>
    %628 = vector.extract_strided_slice %624 {offsets = [0, 96], sizes = [8, 32], strides = [1, 1]} : vector<8x128xf32> to vector<8x32xf32>
    %629 = vector.extract_strided_slice %625 {offsets = [0, 64], sizes = [8, 32], strides = [1, 1]} : vector<8x128xf32> to vector<8x32xf32>
    %630 = arith.mulf %627, %613 : vector<8x32xf32>
    %631 = arith.mulf %626, %629 : vector<8x32xf32>
    %632 = arith.addf %630, %631 : vector<8x32xf32>
    %633 = math.tanh %632 : vector<8x32xf32>
    %634 = arith.mulf %628, %633 : vector<8x32xf32>
    %c40_252 = arith.constant 40 : index
    %c0_253 = arith.constant 0 : index
    %635 = vector.load %arg22[%c40_252, %c0_253] : memref<64x32xf32, #tpu.memory_space<vmem>>, vector<8x32xf32>
    tpu.vector_store %arg22[%c40_252, %c0_253], %634 {strides = array<i32>} : memref<64x32xf32, #tpu.memory_space<vmem>>, vector<8x32xf32>,
    %c48_254 = arith.constant 48 : index
    %c0_255 = arith.constant 0 : index
    %636 = vector.load %arg21[%c48_254, %c0_255] : memref<64x128xf32, #tpu.memory_space<vmem>>, vector<8x128xf32>
    %cst_256 = arith.constant dense<0.000000e+00> : vector<8x128xf32>
    %637 = tpu.matmul %634, %521, %cst_256 {dimension_numbers = #tpu.dot_dimension_numbers<[1], [0], [0], [1], [0, 0, 1, 1], [], []>} : vector<8x32xf32>, vector<32x128xf32>, vector<8x128xf32> -> vector<8x128xf32>
    %638 = arith.addf %636, %637 : vector<8x128xf32>
    %639 = arith.negf %638 : vector<8x128xf32>
    %640 = math.exp %639 : vector<8x128xf32>
    %cst_257 = arith.constant 1.000000e+00 : f32
    %641 = vector.broadcast %cst_257 : f32 to vector<8x128xf32>
    %642 = arith.addf %641, %640 : vector<8x128xf32>
    %643 = arith.divf %641, %642 : vector<8x128xf32>
    %644 = math.tanh %638 : vector<8x128xf32>
    %645 = vector.extract_strided_slice %643 {offsets = [0, 0], sizes = [8, 32], strides = [1, 1]} : vector<8x128xf32> to vector<8x32xf32>
    %646 = vector.extract_strided_slice %643 {offsets = [0, 32], sizes = [8, 32], strides = [1, 1]} : vector<8x128xf32> to vector<8x32xf32>
    %647 = vector.extract_strided_slice %643 {offsets = [0, 96], sizes = [8, 32], strides = [1, 1]} : vector<8x128xf32> to vector<8x32xf32>
    %648 = vector.extract_strided_slice %644 {offsets = [0, 64], sizes = [8, 32], strides = [1, 1]} : vector<8x128xf32> to vector<8x32xf32>
    %649 = arith.mulf %646, %632 : vector<8x32xf32>
    %650 = arith.mulf %645, %648 : vector<8x32xf32>
    %651 = arith.addf %649, %650 : vector<8x32xf32>
    %652 = math.tanh %651 : vector<8x32xf32>
    %653 = arith.mulf %647, %652 : vector<8x32xf32>
    %c48_258 = arith.constant 48 : index
    %c0_259 = arith.constant 0 : index
    %654 = vector.load %arg22[%c48_258, %c0_259] : memref<64x32xf32, #tpu.memory_space<vmem>>, vector<8x32xf32>
    tpu.vector_store %arg22[%c48_258, %c0_259], %653 {strides = array<i32>} : memref<64x32xf32, #tpu.memory_space<vmem>>, vector<8x32xf32>,
    %c56_260 = arith.constant 56 : index
    %c0_261 = arith.constant 0 : index
    %655 = vector.load %arg21[%c56_260, %c0_261] : memref<64x128xf32, #tpu.memory_space<vmem>>, vector<8x128xf32>
    %cst_262 = arith.constant dense<0.000000e+00> : vector<8x128xf32>
    %656 = tpu.matmul %653, %521, %cst_262 {dimension_numbers = #tpu.dot_dimension_numbers<[1], [0], [0], [1], [0, 0, 1, 1], [], []>} : vector<8x32xf32>, vector<32x128xf32>, vector<8x128xf32> -> vector<8x128xf32>
    %657 = arith.addf %655, %656 : vector<8x128xf32>
    %658 = arith.negf %657 : vector<8x128xf32>
    %659 = math.exp %658 : vector<8x128xf32>
    %cst_263 = arith.constant 1.000000e+00 : f32
    %660 = vector.broadcast %cst_263 : f32 to vector<8x128xf32>
    %661 = arith.addf %660, %659 : vector<8x128xf32>
    %662 = arith.divf %660, %661 : vector<8x128xf32>
    %663 = math.tanh %657 : vector<8x128xf32>
    %664 = vector.extract_strided_slice %662 {offsets = [0, 0], sizes = [8, 32], strides = [1, 1]} : vector<8x128xf32> to vector<8x32xf32>
    %665 = vector.extract_strided_slice %662 {offsets = [0, 32], sizes = [8, 32], strides = [1, 1]} : vector<8x128xf32> to vector<8x32xf32>
    %666 = vector.extract_strided_slice %662 {offsets = [0, 96], sizes = [8, 32], strides = [1, 1]} : vector<8x128xf32> to vector<8x32xf32>
    %667 = vector.extract_strided_slice %663 {offsets = [0, 64], sizes = [8, 32], strides = [1, 1]} : vector<8x128xf32> to vector<8x32xf32>
    %668 = arith.mulf %665, %651 : vector<8x32xf32>
    %669 = arith.mulf %664, %667 : vector<8x32xf32>
    %670 = arith.addf %668, %669 : vector<8x32xf32>
    %671 = math.tanh %670 : vector<8x32xf32>
    %672 = arith.mulf %666, %671 : vector<8x32xf32>
    %c56_264 = arith.constant 56 : index
    %c0_265 = arith.constant 0 : index
    %673 = vector.load %arg22[%c56_264, %c0_265] : memref<64x32xf32, #tpu.memory_space<vmem>>, vector<8x32xf32>
    tpu.vector_store %arg22[%c56_264, %c0_265], %672 {strides = array<i32>} : memref<64x32xf32, #tpu.memory_space<vmem>>, vector<8x32xf32>,
    %c3_266 = arith.constant 3 : index
    %c0_267 = arith.constant 0 : index
    %c0_268 = arith.constant 0 : index
    %674 = vector.load %arg19[%c3_266, %c0_267, %c0_268] : memref<4x8x32xf32, #tpu.memory_space<vmem>>, vector<1x8x32xf32>
    %675 = vector.shape_cast %674 : vector<1x8x32xf32> to vector<8x32xf32>
    %676 = vector.shape_cast %672 : vector<8x32xf32> to vector<1x8x32xf32>
    tpu.vector_store %arg19[%c3_266, %c0_267, %c0_268], %676 {strides = array<i32>} : memref<4x8x32xf32, #tpu.memory_space<vmem>>, vector<1x8x32xf32>,
    %c3_269 = arith.constant 3 : index
    %c0_270 = arith.constant 0 : index
    %c0_271 = arith.constant 0 : index
    %677 = vector.load %arg20[%c3_269, %c0_270, %c0_271] : memref<4x8x32xf32, #tpu.memory_space<vmem>>, vector<1x8x32xf32>
    %678 = vector.shape_cast %677 : vector<1x8x32xf32> to vector<8x32xf32>
    %679 = vector.shape_cast %670 : vector<8x32xf32> to vector<1x8x32xf32>
    tpu.vector_store %arg20[%c3_269, %c0_270, %c0_271], %679 {strides = array<i32>} : memref<4x8x32xf32, #tpu.memory_space<vmem>>, vector<1x8x32xf32>,
    %c0_272 = arith.constant 0 : index
    %c0_273 = arith.constant 0 : index
    %680 = vector.load %arg22[%c0_272, %c0_273] : memref<64x32xf32, #tpu.memory_space<vmem>>, vector<64x32xf32>
    %c0_274 = arith.constant 0 : index
    %c0_275 = arith.constant 0 : index
    %681 = vector.load %arg16[%c0_274, %c0_275] : memref<32x128xf32, #tpu.memory_space<vmem>>, vector<32x128xf32>
    %cst_276 = arith.constant dense<0.000000e+00> : vector<64x128xf32>
    %682 = tpu.matmul %680, %681, %cst_276 {dimension_numbers = #tpu.dot_dimension_numbers<[1], [0], [0], [1], [0, 0, 1, 1], [], []>} : vector<64x32xf32>, vector<32x128xf32>, vector<64x128xf32> -> vector<64x128xf32>
    %c0_277 = arith.constant 0 : index
    %c0_278 = arith.constant 0 : index
    %683 = vector.load %arg17[%c0_277, %c0_278] : memref<1x128xf32, #tpu.memory_space<vmem>>, vector<1x128xf32>
    %684 = vector.broadcast %683 : vector<1x128xf32> to vector<64x128xf32>
    %685 = arith.addf %682, %684 : vector<64x128xf32>
    %c0_279 = arith.constant 0 : index
    %c0_280 = arith.constant 0 : index
    %686 = vector.load %arg18[%c0_279, %c0_280] : memref<64x128xf32, #tpu.memory_space<vmem>>, vector<64x128xf32>
    tpu.vector_store %arg18[%c0_279, %c0_280], %685 {strides = array<i32>} : memref<64x128xf32, #tpu.memory_space<vmem>>, vector<64x128xf32>,
    return
  }
  func.func @transform_0(%arg0: i32) -> (i32, i32) {
    %c0_i32 = arith.constant 0 : i32
    %c0_i32_0 = arith.constant 0 : i32
    return %arg0, %c0_i32 : i32, i32
  }
  func.func @transform_1(%arg0: i32) -> (i32, i32, i32) {
    %c0_i32 = arith.constant 0 : i32
    %c0_i32_0 = arith.constant 0 : i32
    %c0_i32_1 = arith.constant 0 : i32
    return %c0_i32, %arg0, %c0_i32_0 : i32, i32, i32
  }
  func.func @transform_2(%arg0: i32) -> (i32, i32, i32) {
    %c0_i32 = arith.constant 0 : i32
    %c0_i32_0 = arith.constant 0 : i32
    %c0_i32_1 = arith.constant 0 : i32
    return %c0_i32, %arg0, %c0_i32_0 : i32, i32, i32
  }
  func.func @transform_3(%arg0: i32) -> (i32, i32) {
    %c0_i32 = arith.constant 0 : i32
    %c0_i32_0 = arith.constant 0 : i32
    %c0_i32_1 = arith.constant 0 : i32
    return %c0_i32, %c0_i32_0 : i32, i32
  }
  func.func @transform_4(%arg0: i32) -> (i32, i32) {
    %c0_i32 = arith.constant 0 : i32
    %c0_i32_0 = arith.constant 0 : i32
    %c0_i32_1 = arith.constant 0 : i32
    return %c0_i32, %c0_i32_0 : i32, i32
  }
  func.func @transform_5(%arg0: i32) -> (i32, i32) {
    %c0_i32 = arith.constant 0 : i32
    %c0_i32_0 = arith.constant 0 : i32
    %c0_i32_1 = arith.constant 0 : i32
    return %c0_i32, %c0_i32_0 : i32, i32
  }
  func.func @transform_6(%arg0: i32) -> (i32, i32) {
    %c0_i32 = arith.constant 0 : i32
    %c0_i32_0 = arith.constant 0 : i32
    %c0_i32_1 = arith.constant 0 : i32
    return %c0_i32, %c0_i32_0 : i32, i32
  }
  func.func @transform_7(%arg0: i32) -> (i32, i32) {
    %c0_i32 = arith.constant 0 : i32
    %c0_i32_0 = arith.constant 0 : i32
    %c0_i32_1 = arith.constant 0 : i32
    return %c0_i32, %c0_i32_0 : i32, i32
  }
  func.func @transform_8(%arg0: i32) -> (i32, i32) {
    %c0_i32 = arith.constant 0 : i32
    %c0_i32_0 = arith.constant 0 : i32
    %c0_i32_1 = arith.constant 0 : i32
    return %c0_i32, %c0_i32_0 : i32, i32
  }
  func.func @transform_9(%arg0: i32) -> (i32, i32) {
    %c0_i32 = arith.constant 0 : i32
    %c0_i32_0 = arith.constant 0 : i32
    %c0_i32_1 = arith.constant 0 : i32
    return %c0_i32, %c0_i32_0 : i32, i32
  }
  func.func @transform_10(%arg0: i32) -> (i32, i32) {
    %c0_i32 = arith.constant 0 : i32
    %c0_i32_0 = arith.constant 0 : i32
    %c0_i32_1 = arith.constant 0 : i32
    return %c0_i32, %c0_i32_0 : i32, i32
  }
  func.func @transform_11(%arg0: i32) -> (i32, i32) {
    %c0_i32 = arith.constant 0 : i32
    %c0_i32_0 = arith.constant 0 : i32
    %c0_i32_1 = arith.constant 0 : i32
    return %c0_i32, %c0_i32_0 : i32, i32
  }
  func.func @transform_12(%arg0: i32) -> (i32, i32) {
    %c0_i32 = arith.constant 0 : i32
    %c0_i32_0 = arith.constant 0 : i32
    %c0_i32_1 = arith.constant 0 : i32
    return %c0_i32, %c0_i32_0 : i32, i32
  }
  func.func @transform_13(%arg0: i32) -> (i32, i32) {
    %c0_i32 = arith.constant 0 : i32
    %c0_i32_0 = arith.constant 0 : i32
    %c0_i32_1 = arith.constant 0 : i32
    return %c0_i32, %c0_i32_0 : i32, i32
  }
  func.func @transform_14(%arg0: i32) -> (i32, i32) {
    %c0_i32 = arith.constant 0 : i32
    %c0_i32_0 = arith.constant 0 : i32
    %c0_i32_1 = arith.constant 0 : i32
    return %c0_i32, %c0_i32_0 : i32, i32
  }
  func.func @transform_15(%arg0: i32) -> (i32, i32) {
    %c0_i32 = arith.constant 0 : i32
    %c0_i32_0 = arith.constant 0 : i32
    %c0_i32_1 = arith.constant 0 : i32
    return %c0_i32, %c0_i32_0 : i32, i32
  }
  func.func @transform_16(%arg0: i32) -> (i32, i32) {
    %c0_i32 = arith.constant 0 : i32
    %c0_i32_0 = arith.constant 0 : i32
    %c0_i32_1 = arith.constant 0 : i32
    return %c0_i32, %c0_i32_0 : i32, i32
  }
  func.func @transform_17(%arg0: i32) -> (i32, i32) {
    %c0_i32 = arith.constant 0 : i32
    %c0_i32_0 = arith.constant 0 : i32
    return %arg0, %c0_i32 : i32, i32
  }
  func.func @transform_18(%arg0: i32) -> (i32, i32, i32) {
    %c0_i32 = arith.constant 0 : i32
    %c0_i32_0 = arith.constant 0 : i32
    %c0_i32_1 = arith.constant 0 : i32
    return %c0_i32, %arg0, %c0_i32_0 : i32, i32, i32
  }
  func.func @transform_19(%arg0: i32) -> (i32, i32, i32) {
    %c0_i32 = arith.constant 0 : i32
    %c0_i32_0 = arith.constant 0 : i32
    %c0_i32_1 = arith.constant 0 : i32
    return %c0_i32, %arg0, %c0_i32_0 : i32, i32, i32
  }
}

</mosaic_0001>

<llo_original>
// kernel: char_model_forward.1
$region0: #{char_model_forward.1}
  #allocation0 [shape = 'u32[]', space=smem, size = 0x4, offset = 0x4, fixed_abs, tag = 'smem constant byte address 0x4 - core index']
  #allocation1 [shape = 'u32[72,128]{1,0:T(1,128)}', space=vmem, size = 0x9000, scoped, tag = 'internal scratch']
  #allocation2 [shape = 'f32[64,128]{1,0:T(8,128)}', space=vmem, size = 0x8000, scoped, tag = 'scratch operand']
  #allocation3 [shape = 'f32[64,32]{1,0:T(8,128)}', space=vmem, size = 0x8000, scoped, tag = 'scratch operand']
  %s0 = inlined_call_operand.vmem [shape: f32[64,16], index: 0, kind: input, shape index: {}]
  %s1 = inlined_call_operand.vmem [shape: f32[4,8,32], index: 1, kind: input, shape index: {}]
  %s2 = inlined_call_operand.vmem [shape: f32[4,8,32], index: 2, kind: input, shape index: {}]
  %s3 = inlined_call_operand.vmem [shape: f32[16,128], index: 3, kind: input, shape index: {}]
  %s4 = inlined_call_operand.vmem [shape: f32[32,128], index: 4, kind: input, shape index: {}]
  %s5 = inlined_call_operand.vmem [shape: f32[1,128], index: 5, kind: input, shape index: {}]
  %s6 = inlined_call_operand.vmem [shape: f32[32,128], index: 6, kind: input, shape index: {}]
  %s7 = inlined_call_operand.vmem [shape: f32[32,128], index: 7, kind: input, shape index: {}]
  %s8 = inlined_call_operand.vmem [shape: f32[1,128], index: 8, kind: input, shape index: {}]
  %s9 = inlined_call_operand.vmem [shape: f32[32,128], index: 9, kind: input, shape index: {}]
  %s10 = inlined_call_operand.vmem [shape: f32[32,128], index: 10, kind: input, shape index: {}]
  %s11 = inlined_call_operand.vmem [shape: f32[1,128], index: 11, kind: input, shape index: {}]
  %s12 = inlined_call_operand.vmem [shape: f32[32,128], index: 12, kind: input, shape index: {}]
  %s13 = inlined_call_operand.vmem [shape: f32[32,128], index: 13, kind: input, shape index: {}]
  %s14 = inlined_call_operand.vmem [shape: f32[1,128], index: 14, kind: input, shape index: {}]
  %s15 = inlined_call_operand.vmem [shape: f32[32,128], index: 15, kind: input, shape index: {}]
  %s16 = inlined_call_operand.vmem [shape: f32[1,128], index: 16, kind: input, shape index: {}]
  %s17 = inlined_call_operand.vmem [shape: f32[64,128], index: 17, kind: output, shape index: {0}]
  %s18 = inlined_call_operand.vmem [shape: f32[4,8,32], index: 18, kind: output, shape index: {1}]
  %s19 = inlined_call_operand.vmem [shape: f32[4,8,32], index: 19, kind: output, shape index: {2}]
  %20 = xla_tuple %s17, %s18, %s19
  %s21 = sld [smem:[#allocation0]]
  $region94: #{char_model_forward.1} parent=0
    _
  %s23 = ssub.s32 1, %s21
  %s24 = scalar_select 0, %s23, %s21
  // Predicated region
  $region2: #{char_model_forward.1} parent=0 // pred_check
    _
  $region3: #{char_model_forward.1} parent=0 // pred_check_branch
    %26 = sbr.rel (0) target = $region5
  $region4: #{char_model_forward.1} parent=0 // pred_region
    _
  $region5: #{char_model_forward.1} parent=0 // pred_fallthru
    _
  // Predicated region
  $region6: #{char_model_forward.1} parent=0 // pred_check
    _
  $region7: #{char_model_forward.1} parent=0 // pred_check_branch
    %28 = sbr.rel (0) target = $region9
  $region8: #{char_model_forward.1} parent=0 // pred_region
    _
  $region9: #{char_model_forward.1} parent=0 // pred_fallthru
    _
  // Predicated region
  $region10: #{char_model_forward.1} parent=0 // pred_check
    _
  $region11: #{char_model_forward.1} parent=0 // pred_check_branch
    %30 = sbr.rel (0) target = $region13
  $region12: #{char_model_forward.1} parent=0 // pred_region
    _
  $region13: #{char_model_forward.1} parent=0 // pred_fallthru
    _
  // Predicated region
  $region14: #{char_model_forward.1} parent=0 // pred_check
    _
  $region15: #{char_model_forward.1} parent=0 // pred_check_branch
    %32 = sbr.rel (0) target = $region17
  $region16: #{char_model_forward.1} parent=0 // pred_region
    _
  $region17: #{char_model_forward.1} parent=0 // pred_fallthru
    _
  // Predicated region
  $region18: #{char_model_forward.1} parent=0 // pred_check
    _
  $region19: #{char_model_forward.1} parent=0 // pred_check_branch
    %34 = sbr.rel (0) target = $region21
  $region20: #{char_model_forward.1} parent=0 // pred_region
    _
  $region21: #{char_model_forward.1} parent=0 // pred_fallthru
    _
  // Predicated region
  $region22: #{char_model_forward.1} parent=0 // pred_check
    _
  $region23: #{char_model_forward.1} parent=0 // pred_check_branch
    %36 = sbr.rel (0) target = $region25
  $region24: #{char_model_forward.1} parent=0 // pred_region
    _
  $region25: #{char_model_forward.1} parent=0 // pred_fallthru
    _
  // Predicated region
  $region26: #{char_model_forward.1} parent=0 // pred_check
    _
  $region27: #{char_model_forward.1} parent=0 // pred_check_branch
    %38 = sbr.rel (0) target = $region29
  $region28: #{char_model_forward.1} parent=0 // pred_region
    _
  $region29: #{char_model_forward.1} parent=0 // pred_fallthru
    _
  // Predicated region
  $region30: #{char_model_forward.1} parent=0 // pred_check
    _
  $region31: #{char_model_forward.1} parent=0 // pred_check_branch
    %40 = sbr.rel (0) target = $region33
  $region32: #{char_model_forward.1} parent=0 // pred_region
    _
  $region33: #{char_model_forward.1} parent=0 // pred_fallthru
    _
  // Predicated region
  $region34: #{char_model_forward.1} parent=0 // pred_check
    _
  $region35: #{char_model_forward.1} parent=0 // pred_check_branch
    %42 = sbr.rel (0) target = $region37
  $region36: #{char_model_forward.1} parent=0 // pred_region
    _
  $region37: #{char_model_forward.1} parent=0 // pred_fallthru
    _
  // Predicated region
  $region38: #{char_model_forward.1} parent=0 // pred_check
    _
  $region39: #{char_model_forward.1} parent=0 // pred_check_branch
    %44 = sbr.rel (0) target = $region41
  $region40: #{char_model_forward.1} parent=0 // pred_region
    _
  $region41: #{char_model_forward.1} parent=0 // pred_fallthru
    _
  // Predicated region
  $region42: #{char_model_forward.1} parent=0 // pred_check
    _
  $region43: #{char_model_forward.1} parent=0 // pred_check_branch
    %46 = sbr.rel (0) target = $region45
  $region44: #{char_model_forward.1} parent=0 // pred_region
    _
  $region45: #{char_model_forward.1} parent=0 // pred_fallthru
    _
  // Predicated region
  $region46: #{char_model_forward.1} parent=0 // pred_check
    _
  $region47: #{char_model_forward.1} parent=0 // pred_check_branch
    %48 = sbr.rel (0) target = $region49
  $region48: #{char_model_forward.1} parent=0 // pred_region
    _
  $region49: #{char_model_forward.1} parent=0 // pred_fallthru
    _
  // Predicated region
  $region50: #{char_model_forward.1} parent=0 // pred_check
    _
  $region51: #{char_model_forward.1} parent=0 // pred_check_branch
    %50 = sbr.rel (0) target = $region53
  $region52: #{char_model_forward.1} parent=0 // pred_region
    _
  $region53: #{char_model_forward.1} parent=0 // pred_fallthru
    _
  // Predicated region
  $region54: #{char_model_forward.1} parent=0 // pred_check
    _
  $region55: #{char_model_forward.1} parent=0 // pred_check_branch
    %52 = sbr.rel (0) target = $region57
  $region56: #{char_model_forward.1} parent=0 // pred_region
    _
  $region57: #{char_model_forward.1} parent=0 // pred_fallthru
    _
  // Predicated region
  $region58: #{char_model_forward.1} parent=0 // pred_check
    _
  $region59: #{char_model_forward.1} parent=0 // pred_check_branch
    %54 = sbr.rel (0) target = $region61
  $region60: #{char_model_forward.1} parent=0 // pred_region
    _
  $region61: #{char_model_forward.1} parent=0 // pred_fallthru
    _
  // Predicated region
  $region62: #{char_model_forward.1} parent=0 // pred_check
    _
  $region63: #{char_model_forward.1} parent=0 // pred_check_branch
    %56 = sbr.rel (0) target = $region65
  $region64: #{char_model_forward.1} parent=0 // pred_region
    _
  $region65: #{char_model_forward.1} parent=0 // pred_fallthru
    _
  // Predicated region
  $region66: #{char_model_forward.1} parent=0 // pred_check
    _
  $region67: #{char_model_forward.1} parent=0 // pred_check_branch
    %58 = sbr.rel (0) target = $region69
  $region68: #{char_model_forward.1} parent=0 // pred_region
    _
  $region69: #{char_model_forward.1} parent=0 // pred_fallthru
    _
  %v59 = vld [vmem:[%s0] sm:$0xff]
  %v60 = vld [vmem:[%s0 + $0x8] sm:$0xff]
  %v61 = vld [vmem:[%s0 + $0x10] sm:$0xff]
  %v62 = vld [vmem:[%s0 + $0x18] sm:$0xff]
  %v63 = vld [vmem:[%s0 + $0x20] sm:$0xff]
  %v64 = vld [vmem:[%s0 + $0x28] sm:$0xff]
  %v65 = vld [vmem:[%s0 + $0x30] sm:$0xff]
  %v66 = vld [vmem:[%s0 + $0x38] sm:$0xff]
  %v67 = vld [vmem:[%s3] sm:$0xff]
  %v68 = vld [vmem:[%s3 + $0x8] sm:$0xff]
  %v69 = vld [vmem:[%s5] sm:$0x1]
  %v71 = vperm.slane %v69, 0
  %vm73 = vcmask 130048
  %v75 = vsel %vm73, %v59, 0
  %v78 = vsel %vm73, %v60, 0
  %v81 = vsel %vm73, %v61, 0
  %v84 = vsel %vm73, %v62, 0
  %v87 = vsel %vm73, %v63, 0
  %v90 = vsel %vm73, %v64, 0
  %v93 = vsel %vm73, %v65, 0
  %v96 = vsel %vm73, %v66, 0
  %98 = vmatpush.msra.mxu0 0.0
  %99 = vmatpush.msra.mxu0 0.0
  %100 = vmatpush.msra.mxu0 0.0
  %101 = vmatpush.msra.mxu0 0.0
  %102 = vmatpush.msra.mxu0 0.0
  %103 = vmatpush.msra.mxu0 0.0
  %104 = vmatpush.msra.mxu0 0.0
  %105 = vmatpush.msra.mxu0 0.0
  %106 = vmatpush.msra.mxu0 0.0
  %107 = vmatpush.msra.mxu0 0.0
  %108 = vmatpush.msra.mxu0 0.0
  %109 = vmatpush.msra.mxu0 0.0
  %110 = vmatpush.msra.mxu0 0.0
  %111 = vmatpush.msra.mxu0 0.0
  %112 = vmatpush.msra.mxu0 %v68
  %113 = vmatpush.msra.mxu0 %v67
  %114 = vmatmul.f32.gmra.mxu0 %v75
  %v115 = vpop.f32.mrf.mxu0
  %v116 = vadd.f32 %v71, %v115
  %117 = vmatmul.f32.gmra.mxu0 %v78
  %v118 = vpop.f32.mrf.mxu0
  %v119 = vadd.f32 %v71, %v118
  %120 = vmatmul.f32.gmra.mxu0 %v81
  %v121 = vpop.f32.mrf.mxu0
  %v122 = vadd.f32 %v71, %v121
  %123 = vmatmul.f32.gmra.mxu0 %v84
  %v124 = vpop.f32.mrf.mxu0
  %v125 = vadd.f32 %v71, %v124
  %126 = vmatmul.f32.gmra.mxu0 %v87
  %v127 = vpop.f32.mrf.mxu0
  %v128 = vadd.f32 %v71, %v127
  %129 = vmatmul.f32.gmra.mxu0 %v90
  %v130 = vpop.f32.mrf.mxu0
  %v131 = vadd.f32 %v71, %v130
  %132 = vmatmul.f32.gmra.mxu0 %v93
  %v133 = vpop.f32.mrf.mxu0
  %v134 = vadd.f32 %v71, %v133
  %135 = vmatmul.f32.gmra.mxu0 %v96
  %v136 = vpop.f32.mrf.mxu0
  %v137 = vadd.f32 %v71, %v136
  %138 = vdwg.mxu0
  %139 = vst [vmem:[#allocation2] sm:$0xff] %v116
  %140 = vst [vmem:[#allocation2 + $0x8] sm:$0xff] %v119
  %141 = vst [vmem:[#allocation2 + $0x10] sm:$0xff] %v122
  %142 = vst [vmem:[#allocation2 + $0x18] sm:$0xff] %v125
  %143 = vst [vmem:[#allocation2 + $0x20] sm:$0xff] %v128
  %144 = vst [vmem:[#allocation2 + $0x28] sm:$0xff] %v131
  %145 = vst [vmem:[#allocation2 + $0x30] sm:$0xff] %v134
  %146 = vst [vmem:[#allocation2 + $0x38] sm:$0xff] %v137
  %v147 = vld [vmem:[%s1] sm:$0xff]
  %v148 = vld [vmem:[%s2] sm:$0xff]
  %v149 = vld [vmem:[%s4] sm:$0xff]
  %v150 = vld [vmem:[%s4 + $0x8] sm:$0xff]
  %v151 = vld [vmem:[%s4 + $0x10] sm:$0xff]
  %v152 = vld [vmem:[%s4 + $0x18] sm:$0xff]
  %v153 = vld [vmem:[#allocation2] sm:$0xff]
  %vm154 = vcmask 261120
  %v156 = vsel %vm154, %v147, 0
  %158 = vmatpush.msra.mxu0 0.0
  %159 = vmatpush.msra.mxu0 0.0
  %160 = vmatpush.msra.mxu0 0.0
  %161 = vmatpush.msra.mxu0 0.0
  %162 = vmatpush.msra.mxu0 0.0
  %163 = vmatpush.msra.mxu0 0.0
  %164 = vmatpush.msra.mxu0 0.0
  %165 = vmatpush.msra.mxu0 0.0
  %166 = vmatpush.msra.mxu0 0.0
  %167 = vmatpush.msra.mxu0 0.0
  %168 = vmatpush.msra.mxu0 0.0
  %169 = vmatpush.msra.mxu0 0.0
  %170 = vmatpush.msra.mxu0 %v152
  %171 = vmatpush.msra.mxu0 %v151
  %172 = vmatpush.msra.mxu0 %v150
  %173 = vmatpush.msra.mxu0 %v149
  %174 = vmatmul.f32.gmra.mxu0 %v156
  %v175 = vpop.f32.mrf.mxu0
  %v176 = vadd.f32 0.0, %v175
  %177 = vdwg.mxu0
  %v178 = vadd.f32 %v153, %v176
  %v179 = vxor.u32 %v178, 2147483648
  %v180 = vmul.f32 %v179, 1.442695
  %v181 = vpow.pop %v180
  %v182 = vadd.f32 %v181, 1.0
  %v183 = vrcp.pop %v182
  %v184 = vmul.f32 %v182, %v183
  %v185 = vsub.f32 1.0, %v184
  %v186 = vmul.f32 %v183, %v185
  %v187 = vadd.f32 %v183, %v186
  %vm188 = vweird.f32 %v182
  %vm189 = vweird.f32 %v183
  %vm190 = vmor %vm188, %vm189
  %v191 = vsel %vm190, %v183, %v187
  %v192 = vand.u32 2147483647, %v182
  %vm193 = vcmp.eq.f32.partialorder %v192, 8.507059e+37
  %v194 = vand.u32 %v182, 2147483648
  %v195 = vor.u32 1.1754944e-38, %v194
  %v196 = vsel %vm193, %v195, %v191
  %v197 = vmul.f32 1.0, %v196
  %v198 = vtanh.pop %v178
  %200 = vrot.lane.b32.xlu0 %v148, 32
  %v201 = vpop.permute.xlu0 %200
  %v203 = vmul.f32 %v197, %v201
  %205 = vrot.lane.b32.xlu0 %v198, 64
  %v206 = vpop.permute.xlu0 %205
  %v208 = vmul.f32 %v197, %v206
  %210 = vrot.lane.b32.xlu0 %v208, 32
  %v211 = vpop.permute.xlu0 %210
  %v213 = vadd.f32 %v203, %v211
  %v214 = vtanh.pop %v213
  %216 = vrot.lane.b32.xlu0 %v214, 64
  %v217 = vpop.permute.xlu0 %216
  %v219 = vmul.f32 %v197, %v217
  %221 = vrot.lane.b32.xlu0 %v219, 32
  %v222 = vpop.permute.xlu0 %221
  %224 = vst.msk [vmem:[#allocation3] sm:$0xff] %vm154, %v222
  %v225 = vld [vmem:[#allocation2 + $0x8] sm:$0xff]
  %v226 = vsel %vm154, %v222, 0
  %228 = vmatpush.msra.mxu0 0.0
  %229 = vmatpush.msra.mxu0 0.0
  %230 = vmatpush.msra.mxu0 0.0
  %231 = vmatpush.msra.mxu0 0.0
  %232 = vmatpush.msra.mxu0 0.0
  %233 = vmatpush.msra.mxu0 0.0
  %234 = vmatpush.msra.mxu0 0.0
  %235 = vmatpush.msra.mxu0 0.0
  %236 = vmatpush.msra.mxu0 0.0
  %237 = vmatpush.msra.mxu0 0.0
  %238 = vmatpush.msra.mxu0 0.0
  %239 = vmatpush.msra.mxu0 0.0
  %240 = vmatpush.msra.mxu0 %v152
  %241 = vmatpush.msra.mxu0 %v151
  %242 = vmatpush.msra.mxu0 %v150
  %243 = vmatpush.msra.mxu0 %v149
  %244 = vmatmul.f32.gmra.mxu0 %v226
  %v245 = vpop.f32.mrf.mxu0
  %v246 = vadd.f32 0.0, %v245
  %247 = vdwg.mxu0
  %v248 = vadd.f32 %v225, %v246
  %v249 = vxor.u32 %v248, 2147483648
  %v250 = vmul.f32 %v249, 1.442695
  %v251 = vpow.pop %v250
  %v252 = vadd.f32 %v251, 1.0
  %v253 = vrcp.pop %v252
  %v254 = vmul.f32 %v252, %v253
  %v255 = vsub.f32 1.0, %v254
  %v256 = vmul.f32 %v253, %v255
  %v257 = vadd.f32 %v253, %v256
  %vm258 = vweird.f32 %v252
  %vm259 = vweird.f32 %v253
  %vm260 = vmor %vm258, %vm259
  %v261 = vsel %vm260, %v253, %v257
  %v262 = vand.u32 2147483647, %v252
  %vm263 = vcmp.eq.f32.partialorder %v262, 8.507059e+37
  %v264 = vand.u32 %v252, 2147483648
  %v265 = vor.u32 1.1754944e-38, %v264
  %v266 = vsel %vm263, %v265, %v261
  %v267 = vmul.f32 1.0, %v266
  %v268 = vtanh.pop %v248
  %v269 = vmul.f32 %v267, %v213
  %271 = vrot.lane.b32.xlu0 %v268, 64
  %v272 = vpop.permute.xlu0 %271
  %v274 = vmul.f32 %v267, %v272
  %276 = vrot.lane.b32.xlu0 %v274, 32
  %v277 = vpop.permute.xlu0 %276
  %v279 = vadd.f32 %v269, %v277
  %v280 = vtanh.pop %v279
  %282 = vrot.lane.b32.xlu0 %v280, 64
  %v283 = vpop.permute.xlu0 %282
  %v285 = vmul.f32 %v267, %v283
  %287 = vrot.lane.b32.xlu0 %v285, 32
  %v288 = vpop.permute.xlu0 %287
  %290 = vst.msk [vmem:[#allocation3 + $0x8] sm:$0xff] %vm154, %v288
  %v291 = vld [vmem:[#allocation2 + $0x10] sm:$0xff]
  %v292 = vsel %vm154, %v288, 0
  %294 = vmatpush.msra.mxu0 0.0
  %295 = vmatpush.msra.mxu0 0.0
  %296 = vmatpush.msra.mxu0 0.0
  %297 = vmatpush.msra.mxu0 0.0
  %298 = vmatpush.msra.mxu0 0.0
  %299 = vmatpush.msra.mxu0 0.0
  %300 = vmatpush.msra.mxu0 0.0
  %301 = vmatpush.msra.mxu0 0.0
  %302 = vmatpush.msra.mxu0 0.0
  %303 = vmatpush.msra.mxu0 0.0
  %304 = vmatpush.msra.mxu0 0.0
  %305 = vmatpush.msra.mxu0 0.0
  %306 = vmatpush.msra.mxu0 %v152
  %307 = vmatpush.msra.mxu0 %v151
  %308 = vmatpush.msra.mxu0 %v150
  %309 = vmatpush.msra.mxu0 %v149
  %310 = vmatmul.f32.gmra.mxu0 %v292
  %v311 = vpop.f32.mrf.mxu0
  %v312 = vadd.f32 0.0, %v311
  %313 = vdwg.mxu0
  %v314 = vadd.f32 %v291, %v312
  %v315 = vxor.u32 %v314, 2147483648
  %v316 = vmul.f32 %v315, 1.442695
  %v317 = vpow.pop %v316
  %v318 = vadd.f32 %v317, 1.0
  %v319 = vrcp.pop %v318
  %v320 = vmul.f32 %v318, %v319
  %v321 = vsub.f32 1.0, %v320
  %v322 = vmul.f32 %v319, %v321
  %v323 = vadd.f32 %v319, %v322
  %vm324 = vweird.f32 %v318
  %vm325 = vweird.f32 %v319
  %vm326 = vmor %vm324, %vm325
  %v327 = vsel %vm326, %v319, %v323
  %v328 = vand.u32 2147483647, %v318
  %vm329 = vcmp.eq.f32.partialorder %v328, 8.507059e+37
  %v330 = vand.u32 %v318, 2147483648
  %v331 = vor.u32 1.1754944e-38, %v330
  %v332 = vsel %vm329, %v331, %v327
  %v333 = vmul.f32 1.0, %v332
  %v334 = vtanh.pop %v314
  %v335 = vmul.f32 %v333, %v279
  %337 = vrot.lane.b32.xlu0 %v334, 64
  %v338 = vpop.permute.xlu0 %337
  %v340 = vmul.f32 %v333, %v338
  %342 = vrot.lane.b32.xlu0 %v340, 32
  %v343 = vpop.permute.xlu0 %342
  %v345 = vadd.f32 %v335, %v343
  %v346 = vtanh.pop %v345
  %348 = vrot.lane.b32.xlu0 %v346, 64
  %v349 = vpop.permute.xlu0 %348
  %v351 = vmul.f32 %v333, %v349
  %353 = vrot.lane.b32.xlu0 %v351, 32
  %v354 = vpop.permute.xlu0 %353
  %356 = vst.msk [vmem:[#allocation3 + $0x10] sm:$0xff] %vm154, %v354
  %v357 = vld [vmem:[#allocation2 + $0x18] sm:$0xff]
  %v358 = vsel %vm154, %v354, 0
  %360 = vmatpush.msra.mxu0 0.0
  %361 = vmatpush.msra.mxu0 0.0
  %362 = vmatpush.msra.mxu0 0.0
  %363 = vmatpush.msra.mxu0 0.0
  %364 = vmatpush.msra.mxu0 0.0
  %365 = vmatpush.msra.mxu0 0.0
  %366 = vmatpush.msra.mxu0 0.0
  %367 = vmatpush.msra.mxu0 0.0
  %368 = vmatpush.msra.mxu0 0.0
  %369 = vmatpush.msra.mxu0 0.0
  %370 = vmatpush.msra.mxu0 0.0
  %371 = vmatpush.msra.mxu0 0.0
  %372 = vmatpush.msra.mxu0 %v152
  %373 = vmatpush.msra.mxu0 %v151
  %374 = vmatpush.msra.mxu0 %v150
  %375 = vmatpush.msra.mxu0 %v149
  %376 = vmatmul.f32.gmra.mxu0 %v358
  %v377 = vpop.f32.mrf.mxu0
  %v378 = vadd.f32 0.0, %v377
  %379 = vdwg.mxu0
  %v380 = vadd.f32 %v357, %v378
  %v381 = vxor.u32 %v380, 2147483648
  %v382 = vmul.f32 %v381, 1.442695
  %v383 = vpow.pop %v382
  %v384 = vadd.f32 %v383, 1.0
  %v385 = vrcp.pop %v384
  %v386 = vmul.f32 %v384, %v385
  %v387 = vsub.f32 1.0, %v386
  %v388 = vmul.f32 %v385, %v387
  %v389 = vadd.f32 %v385, %v388
  %vm390 = vweird.f32 %v384
  %vm391 = vweird.f32 %v385
  %vm392 = vmor %vm390, %vm391
  %v393 = vsel %vm392, %v385, %v389
  %v394 = vand.u32 2147483647, %v384
  %vm395 = vcmp.eq.f32.partialorder %v394, 8.507059e+37
  %v396 = vand.u32 %v384, 2147483648
  %v397 = vor.u32 1.1754944e-38, %v396
  %v398 = vsel %vm395, %v397, %v393
  %v399 = vmul.f32 1.0, %v398
  %v400 = vtanh.pop %v380
  %v401 = vmul.f32 %v399, %v345
  %403 = vrot.lane.b32.xlu0 %v400, 64
  %v404 = vpop.permute.xlu0 %403
  %v406 = vmul.f32 %v399, %v404
  %408 = vrot.lane.b32.xlu0 %v406, 32
  %v409 = vpop.permute.xlu0 %408
  %v411 = vadd.f32 %v401, %v409
  %v412 = vtanh.pop %v411
  %414 = vrot.lane.b32.xlu0 %v412, 64
  %v415 = vpop.permute.xlu0 %414
  %v417 = vmul.f32 %v399, %v415
  %419 = vrot.lane.b32.xlu0 %v417, 32
  %v420 = vpop.permute.xlu0 %419
  %422 = vst.msk [vmem:[#allocation3 + $0x18] sm:$0xff] %vm154, %v420
  %v423 = vld [vmem:[#allocation2 + $0x20] sm:$0xff]
  %v424 = vsel %vm154, %v420, 0
  %426 = vmatpush.msra.mxu0 0.0
  %427 = vmatpush.msra.mxu0 0.0
  %428 = vmatpush.msra.mxu0 0.0
  %429 = vmatpush.msra.mxu0 0.0
  %430 = vmatpush.msra.mxu0 0.0
  %431 = vmatpush.msra.mxu0 0.0
  %432 = vmatpush.msra.mxu0 0.0
  %433 = vmatpush.msra.mxu0 0.0
  %434 = vmatpush.msra.mxu0 0.0
  %435 = vmatpush.msra.mxu0 0.0
  %436 = vmatpush.msra.mxu0 0.0
  %437 = vmatpush.msra.mxu0 0.0
  %438 = vmatpush.msra.mxu0 %v152
  %439 = vmatpush.msra.mxu0 %v151
  %440 = vmatpush.msra.mxu0 %v150
  %441 = vmatpush.msra.mxu0 %v149
  %442 = vmatmul.f32.gmra.mxu0 %v424
  %v443 = vpop.f32.mrf.mxu0
  %v444 = vadd.f32 0.0, %v443
  %445 = vdwg.mxu0
  %v446 = vadd.f32 %v423, %v444
  %v447 = vxor.u32 %v446, 2147483648
  %v448 = vmul.f32 %v447, 1.442695
  %v449 = vpow.pop %v448
  %v450 = vadd.f32 %v449, 1.0
  %v451 = vrcp.pop %v450
  %v452 = vmul.f32 %v450, %v451
  %v453 = vsub.f32 1.0, %v452
  %v454 = vmul.f32 %v451, %v453
  %v455 = vadd.f32 %v451, %v454
  %vm456 = vweird.f32 %v450
  %vm457 = vweird.f32 %v451
  %vm458 = vmor %vm456, %vm457
  %v459 = vsel %vm458, %v451, %v455
  %v460 = vand.u32 2147483647, %v450
  %vm461 = vcmp.eq.f32.partialorder %v460, 8.507059e+37
  %v462 = vand.u32 %v450, 2147483648
  %v463 = vor.u32 1.1754944e-38, %v462
  %v464 = vsel %vm461, %v463, %v459
  %v465 = vmul.f32 1.0, %v464
  %v466 = vtanh.pop %v446
  %v467 = vmul.f32 %v465, %v411
  %469 = vrot.lane.b32.xlu0 %v466, 64
  %v470 = vpop.permute.xlu0 %469
  %v472 = vmul.f32 %v465, %v470
  %474 = vrot.lane.b32.xlu0 %v472, 32
  %v475 = vpop.permute.xlu0 %474
  %v477 = vadd.f32 %v467, %v475
  %v478 = vtanh.pop %v477
  %480 = vrot.lane.b32.xlu0 %v478, 64
  %v481 = vpop.permute.xlu0 %480
  %v483 = vmul.f32 %v465, %v481
  %485 = vrot.lane.b32.xlu0 %v483, 32
  %v486 = vpop.permute.xlu0 %485
  %488 = vst.msk [vmem:[#allocation3 + $0x20] sm:$0xff] %vm154, %v486
  %v489 = vld [vmem:[#allocation2 + $0x28] sm:$0xff]
  %v490 = vsel %vm154, %v486, 0
  %492 = vmatpush.msra.mxu0 0.0
  %493 = vmatpush.msra.mxu0 0.0
  %494 = vmatpush.msra.mxu0 0.0
  %495 = vmatpush.msra.mxu0 0.0
  %496 = vmatpush.msra.mxu0 0.0
  %497 = vmatpush.msra.mxu0 0.0
  %498 = vmatpush.msra.mxu0 0.0
  %499 = vmatpush.msra.mxu0 0.0
  %500 = vmatpush.msra.mxu0 0.0
  %501 = vmatpush.msra.mxu0 0.0
  %502 = vmatpush.msra.mxu0 0.0
  %503 = vmatpush.msra.mxu0 0.0
  %504 = vmatpush.msra.mxu0 %v152
  %505 = vmatpush.msra.mxu0 %v151
  %506 = vmatpush.msra.mxu0 %v150
  %507 = vmatpush.msra.mxu0 %v149
  %508 = vmatmul.f32.gmra.mxu0 %v490
  %v509 = vpop.f32.mrf.mxu0
  %v510 = vadd.f32 0.0, %v509
  %511 = vdwg.mxu0
  %v512 = vadd.f32 %v489, %v510
  %v513 = vxor.u32 %v512, 2147483648
  %v514 = vmul.f32 %v513, 1.442695
  %v515 = vpow.pop %v514
  %v516 = vadd.f32 %v515, 1.0
  %v517 = vrcp.pop %v516
  %v518 = vmul.f32 %v516, %v517
  %v519 = vsub.f32 1.0, %v518
  %v520 = vmul.f32 %v517, %v519
  %v521 = vadd.f32 %v517, %v520
  %vm522 = vweird.f32 %v516
  %vm523 = vweird.f32 %v517
  %vm524 = vmor %vm522, %vm523
  %v525 = vsel %vm524, %v517, %v521
  %v526 = vand.u32 2147483647, %v516
  %vm527 = vcmp.eq.f32.partialorder %v526, 8.507059e+37
  %v528 = vand.u32 %v516, 2147483648
  %v529 = vor.u32 1.1754944e-38, %v528
  %v530 = vsel %vm527, %v529, %v525
  %v531 = vmul.f32 1.0, %v530
  %v532 = vtanh.pop %v512
  %v533 = vmul.f32 %v531, %v477
  %535 = vrot.lane.b32.xlu0 %v532, 64
  %v536 = vpop.permute.xlu0 %535
  %v538 = vmul.f32 %v531, %v536
  %540 = vrot.lane.b32.xlu0 %v538, 32
  %v541 = vpop.permute.xlu0 %540
  %v543 = vadd.f32 %v533, %v541
  %v544 = vtanh.pop %v543
  %546 = vrot.lane.b32.xlu0 %v544, 64
  %v547 = vpop.permute.xlu0 %546
  %v549 = vmul.f32 %v531, %v547
  %551 = vrot.lane.b32.xlu0 %v549, 32
  %v552 = vpop.permute.xlu0 %551
  %554 = vst.msk [vmem:[#allocation3 + $0x28] sm:$0xff] %vm154, %v552
  %v555 = vld [vmem:[#allocation2 + $0x30] sm:$0xff]
  %v556 = vsel %vm154, %v552, 0
  %558 = vmatpush.msra.mxu0 0.0
  %559 = vmatpush.msra.mxu0 0.0
  %560 = vmatpush.msra.mxu0 0.0
  %561 = vmatpush.msra.mxu0 0.0
  %562 = vmatpush.msra.mxu0 0.0
  %563 = vmatpush.msra.mxu0 0.0
  %564 = vmatpush.msra.mxu0 0.0
  %565 = vmatpush.msra.mxu0 0.0
  %566 = vmatpush.msra.mxu0 0.0
  %567 = vmatpush.msra.mxu0 0.0
  %568 = vmatpush.msra.mxu0 0.0
  %569 = vmatpush.msra.mxu0 0.0
  %570 = vmatpush.msra.mxu0 %v152
  %571 = vmatpush.msra.mxu0 %v151
  %572 = vmatpush.msra.mxu0 %v150
  %573 = vmatpush.msra.mxu0 %v149
  %574 = vmatmul.f32.gmra.mxu0 %v556
  %v575 = vpop.f32.mrf.mxu0
  %v576 = vadd.f32 0.0, %v575
  %577 = vdwg.mxu0
  %v578 = vadd.f32 %v555, %v576
  %v579 = vxor.u32 %v578, 2147483648
  %v580 = vmul.f32 %v579, 1.442695
  %v581 = vpow.pop %v580
  %v582 = vadd.f32 %v581, 1.0
  %v583 = vrcp.pop %v582
  %v584 = vmul.f32 %v582, %v583
  %v585 = vsub.f32 1.0, %v584
  %v586 = vmul.f32 %v583, %v585
  %v587 = vadd.f32 %v583, %v586
  %vm588 = vweird.f32 %v582
  %vm589 = vweird.f32 %v583
  %vm590 = vmor %vm588, %vm589
  %v591 = vsel %vm590, %v583, %v587
  %v592 = vand.u32 2147483647, %v582
  %vm593 = vcmp.eq.f32.partialorder %v592, 8.507059e+37
  %v594 = vand.u32 %v582, 2147483648
  %v595 = vor.u32 1.1754944e-38, %v594
  %v596 = vsel %vm593, %v595, %v591
  %v597 = vmul.f32 1.0, %v596
  %v598 = vtanh.pop %v578
  %v599 = vmul.f32 %v597, %v543
  %601 = vrot.lane.b32.xlu0 %v598, 64
  %v602 = vpop.permute.xlu0 %601
  %v604 = vmul.f32 %v597, %v602
  %606 = vrot.lane.b32.xlu0 %v604, 32
  %v607 = vpop.permute.xlu0 %606
  %v609 = vadd.f32 %v599, %v607
  %v610 = vtanh.pop %v609
  %612 = vrot.lane.b32.xlu0 %v610, 64
  %v613 = vpop.permute.xlu0 %612
  %v615 = vmul.f32 %v597, %v613
  %617 = vrot.lane.b32.xlu0 %v615, 32
  %v618 = vpop.permute.xlu0 %617
  %620 = vst.msk [vmem:[#allocation3 + $0x30] sm:$0xff] %vm154, %v618
  %v621 = vld [vmem:[#allocation2 + $0x38] sm:$0xff]
  %v622 = vsel %vm154, %v618, 0
  %624 = vmatpush.msra.mxu0 0.0
  %625 = vmatpush.msra.mxu0 0.0
  %626 = vmatpush.msra.mxu0 0.0
  %627 = vmatpush.msra.mxu0 0.0
  %628 = vmatpush.msra.mxu0 0.0
  %629 = vmatpush.msra.mxu0 0.0
  %630 = vmatpush.msra.mxu0 0.0
  %631 = vmatpush.msra.mxu0 0.0
  %632 = vmatpush.msra.mxu0 0.0
  %633 = vmatpush.msra.mxu0 0.0
  %634 = vmatpush.msra.mxu0 0.0
  %635 = vmatpush.msra.mxu0 0.0
  %636 = vmatpush.msra.mxu0 %v152
  %637 = vmatpush.msra.mxu0 %v151
  %638 = vmatpush.msra.mxu0 %v150
  %639 = vmatpush.msra.mxu0 %v149
  %640 = vmatmul.f32.gmra.mxu0 %v622
  %v641 = vpop.f32.mrf.mxu0
  %v642 = vadd.f32 0.0, %v641
  %643 = vdwg.mxu0
  %v644 = vadd.f32 %v621, %v642
  %v645 = vxor.u32 %v644, 2147483648
  %v646 = vmul.f32 %v645, 1.442695
  %v647 = vpow.pop %v646
  %v648 = vadd.f32 %v647, 1.0
  %v649 = vrcp.pop %v648
  %v650 = vmul.f32 %v648, %v649
  %v651 = vsub.f32 1.0, %v650
  %v652 = vmul.f32 %v649, %v651
  %v653 = vadd.f32 %v649, %v652
  %vm654 = vweird.f32 %v648
  %vm655 = vweird.f32 %v649
  %vm656 = vmor %vm654, %vm655
  %v657 = vsel %vm656, %v649, %v653
  %v658 = vand.u32 2147483647, %v648
  %vm659 = vcmp.eq.f32.partialorder %v658, 8.507059e+37
  %v660 = vand.u32 %v648, 2147483648
  %v661 = vor.u32 1.1754944e-38, %v660
  %v662 = vsel %vm659, %v661, %v657
  %v663 = vmul.f32 1.0, %v662
  %v664 = vtanh.pop %v644
  %v665 = vmul.f32 %v663, %v609
  %667 = vrot.lane.b32.xlu0 %v664, 64
  %v668 = vpop.permute.xlu0 %667
  %v670 = vmul.f32 %v663, %v668
  %672 = vrot.lane.b32.xlu0 %v670, 32
  %v673 = vpop.permute.xlu0 %672
  %v675 = vadd.f32 %v665, %v673
  %v676 = vtanh.pop %v675
  %678 = vrot.lane.b32.xlu0 %v676, 64
  %v679 = vpop.permute.xlu0 %678
  %v681 = vmul.f32 %v663, %v679
  %683 = vrot.lane.b32.xlu0 %v681, 32
  %v684 = vpop.permute.xlu0 %683
  %686 = vst.msk [vmem:[#allocation3 + $0x38] sm:$0xff] %vm154, %v684
  %687 = vst.msk [vmem:[%s18] sm:$0xff] %vm154, %v684
  %689 = vrot.lane.b32.xlu0 %v675, 96
  %v690 = vpop.permute.xlu0 %689
  %692 = vst.msk [vmem:[%s19] sm:$0xff] %vm154, %v690
  %v693 = vld [vmem:[#allocation3] sm:$0xff]
  %v694 = vld [vmem:[#allocation3 + $0x8] sm:$0xff]
  %v695 = vld [vmem:[#allocation3 + $0x10] sm:$0xff]
  %v696 = vld [vmem:[#allocation3 + $0x18] sm:$0xff]
  %v697 = vld [vmem:[#allocation3 + $0x20] sm:$0xff]
  %v698 = vld [vmem:[#allocation3 + $0x28] sm:$0xff]
  %v699 = vld [vmem:[#allocation3 + $0x30] sm:$0xff]
  %v700 = vld [vmem:[#allocation3 + $0x38] sm:$0xff]
  %v701 = vld [vmem:[%s6] sm:$0xff]
  %v702 = vld [vmem:[%s6 + $0x8] sm:$0xff]
  %v703 = vld [vmem:[%s6 + $0x10] sm:$0xff]
  %v704 = vld [vmem:[%s6 + $0x18] sm:$0xff]
  %v705 = vld [vmem:[%s8] sm:$0x1]
  %v707 = vperm.slane %v705, 0
  %v710 = vsel %vm154, %v693, 0
  %v713 = vsel %vm154, %v694, 0
  %v716 = vsel %vm154, %v695, 0
  %v719 = vsel %vm154, %v696, 0
  %v722 = vsel %vm154, %v697, 0
  %v725 = vsel %vm154, %v698, 0
  %v728 = vsel %vm154, %v699, 0
  %v731 = vsel %vm154, %v700, 0
  %733 = vmatpush.msra.mxu0 0.0
  %734 = vmatpush.msra.mxu0 0.0
  %735 = vmatpush.msra.mxu0 0.0
  %736 = vmatpush.msra.mxu0 0.0
  %737 = vmatpush.msra.mxu0 0.0
  %738 = vmatpush.msra.mxu0 0.0
  %739 = vmatpush.msra.mxu0 0.0
  %740 = vmatpush.msra.mxu0 0.0
  %741 = vmatpush.msra.mxu0 0.0
  %742 = vmatpush.msra.mxu0 0.0
  %743 = vmatpush.msra.mxu0 0.0
  %744 = vmatpush.msra.mxu0 0.0
  %745 = vmatpush.msra.mxu0 %v704
  %746 = vmatpush.msra.mxu0 %v703
  %747 = vmatpush.msra.mxu0 %v702
  %748 = vmatpush.msra.mxu0 %v701
  %749 = vmatmul.f32.gmra.mxu0 %v710
  %v750 = vpop.f32.mrf.mxu0
  %v751 = vadd.f32 %v707, %v750
  %752 = vmatmul.f32.gmra.mxu0 %v713
  %v753 = vpop.f32.mrf.mxu0
  %v754 = vadd.f32 %v707, %v753
  %755 = vmatmul.f32.gmra.mxu0 %v716
  %v756 = vpop.f32.mrf.mxu0
  %v757 = vadd.f32 %v707, %v756
  %758 = vmatmul.f32.gmra.mxu0 %v719
  %v759 = vpop.f32.mrf.mxu0
  %v760 = vadd.f32 %v707, %v759
  %761 = vmatmul.f32.gmra.mxu0 %v722
  %v762 = vpop.f32.mrf.mxu0
  %v763 = vadd.f32 %v707, %v762
  %764 = vmatmul.f32.gmra.mxu0 %v725
  %v765 = vpop.f32.mrf.mxu0
  %v766 = vadd.f32 %v707, %v765
  %767 = vmatmul.f32.gmra.mxu0 %v728
  %v768 = vpop.f32.mrf.mxu0
  %v769 = vadd.f32 %v707, %v768
  %770 = vmatmul.f32.gmra.mxu0 %v731
  %v771 = vpop.f32.mrf.mxu0
  %v772 = vadd.f32 %v707, %v771
  %773 = vdwg.mxu0
  %774 = vst [vmem:[#allocation2] sm:$0xff] %v751
  %775 = vst [vmem:[#allocation2 + $0x8] sm:$0xff] %v754
  %776 = vst [vmem:[#allocation2 + $0x10] sm:$0xff] %v757
  %777 = vst [vmem:[#allocation2 + $0x18] sm:$0xff] %v760
  %778 = vst [vmem:[#allocation2 + $0x20] sm:$0xff] %v763
  %779 = vst [vmem:[#allocation2 + $0x28] sm:$0xff] %v766
  %780 = vst [vmem:[#allocation2 + $0x30] sm:$0xff] %v769
  %781 = vst [vmem:[#allocation2 + $0x38] sm:$0xff] %v772
  %s782 = scalar_lea.vmem %s1, 8
  %v783 = vld [vmem:[%s782] sm:$0xff]
  %s784 = scalar_lea.vmem %s2, 8
  %v785 = vld [vmem:[%s784] sm:$0xff]
  %v786 = vld [vmem:[%s7] sm:$0xff]
  %v787 = vld [vmem:[%s7 + $0x8] sm:$0xff]
  %v788 = vld [vmem:[%s7 + $0x10] sm:$0xff]
  %v789 = vld [vmem:[%s7 + $0x18] sm:$0xff]
  %v790 = vld [vmem:[#allocation2] sm:$0xff]
  %v792 = vsel %vm154, %v783, 0
  %794 = vmatpush.msra.mxu0 0.0
  %795 = vmatpush.msra.mxu0 0.0
  %796 = vmatpush.msra.mxu0 0.0
  %797 = vmatpush.msra.mxu0 0.0
  %798 = vmatpush.msra.mxu0 0.0
  %799 = vmatpush.msra.mxu0 0.0
  %800 = vmatpush.msra.mxu0 0.0
  %801 = vmatpush.msra.mxu0 0.0
  %802 = vmatpush.msra.mxu0 0.0
  %803 = vmatpush.msra.mxu0 0.0
  %804 = vmatpush.msra.mxu0 0.0
  %805 = vmatpush.msra.mxu0 0.0
  %806 = vmatpush.msra.mxu0 %v789
  %807 = vmatpush.msra.mxu0 %v788
  %808 = vmatpush.msra.mxu0 %v787
  %809 = vmatpush.msra.mxu0 %v786
  %810 = vmatmul.f32.gmra.mxu0 %v792
  %v811 = vpop.f32.mrf.mxu0
  %v812 = vadd.f32 0.0, %v811
  %813 = vdwg.mxu0
  %v814 = vadd.f32 %v790, %v812
  %v815 = vxor.u32 %v814, 2147483648
  %v816 = vmul.f32 %v815, 1.442695
  %v817 = vpow.pop %v816
  %v818 = vadd.f32 %v817, 1.0
  %v819 = vrcp.pop %v818
  %v820 = vmul.f32 %v818, %v819
  %v821 = vsub.f32 1.0, %v820
  %v822 = vmul.f32 %v819, %v821
  %v823 = vadd.f32 %v819, %v822
  %vm824 = vweird.f32 %v818
  %vm825 = vweird.f32 %v819
  %vm826 = vmor %vm824, %vm825
  %v827 = vsel %vm826, %v819, %v823
  %v828 = vand.u32 2147483647, %v818
  %vm829 = vcmp.eq.f32.partialorder %v828, 8.507059e+37
  %v830 = vand.u32 %v818, 2147483648
  %v831 = vor.u32 1.1754944e-38, %v830
  %v832 = vsel %vm829, %v831, %v827
  %v833 = vmul.f32 1.0, %v832
  %v834 = vtanh.pop %v814
  %836 = vrot.lane.b32.xlu0 %v785, 32
  %v837 = vpop.permute.xlu0 %836
  %v839 = vmul.f32 %v833, %v837
  %841 = vrot.lane.b32.xlu0 %v834, 64
  %v842 = vpop.permute.xlu0 %841
  %v844 = vmul.f32 %v833, %v842
  %846 = vrot.lane.b32.xlu0 %v844, 32
  %v847 = vpop.permute.xlu0 %846
  %v849 = vadd.f32 %v839, %v847
  %v850 = vtanh.pop %v849
  %852 = vrot.lane.b32.xlu0 %v850, 64
  %v853 = vpop.permute.xlu0 %852
  %v855 = vmul.f32 %v833, %v853
  %857 = vrot.lane.b32.xlu0 %v855, 32
  %v858 = vpop.permute.xlu0 %857
  %860 = vst.msk [vmem:[#allocation3] sm:$0xff] %vm154, %v858
  %v861 = vld [vmem:[#allocation2 + $0x8] sm:$0xff]
  %v862 = vsel %vm154, %v858, 0
  %864 = vmatpush.msra.mxu0 0.0
  %865 = vmatpush.msra.mxu0 0.0
  %866 = vmatpush.msra.mxu0 0.0
  %867 = vmatpush.msra.mxu0 0.0
  %868 = vmatpush.msra.mxu0 0.0
  %869 = vmatpush.msra.mxu0 0.0
  %870 = vmatpush.msra.mxu0 0.0
  %871 = vmatpush.msra.mxu0 0.0
  %872 = vmatpush.msra.mxu0 0.0
  %873 = vmatpush.msra.mxu0 0.0
  %874 = vmatpush.msra.mxu0 0.0
  %875 = vmatpush.msra.mxu0 0.0
  %876 = vmatpush.msra.mxu0 %v789
  %877 = vmatpush.msra.mxu0 %v788
  %878 = vmatpush.msra.mxu0 %v787
  %879 = vmatpush.msra.mxu0 %v786
  %880 = vmatmul.f32.gmra.mxu0 %v862
  %v881 = vpop.f32.mrf.mxu0
  %v882 = vadd.f32 0.0, %v881
  %883 = vdwg.mxu0
  %v884 = vadd.f32 %v861, %v882
  %v885 = vxor.u32 %v884, 2147483648
  %v886 = vmul.f32 %v885, 1.442695
  %v887 = vpow.pop %v886
  %v888 = vadd.f32 %v887, 1.0
  %v889 = vrcp.pop %v888
  %v890 = vmul.f32 %v888, %v889
  %v891 = vsub.f32 1.0, %v890
  %v892 = vmul.f32 %v889, %v891
  %v893 = vadd.f32 %v889, %v892
  %vm894 = vweird.f32 %v888
  %vm895 = vweird.f32 %v889
  %vm896 = vmor %vm894, %vm895
  %v897 = vsel %vm896, %v889, %v893
  %v898 = vand.u32 2147483647, %v888
  %vm899 = vcmp.eq.f32.partialorder %v898, 8.507059e+37
  %v900 = vand.u32 %v888, 2147483648
  %v901 = vor.u32 1.1754944e-38, %v900
  %v902 = vsel %vm899, %v901, %v897
  %v903 = vmul.f32 1.0, %v902
  %v904 = vtanh.pop %v884
  %v905 = vmul.f32 %v903, %v849
  %907 = vrot.lane.b32.xlu0 %v904, 64
  %v908 = vpop.permute.xlu0 %907
  %v910 = vmul.f32 %v903, %v908
  %912 = vrot.lane.b32.xlu0 %v910, 32
  %v913 = vpop.permute.xlu0 %912
  %v915 = vadd.f32 %v905, %v913
  %v916 = vtanh.pop %v915
  %918 = vrot.lane.b32.xlu0 %v916, 64
  %v919 = vpop.permute.xlu0 %918
  %v921 = vmul.f32 %v903, %v919
  %923 = vrot.lane.b32.xlu0 %v921, 32
  %v924 = vpop.permute.xlu0 %923
  %926 = vst.msk [vmem:[#allocation3 + $0x8] sm:$0xff] %vm154, %v924
  %v927 = vld [vmem:[#allocation2 + $0x10] sm:$0xff]
  %v928 = vsel %vm154, %v924, 0
  %930 = vmatpush.msra.mxu0 0.0
  %931 = vmatpush.msra.mxu0 0.0
  %932 = vmatpush.msra.mxu0 0.0
  %933 = vmatpush.msra.mxu0 0.0
  %934 = vmatpush.msra.mxu0 0.0
  %935 = vmatpush.msra.mxu0 0.0
  %936 = vmatpush.msra.mxu0 0.0
  %937 = vmatpush.msra.mxu0 0.0
  %938 = vmatpush.msra.mxu0 0.0
  %939 = vmatpush.msra.mxu0 0.0
  %940 = vmatpush.msra.mxu0 0.0
  %941 = vmatpush.msra.mxu0 0.0
  %942 = vmatpush.msra.mxu0 %v789
  %943 = vmatpush.msra.mxu0 %v788
  %944 = vmatpush.msra.mxu0 %v787
  %945 = vmatpush.msra.mxu0 %v786
  %946 = vmatmul.f32.gmra.mxu0 %v928
  %v947 = vpop.f32.mrf.mxu0
  %v948 = vadd.f32 0.0, %v947
  %949 = vdwg.mxu0
  %v950 = vadd.f32 %v927, %v948
  %v951 = vxor.u32 %v950, 2147483648
  %v952 = vmul.f32 %v951, 1.442695
  %v953 = vpow.pop %v952
  %v954 = vadd.f32 %v953, 1.0
  %v955 = vrcp.pop %v954
  %v956 = vmul.f32 %v954, %v955
  %v957 = vsub.f32 1.0, %v956
  %v958 = vmul.f32 %v955, %v957
  %v959 = vadd.f32 %v955, %v958
  %vm960 = vweird.f32 %v954
  %vm961 = vweird.f32 %v955
  %vm962 = vmor %vm960, %vm961
  %v963 = vsel %vm962, %v955, %v959
  %v964 = vand.u32 2147483647, %v954
  %vm965 = vcmp.eq.f32.partialorder %v964, 8.507059e+37
  %v966 = vand.u32 %v954, 2147483648
  %v967 = vor.u32 1.1754944e-38, %v966
  %v968 = vsel %vm965, %v967, %v963
  %v969 = vmul.f32 1.0, %v968
  %v970 = vtanh.pop %v950
  %v971 = vmul.f32 %v969, %v915
  %973 = vrot.lane.b32.xlu0 %v970, 64
  %v974 = vpop.permute.xlu0 %973
  %v976 = vmul.f32 %v969, %v974
  %978 = vrot.lane.b32.xlu0 %v976, 32
  %v979 = vpop.permute.xlu0 %978
  %v981 = vadd.f32 %v971, %v979
  %v982 = vtanh.pop %v981
  %984 = vrot.lane.b32.xlu0 %v982, 64
  %v985 = vpop.permute.xlu0 %984
  %v987 = vmul.f32 %v969, %v985
  %989 = vrot.lane.b32.xlu0 %v987, 32
  %v990 = vpop.permute.xlu0 %989
  %992 = vst.msk [vmem:[#allocation3 + $0x10] sm:$0xff] %vm154, %v990
  %v993 = vld [vmem:[#allocation2 + $0x18] sm:$0xff]
  %v994 = vsel %vm154, %v990, 0
  %996 = vmatpush.msra.mxu0 0.0
  %997 = vmatpush.msra.mxu0 0.0
  %998 = vmatpush.msra.mxu0 0.0
  %999 = vmatpush.msra.mxu0 0.0
  %1000 = vmatpush.msra.mxu0 0.0
  %1001 = vmatpush.msra.mxu0 0.0
  %1002 = vmatpush.msra.mxu0 0.0
  %1003 = vmatpush.msra.mxu0 0.0
  %1004 = vmatpush.msra.mxu0 0.0
  %1005 = vmatpush.msra.mxu0 0.0
  %1006 = vmatpush.msra.mxu0 0.0
  %1007 = vmatpush.msra.mxu0 0.0
  %1008 = vmatpush.msra.mxu0 %v789
  %1009 = vmatpush.msra.mxu0 %v788
  %1010 = vmatpush.msra.mxu0 %v787
  %1011 = vmatpush.msra.mxu0 %v786
  %1012 = vmatmul.f32.gmra.mxu0 %v994
  %v1013 = vpop.f32.mrf.mxu0
  %v1014 = vadd.f32 0.0, %v1013
  %1015 = vdwg.mxu0
  %v1016 = vadd.f32 %v993, %v1014
  %v1017 = vxor.u32 %v1016, 2147483648
  %v1018 = vmul.f32 %v1017, 1.442695
  %v1019 = vpow.pop %v1018
  %v1020 = vadd.f32 %v1019, 1.0
  %v1021 = vrcp.pop %v1020
  %v1022 = vmul.f32 %v1020, %v1021
  %v1023 = vsub.f32 1.0, %v1022
  %v1024 = vmul.f32 %v1021, %v1023
  %v1025 = vadd.f32 %v1021, %v1024
  %vm1026 = vweird.f32 %v1020
  %vm1027 = vweird.f32 %v1021
  %vm1028 = vmor %vm1026, %vm1027
  %v1029 = vsel %vm1028, %v1021, %v1025
  %v1030 = vand.u32 2147483647, %v1020
  %vm1031 = vcmp.eq.f32.partialorder %v1030, 8.507059e+37
  %v1032 = vand.u32 %v1020, 2147483648
  %v1033 = vor.u32 1.1754944e-38, %v1032
  %v1034 = vsel %vm1031, %v1033, %v1029
  %v1035 = vmul.f32 1.0, %v1034
  %v1036 = vtanh.pop %v1016
  %v1037 = vmul.f32 %v1035, %v981
  %1039 = vrot.lane.b32.xlu0 %v1036, 64
  %v1040 = vpop.permute.xlu0 %1039
  %v1042 = vmul.f32 %v1035, %v1040
  %1044 = vrot.lane.b32.xlu0 %v1042, 32
  %v1045 = vpop.permute.xlu0 %1044
  %v1047 = vadd.f32 %v1037, %v1045
  %v1048 = vtanh.pop %v1047
  %1050 = vrot.lane.b32.xlu0 %v1048, 64
  %v1051 = vpop.permute.xlu0 %1050
  %v1053 = vmul.f32 %v1035, %v1051
  %1055 = vrot.lane.b32.xlu0 %v1053, 32
  %v1056 = vpop.permute.xlu0 %1055
  %1058 = vst.msk [vmem:[#allocation3 + $0x18] sm:$0xff] %vm154, %v1056
  %v1059 = vld [vmem:[#allocation2 + $0x20] sm:$0xff]
  %v1060 = vsel %vm154, %v1056, 0
  %1062 = vmatpush.msra.mxu0 0.0
  %1063 = vmatpush.msra.mxu0 0.0
  %1064 = vmatpush.msra.mxu0 0.0
  %1065 = vmatpush.msra.mxu0 0.0
  %1066 = vmatpush.msra.mxu0 0.0
  %1067 = vmatpush.msra.mxu0 0.0
  %1068 = vmatpush.msra.mxu0 0.0
  %1069 = vmatpush.msra.mxu0 0.0
  %1070 = vmatpush.msra.mxu0 0.0
  %1071 = vmatpush.msra.mxu0 0.0
  %1072 = vmatpush.msra.mxu0 0.0
  %1073 = vmatpush.msra.mxu0 0.0
  %1074 = vmatpush.msra.mxu0 %v789
  %1075 = vmatpush.msra.mxu0 %v788
  %1076 = vmatpush.msra.mxu0 %v787
  %1077 = vmatpush.msra.mxu0 %v786
  %1078 = vmatmul.f32.gmra.mxu0 %v1060
  %v1079 = vpop.f32.mrf.mxu0
  %v1080 = vadd.f32 0.0, %v1079
  %1081 = vdwg.mxu0
  %v1082 = vadd.f32 %v1059, %v1080
  %v1083 = vxor.u32 %v1082, 2147483648
  %v1084 = vmul.f32 %v1083, 1.442695
  %v1085 = vpow.pop %v1084
  %v1086 = vadd.f32 %v1085, 1.0
  %v1087 = vrcp.pop %v1086
  %v1088 = vmul.f32 %v1086, %v1087
  %v1089 = vsub.f32 1.0, %v1088
  %v1090 = vmul.f32 %v1087, %v1089
  %v1091 = vadd.f32 %v1087, %v1090
  %vm1092 = vweird.f32 %v1086
  %vm1093 = vweird.f32 %v1087
  %vm1094 = vmor %vm1092, %vm1093
  %v1095 = vsel %vm1094, %v1087, %v1091
  %v1096 = vand.u32 2147483647, %v1086
  %vm1097 = vcmp.eq.f32.partialorder %v1096, 8.507059e+37
  %v1098 = vand.u32 %v1086, 2147483648
  %v1099 = vor.u32 1.1754944e-38, %v1098
  %v1100 = vsel %vm1097, %v1099, %v1095
  %v1101 = vmul.f32 1.0, %v1100
  %v1102 = vtanh.pop %v1082
  %v1103 = vmul.f32 %v1101, %v1047
  %1105 = vrot.lane.b32.xlu0 %v1102, 64
  %v1106 = vpop.permute.xlu0 %1105
  %v1108 = vmul.f32 %v1101, %v1106
  %1110 = vrot.lane.b32.xlu0 %v1108, 32
  %v1111 = vpop.permute.xlu0 %1110
  %v1113 = vadd.f32 %v1103, %v1111
  %v1114 = vtanh.pop %v1113
  %1116 = vrot.lane.b32.xlu0 %v1114, 64
  %v1117 = vpop.permute.xlu0 %1116
  %v1119 = vmul.f32 %v1101, %v1117
  %1121 = vrot.lane.b32.xlu0 %v1119, 32
  %v1122 = vpop.permute.xlu0 %1121
  %1124 = vst.msk [vmem:[#allocation3 + $0x20] sm:$0xff] %vm154, %v1122
  %v1125 = vld [vmem:[#allocation2 + $0x28] sm:$0xff]
  %v1126 = vsel %vm154, %v1122, 0
  %1128 = vmatpush.msra.mxu0 0.0
  %1129 = vmatpush.msra.mxu0 0.0
  %1130 = vmatpush.msra.mxu0 0.0
  %1131 = vmatpush.msra.mxu0 0.0
  %1132 = vmatpush.msra.mxu0 0.0
  %1133 = vmatpush.msra.mxu0 0.0
  %1134 = vmatpush.msra.mxu0 0.0
  %1135 = vmatpush.msra.mxu0 0.0
  %1136 = vmatpush.msra.mxu0 0.0
  %1137 = vmatpush.msra.mxu0 0.0
  %1138 = vmatpush.msra.mxu0 0.0
  %1139 = vmatpush.msra.mxu0 0.0
  %1140 = vmatpush.msra.mxu0 %v789
  %1141 = vmatpush.msra.mxu0 %v788
  %1142 = vmatpush.msra.mxu0 %v787
  %1143 = vmatpush.msra.mxu0 %v786
  %1144 = vmatmul.f32.gmra.mxu0 %v1126
  %v1145 = vpop.f32.mrf.mxu0
  %v1146 = vadd.f32 0.0, %v1145
  %1147 = vdwg.mxu0
  %v1148 = vadd.f32 %v1125, %v1146
  %v1149 = vxor.u32 %v1148, 2147483648
  %v1150 = vmul.f32 %v1149, 1.442695
  %v1151 = vpow.pop %v1150
  %v1152 = vadd.f32 %v1151, 1.0
  %v1153 = vrcp.pop %v1152
  %v1154 = vmul.f32 %v1152, %v1153
  %v1155 = vsub.f32 1.0, %v1154
  %v1156 = vmul.f32 %v1153, %v1155
  %v1157 = vadd.f32 %v1153, %v1156
  %vm1158 = vweird.f32 %v1152
  %vm1159 = vweird.f32 %v1153
  %vm1160 = vmor %vm1158, %vm1159
  %v1161 = vsel %vm1160, %v1153, %v1157
  %v1162 = vand.u32 2147483647, %v1152
  %vm1163 = vcmp.eq.f32.partialorder %v1162, 8.507059e+37
  %v1164 = vand.u32 %v1152, 2147483648
  %v1165 = vor.u32 1.1754944e-38, %v1164
  %v1166 = vsel %vm1163, %v1165, %v1161
  %v1167 = vmul.f32 1.0, %v1166
  %v1168 = vtanh.pop %v1148
  %v1169 = vmul.f32 %v1167, %v1113
  %1171 = vrot.lane.b32.xlu0 %v1168, 64
  %v1172 = vpop.permute.xlu0 %1171
  %v1174 = vmul.f32 %v1167, %v1172
  %1176 = vrot.lane.b32.xlu0 %v1174, 32
  %v1177 = vpop.permute.xlu0 %1176
  %v1179 = vadd.f32 %v1169, %v1177
  %v1180 = vtanh.pop %v1179
  %1182 = vrot.lane.b32.xlu0 %v1180, 64
  %v1183 = vpop.permute.xlu0 %1182
  %v1185 = vmul.f32 %v1167, %v1183
  %1187 = vrot.lane.b32.xlu0 %v1185, 32
  %v1188 = vpop.permute.xlu0 %1187
  %1190 = vst.msk [vmem:[#allocation3 + $0x28] sm:$0xff] %vm154, %v1188
  %v1191 = vld [vmem:[#allocation2 + $0x30] sm:$0xff]
  %v1192 = vsel %vm154, %v1188, 0
  %1194 = vmatpush.msra.mxu0 0.0
  %1195 = vmatpush.msra.mxu0 0.0
  %1196 = vmatpush.msra.mxu0 0.0
  %1197 = vmatpush.msra.mxu0 0.0
  %1198 = vmatpush.msra.mxu0 0.0
  %1199 = vmatpush.msra.mxu0 0.0
  %1200 = vmatpush.msra.mxu0 0.0
  %1201 = vmatpush.msra.mxu0 0.0
  %1202 = vmatpush.msra.mxu0 0.0
  %1203 = vmatpush.msra.mxu0 0.0
  %1204 = vmatpush.msra.mxu0 0.0
  %1205 = vmatpush.msra.mxu0 0.0
  %1206 = vmatpush.msra.mxu0 %v789
  %1207 = vmatpush.msra.mxu0 %v788
  %1208 = vmatpush.msra.mxu0 %v787
  %1209 = vmatpush.msra.mxu0 %v786
  %1210 = vmatmul.f32.gmra.mxu0 %v1192
  %v1211 = vpop.f32.mrf.mxu0
  %v1212 = vadd.f32 0.0, %v1211
  %1213 = vdwg.mxu0
  %v1214 = vadd.f32 %v1191, %v1212
  %v1215 = vxor.u32 %v1214, 2147483648
  %v1216 = vmul.f32 %v1215, 1.442695
  %v1217 = vpow.pop %v1216
  %v1218 = vadd.f32 %v1217, 1.0
  %v1219 = vrcp.pop %v1218
  %v1220 = vmul.f32 %v1218, %v1219
  %v1221 = vsub.f32 1.0, %v1220
  %v1222 = vmul.f32 %v1219, %v1221
  %v1223 = vadd.f32 %v1219, %v1222
  %vm1224 = vweird.f32 %v1218
  %vm1225 = vweird.f32 %v1219
  %vm1226 = vmor %vm1224, %vm1225
  %v1227 = vsel %vm1226, %v1219, %v1223
  %v1228 = vand.u32 2147483647, %v1218
  %vm1229 = vcmp.eq.f32.partialorder %v1228, 8.507059e+37
  %v1230 = vand.u32 %v1218, 2147483648
  %v1231 = vor.u32 1.1754944e-38, %v1230
  %v1232 = vsel %vm1229, %v1231, %v1227
  %v1233 = vmul.f32 1.0, %v1232
  %v1234 = vtanh.pop %v1214
  %v1235 = vmul.f32 %v1233, %v1179
  %1237 = vrot.lane.b32.xlu0 %v1234, 64
  %v1238 = vpop.permute.xlu0 %1237
  %v1240 = vmul.f32 %v1233, %v1238
  %1242 = vrot.lane.b32.xlu0 %v1240, 32
  %v1243 = vpop.permute.xlu0 %1242
  %v1245 = vadd.f32 %v1235, %v1243
  %v1246 = vtanh.pop %v1245
  %1248 = vrot.lane.b32.xlu0 %v1246, 64
  %v1249 = vpop.permute.xlu0 %1248
  %v1251 = vmul.f32 %v1233, %v1249
  %1253 = vrot.lane.b32.xlu0 %v1251, 32
  %v1254 = vpop.permute.xlu0 %1253
  %1256 = vst.msk [vmem:[#allocation3 + $0x30] sm:$0xff] %vm154, %v1254
  %v1257 = vld [vmem:[#allocation2 + $0x38] sm:$0xff]
  %v1258 = vsel %vm154, %v1254, 0
  %1260 = vmatpush.msra.mxu0 0.0
  %1261 = vmatpush.msra.mxu0 0.0
  %1262 = vmatpush.msra.mxu0 0.0
  %1263 = vmatpush.msra.mxu0 0.0
  %1264 = vmatpush.msra.mxu0 0.0
  %1265 = vmatpush.msra.mxu0 0.0
  %1266 = vmatpush.msra.mxu0 0.0
  %1267 = vmatpush.msra.mxu0 0.0
  %1268 = vmatpush.msra.mxu0 0.0
  %1269 = vmatpush.msra.mxu0 0.0
  %1270 = vmatpush.msra.mxu0 0.0
  %1271 = vmatpush.msra.mxu0 0.0
  %1272 = vmatpush.msra.mxu0 %v789
  %1273 = vmatpush.msra.mxu0 %v788
  %1274 = vmatpush.msra.mxu0 %v787
  %1275 = vmatpush.msra.mxu0 %v786
  %1276 = vmatmul.f32.gmra.mxu0 %v1258
  %v1277 = vpop.f32.mrf.mxu0
  %v1278 = vadd.f32 0.0, %v1277
  %1279 = vdwg.mxu0
  %v1280 = vadd.f32 %v1257, %v1278
  %v1281 = vxor.u32 %v1280, 2147483648
  %v1282 = vmul.f32 %v1281, 1.442695
  %v1283 = vpow.pop %v1282
  %v1284 = vadd.f32 %v1283, 1.0
  %v1285 = vrcp.pop %v1284
  %v1286 = vmul.f32 %v1284, %v1285
  %v1287 = vsub.f32 1.0, %v1286
  %v1288 = vmul.f32 %v1285, %v1287
  %v1289 = vadd.f32 %v1285, %v1288
  %vm1290 = vweird.f32 %v1284
  %vm1291 = vweird.f32 %v1285
  %vm1292 = vmor %vm1290, %vm1291
  %v1293 = vsel %vm1292, %v1285, %v1289
  %v1294 = vand.u32 2147483647, %v1284
  %vm1295 = vcmp.eq.f32.partialorder %v1294, 8.507059e+37
  %v1296 = vand.u32 %v1284, 2147483648
  %v1297 = vor.u32 1.1754944e-38, %v1296
  %v1298 = vsel %vm1295, %v1297, %v1293
  %v1299 = vmul.f32 1.0, %v1298
  %v1300 = vtanh.pop %v1280
  %v1301 = vmul.f32 %v1299, %v1245
  %1303 = vrot.lane.b32.xlu0 %v1300, 64
  %v1304 = vpop.permute.xlu0 %1303
  %v1306 = vmul.f32 %v1299, %v1304
  %1308 = vrot.lane.b32.xlu0 %v1306, 32
  %v1309 = vpop.permute.xlu0 %1308
  %v1311 = vadd.f32 %v1301, %v1309
  %v1312 = vtanh.pop %v1311
  %1314 = vrot.lane.b32.xlu0 %v1312, 64
  %v1315 = vpop.permute.xlu0 %1314
  %v1317 = vmul.f32 %v1299, %v1315
  %1319 = vrot.lane.b32.xlu0 %v1317, 32
  %v1320 = vpop.permute.xlu0 %1319
  %1322 = vst.msk [vmem:[#allocation3 + $0x38] sm:$0xff] %vm154, %v1320
  %s1323 = scalar_lea.vmem %s18, 8
  %1324 = vst.msk [vmem:[%s1323] sm:$0xff] %vm154, %v1320
  %1326 = vrot.lane.b32.xlu0 %v1311, 96
  %v1327 = vpop.permute.xlu0 %1326
  %s1329 = scalar_lea.vmem %s19, 8
  %1330 = vst.msk [vmem:[%s1329] sm:$0xff] %vm154, %v1327
  %v1331 = vld [vmem:[#allocation3] sm:$0xff]
  %v1332 = vld [vmem:[#allocation3 + $0x8] sm:$0xff]
  %v1333 = vld [vmem:[#allocation3 + $0x10] sm:$0xff]
  %v1334 = vld [vmem:[#allocation3 + $0x18] sm:$0xff]
  %v1335 = vld [vmem:[#allocation3 + $0x20] sm:$0xff]
  %v1336 = vld [vmem:[#allocation3 + $0x28] sm:$0xff]
  %v1337 = vld [vmem:[#allocation3 + $0x30] sm:$0xff]
  %v1338 = vld [vmem:[#allocation3 + $0x38] sm:$0xff]
  %v1339 = vld [vmem:[%s9] sm:$0xff]
  %v1340 = vld [vmem:[%s9 + $0x8] sm:$0xff]
  %v1341 = vld [vmem:[%s9 + $0x10] sm:$0xff]
  %v1342 = vld [vmem:[%s9 + $0x18] sm:$0xff]
  %v1343 = vld [vmem:[%s11] sm:$0x1]
  %v1345 = vperm.slane %v1343, 0
  %v1348 = vsel %vm154, %v1331, 0
  %v1351 = vsel %vm154, %v1332, 0
  %v1354 = vsel %vm154, %v1333, 0
  %v1357 = vsel %vm154, %v1334, 0
  %v1360 = vsel %vm154, %v1335, 0
  %v1363 = vsel %vm154, %v1336, 0
  %v1366 = vsel %vm154, %v1337, 0
  %v1369 = vsel %vm154, %v1338, 0
  %1371 = vmatpush.msra.mxu0 0.0
  %1372 = vmatpush.msra.mxu0 0.0
  %1373 = vmatpush.msra.mxu0 0.0
  %1374 = vmatpush.msra.mxu0 0.0
  %1375 = vmatpush.msra.mxu0 0.0
  %1376 = vmatpush.msra.mxu0 0.0
  %1377 = vmatpush.msra.mxu0 0.0
  %1378 = vmatpush.msra.mxu0 0.0
  %1379 = vmatpush.msra.mxu0 0.0
  %1380 = vmatpush.msra.mxu0 0.0
  %1381 = vmatpush.msra.mxu0 0.0
  %1382 = vmatpush.msra.mxu0 0.0
  %1383 = vmatpush.msra.mxu0 %v1342
  %1384 = vmatpush.msra.mxu0 %v1341
  %1385 = vmatpush.msra.mxu0 %v1340
  %1386 = vmatpush.msra.mxu0 %v1339
  %1387 = vmatmul.f32.gmra.mxu0 %v1348
  %v1388 = vpop.f32.mrf.mxu0
  %v1389 = vadd.f32 %v1345, %v1388
  %1390 = vmatmul.f32.gmra.mxu0 %v1351
  %v1391 = vpop.f32.mrf.mxu0
  %v1392 = vadd.f32 %v1345, %v1391
  %1393 = vmatmul.f32.gmra.mxu0 %v1354
  %v1394 = vpop.f32.mrf.mxu0
  %v1395 = vadd.f32 %v1345, %v1394
  %1396 = vmatmul.f32.gmra.mxu0 %v1357
  %v1397 = vpop.f32.mrf.mxu0
  %v1398 = vadd.f32 %v1345, %v1397
  %1399 = vmatmul.f32.gmra.mxu0 %v1360
  %v1400 = vpop.f32.mrf.mxu0
  %v1401 = vadd.f32 %v1345, %v1400
  %1402 = vmatmul.f32.gmra.mxu0 %v1363
  %v1403 = vpop.f32.mrf.mxu0
  %v1404 = vadd.f32 %v1345, %v1403
  %1405 = vmatmul.f32.gmra.mxu0 %v1366
  %v1406 = vpop.f32.mrf.mxu0
  %v1407 = vadd.f32 %v1345, %v1406
  %1408 = vmatmul.f32.gmra.mxu0 %v1369
  %v1409 = vpop.f32.mrf.mxu0
  %v1410 = vadd.f32 %v1345, %v1409
  %1411 = vdwg.mxu0
  %1412 = vst [vmem:[#allocation2] sm:$0xff] %v1389
  %1413 = vst [vmem:[#allocation2 + $0x8] sm:$0xff] %v1392
  %1414 = vst [vmem:[#allocation2 + $0x10] sm:$0xff] %v1395
  %1415 = vst [vmem:[#allocation2 + $0x18] sm:$0xff] %v1398
  %1416 = vst [vmem:[#allocation2 + $0x20] sm:$0xff] %v1401
  %1417 = vst [vmem:[#allocation2 + $0x28] sm:$0xff] %v1404
  %1418 = vst [vmem:[#allocation2 + $0x30] sm:$0xff] %v1407
  %1419 = vst [vmem:[#allocation2 + $0x38] sm:$0xff] %v1410
  %s1420 = scalar_lea.vmem %s1, 16
  %v1421 = vld [vmem:[%s1420] sm:$0xff]
  %s1422 = scalar_lea.vmem %s2, 16
  %v1423 = vld [vmem:[%s1422] sm:$0xff]
  %v1424 = vld [vmem:[%s10] sm:$0xff]
  %v1425 = vld [vmem:[%s10 + $0x8] sm:$0xff]
  %v1426 = vld [vmem:[%s10 + $0x10] sm:$0xff]
  %v1427 = vld [vmem:[%s10 + $0x18] sm:$0xff]
  %v1428 = vld [vmem:[#allocation2] sm:$0xff]
  %v1430 = vsel %vm154, %v1421, 0
  %1432 = vmatpush.msra.mxu0 0.0
  %1433 = vmatpush.msra.mxu0 0.0
  %1434 = vmatpush.msra.mxu0 0.0
  %1435 = vmatpush.msra.mxu0 0.0
  %1436 = vmatpush.msra.mxu0 0.0
  %1437 = vmatpush.msra.mxu0 0.0
  %1438 = vmatpush.msra.mxu0 0.0
  %1439 = vmatpush.msra.mxu0 0.0
  %1440 = vmatpush.msra.mxu0 0.0
  %1441 = vmatpush.msra.mxu0 0.0
  %1442 = vmatpush.msra.mxu0 0.0
  %1443 = vmatpush.msra.mxu0 0.0
  %1444 = vmatpush.msra.mxu0 %v1427
  %1445 = vmatpush.msra.mxu0 %v1426
  %1446 = vmatpush.msra.mxu0 %v1425
  %1447 = vmatpush.msra.mxu0 %v1424
  %1448 = vmatmul.f32.gmra.mxu0 %v1430
  %v1449 = vpop.f32.mrf.mxu0
  %v1450 = vadd.f32 0.0, %v1449
  %1451 = vdwg.mxu0
  %v1452 = vadd.f32 %v1428, %v1450
  %v1453 = vxor.u32 %v1452, 2147483648
  %v1454 = vmul.f32 %v1453, 1.442695
  %v1455 = vpow.pop %v1454
  %v1456 = vadd.f32 %v1455, 1.0
  %v1457 = vrcp.pop %v1456
  %v1458 = vmul.f32 %v1456, %v1457
  %v1459 = vsub.f32 1.0, %v1458
  %v1460 = vmul.f32 %v1457, %v1459
  %v1461 = vadd.f32 %v1457, %v1460
  %vm1462 = vweird.f32 %v1456
  %vm1463 = vweird.f32 %v1457
  %vm1464 = vmor %vm1462, %vm1463
  %v1465 = vsel %vm1464, %v1457, %v1461
  %v1466 = vand.u32 2147483647, %v1456
  %vm1467 = vcmp.eq.f32.partialorder %v1466, 8.507059e+37
  %v1468 = vand.u32 %v1456, 2147483648
  %v1469 = vor.u32 1.1754944e-38, %v1468
  %v1470 = vsel %vm1467, %v1469, %v1465
  %v1471 = vmul.f32 1.0, %v1470
  %v1472 = vtanh.pop %v1452
  %1474 = vrot.lane.b32.xlu0 %v1423, 32
  %v1475 = vpop.permute.xlu0 %1474
  %v1477 = vmul.f32 %v1471, %v1475
  %1479 = vrot.lane.b32.xlu0 %v1472, 64
  %v1480 = vpop.permute.xlu0 %1479
  %v1482 = vmul.f32 %v1471, %v1480
  %1484 = vrot.lane.b32.xlu0 %v1482, 32
  %v1485 = vpop.permute.xlu0 %1484
  %v1487 = vadd.f32 %v1477, %v1485
  %v1488 = vtanh.pop %v1487
  %1490 = vrot.lane.b32.xlu0 %v1488, 64
  %v1491 = vpop.permute.xlu0 %1490
  %v1493 = vmul.f32 %v1471, %v1491
  %1495 = vrot.lane.b32.xlu0 %v1493, 32
  %v1496 = vpop.permute.xlu0 %1495
  %1498 = vst.msk [vmem:[#allocation3] sm:$0xff] %vm154, %v1496
  %v1499 = vld [vmem:[#allocation2 + $0x8] sm:$0xff]
  %v1500 = vsel %vm154, %v1496, 0
  %1502 = vmatpush.msra.mxu0 0.0
  %1503 = vmatpush.msra.mxu0 0.0
  %1504 = vmatpush.msra.mxu0 0.0
  %1505 = vmatpush.msra.mxu0 0.0
  %1506 = vmatpush.msra.mxu0 0.0
  %1507 = vmatpush.msra.mxu0 0.0
  %1508 = vmatpush.msra.mxu0 0.0
  %1509 = vmatpush.msra.mxu0 0.0
  %1510 = vmatpush.msra.mxu0 0.0
  %1511 = vmatpush.msra.mxu0 0.0
  %1512 = vmatpush.msra.mxu0 0.0
  %1513 = vmatpush.msra.mxu0 0.0
  %1514 = vmatpush.msra.mxu0 %v1427
  %1515 = vmatpush.msra.mxu0 %v1426
  %1516 = vmatpush.msra.mxu0 %v1425
  %1517 = vmatpush.msra.mxu0 %v1424
  %1518 = vmatmul.f32.gmra.mxu0 %v1500
  %v1519 = vpop.f32.mrf.mxu0
  %v1520 = vadd.f32 0.0, %v1519
  %1521 = vdwg.mxu0
  %v1522 = vadd.f32 %v1499, %v1520
  %v1523 = vxor.u32 %v1522, 2147483648
  %v1524 = vmul.f32 %v1523, 1.442695
  %v1525 = vpow.pop %v1524
  %v1526 = vadd.f32 %v1525, 1.0
  %v1527 = vrcp.pop %v1526
  %v1528 = vmul.f32 %v1526, %v1527
  %v1529 = vsub.f32 1.0, %v1528
  %v1530 = vmul.f32 %v1527, %v1529
  %v1531 = vadd.f32 %v1527, %v1530
  %vm1532 = vweird.f32 %v1526
  %vm1533 = vweird.f32 %v1527
  %vm1534 = vmor %vm1532, %vm1533
  %v1535 = vsel %vm1534, %v1527, %v1531
  %v1536 = vand.u32 2147483647, %v1526
  %vm1537 = vcmp.eq.f32.partialorder %v1536, 8.507059e+37
  %v1538 = vand.u32 %v1526, 2147483648
  %v1539 = vor.u32 1.1754944e-38, %v1538
  %v1540 = vsel %vm1537, %v1539, %v1535
  %v1541 = vmul.f32 1.0, %v1540
  %v1542 = vtanh.pop %v1522
  %v1543 = vmul.f32 %v1541, %v1487
  %1545 = vrot.lane.b32.xlu0 %v1542, 64
  %v1546 = vpop.permute.xlu0 %1545
  %v1548 = vmul.f32 %v1541, %v1546
  %1550 = vrot.lane.b32.xlu0 %v1548, 32
  %v1551 = vpop.permute.xlu0 %1550
  %v1553 = vadd.f32 %v1543, %v1551
  %v1554 = vtanh.pop %v1553
  %1556 = vrot.lane.b32.xlu0 %v1554, 64
  %v1557 = vpop.permute.xlu0 %1556
  %v1559 = vmul.f32 %v1541, %v1557
  %1561 = vrot.lane.b32.xlu0 %v1559, 32
  %v1562 = vpop.permute.xlu0 %1561
  %1564 = vst.msk [vmem:[#allocation3 + $0x8] sm:$0xff] %vm154, %v1562
  %v1565 = vld [vmem:[#allocation2 + $0x10] sm:$0xff]
  %v1566 = vsel %vm154, %v1562, 0
  %1568 = vmatpush.msra.mxu0 0.0
  %1569 = vmatpush.msra.mxu0 0.0
  %1570 = vmatpush.msra.mxu0 0.0
  %1571 = vmatpush.msra.mxu0 0.0
  %1572 = vmatpush.msra.mxu0 0.0
  %1573 = vmatpush.msra.mxu0 0.0
  %1574 = vmatpush.msra.mxu0 0.0
  %1575 = vmatpush.msra.mxu0 0.0
  %1576 = vmatpush.msra.mxu0 0.0
  %1577 = vmatpush.msra.mxu0 0.0
  %1578 = vmatpush.msra.mxu0 0.0
  %1579 = vmatpush.msra.mxu0 0.0
  %1580 = vmatpush.msra.mxu0 %v1427
  %1581 = vmatpush.msra.mxu0 %v1426
  %1582 = vmatpush.msra.mxu0 %v1425
  %1583 = vmatpush.msra.mxu0 %v1424
  %1584 = vmatmul.f32.gmra.mxu0 %v1566
  %v1585 = vpop.f32.mrf.mxu0
  %v1586 = vadd.f32 0.0, %v1585
  %1587 = vdwg.mxu0
  %v1588 = vadd.f32 %v1565, %v1586
  %v1589 = vxor.u32 %v1588, 2147483648
  %v1590 = vmul.f32 %v1589, 1.442695
  %v1591 = vpow.pop %v1590
  %v1592 = vadd.f32 %v1591, 1.0
  %v1593 = vrcp.pop %v1592
  %v1594 = vmul.f32 %v1592, %v1593
  %v1595 = vsub.f32 1.0, %v1594
  %v1596 = vmul.f32 %v1593, %v1595
  %v1597 = vadd.f32 %v1593, %v1596
  %vm1598 = vweird.f32 %v1592
  %vm1599 = vweird.f32 %v1593
  %vm1600 = vmor %vm1598, %vm1599
  %v1601 = vsel %vm1600, %v1593, %v1597
  %v1602 = vand.u32 2147483647, %v1592
  %vm1603 = vcmp.eq.f32.partialorder %v1602, 8.507059e+37
  %v1604 = vand.u32 %v1592, 2147483648
  %v1605 = vor.u32 1.1754944e-38, %v1604
  %v1606 = vsel %vm1603, %v1605, %v1601
  %v1607 = vmul.f32 1.0, %v1606
  %v1608 = vtanh.pop %v1588
  %v1609 = vmul.f32 %v1607, %v1553
  %1611 = vrot.lane.b32.xlu0 %v1608, 64
  %v1612 = vpop.permute.xlu0 %1611
  %v1614 = vmul.f32 %v1607, %v1612
  %1616 = vrot.lane.b32.xlu0 %v1614, 32
  %v1617 = vpop.permute.xlu0 %1616
  %v1619 = vadd.f32 %v1609, %v1617
  %v1620 = vtanh.pop %v1619
  %1622 = vrot.lane.b32.xlu0 %v1620, 64
  %v1623 = vpop.permute.xlu0 %1622
  %v1625 = vmul.f32 %v1607, %v1623
  %1627 = vrot.lane.b32.xlu0 %v1625, 32
  %v1628 = vpop.permute.xlu0 %1627
  %1630 = vst.msk [vmem:[#allocation3 + $0x10] sm:$0xff] %vm154, %v1628
  %v1631 = vld [vmem:[#allocation2 + $0x18] sm:$0xff]
  %v1632 = vsel %vm154, %v1628, 0
  %1634 = vmatpush.msra.mxu0 0.0
  %1635 = vmatpush.msra.mxu0 0.0
  %1636 = vmatpush.msra.mxu0 0.0
  %1637 = vmatpush.msra.mxu0 0.0
  %1638 = vmatpush.msra.mxu0 0.0
  %1639 = vmatpush.msra.mxu0 0.0
  %1640 = vmatpush.msra.mxu0 0.0
  %1641 = vmatpush.msra.mxu0 0.0
  %1642 = vmatpush.msra.mxu0 0.0
  %1643 = vmatpush.msra.mxu0 0.0
  %1644 = vmatpush.msra.mxu0 0.0
  %1645 = vmatpush.msra.mxu0 0.0
  %1646 = vmatpush.msra.mxu0 %v1427
  %1647 = vmatpush.msra.mxu0 %v1426
  %1648 = vmatpush.msra.mxu0 %v1425
  %1649 = vmatpush.msra.mxu0 %v1424
  %1650 = vmatmul.f32.gmra.mxu0 %v1632
  %v1651 = vpop.f32.mrf.mxu0
  %v1652 = vadd.f32 0.0, %v1651
  %1653 = vdwg.mxu0
  %v1654 = vadd.f32 %v1631, %v1652
  %v1655 = vxor.u32 %v1654, 2147483648
  %v1656 = vmul.f32 %v1655, 1.442695
  %v1657 = vpow.pop %v1656
  %v1658 = vadd.f32 %v1657, 1.0
  %v1659 = vrcp.pop %v1658
  %v1660 = vmul.f32 %v1658, %v1659
  %v1661 = vsub.f32 1.0, %v1660
  %v1662 = vmul.f32 %v1659, %v1661
  %v1663 = vadd.f32 %v1659, %v1662
  %vm1664 = vweird.f32 %v1658
  %vm1665 = vweird.f32 %v1659
  %vm1666 = vmor %vm1664, %vm1665
  %v1667 = vsel %vm1666, %v1659, %v1663
  %v1668 = vand.u32 2147483647, %v1658
  %vm1669 = vcmp.eq.f32.partialorder %v1668, 8.507059e+37
  %v1670 = vand.u32 %v1658, 2147483648
  %v1671 = vor.u32 1.1754944e-38, %v1670
  %v1672 = vsel %vm1669, %v1671, %v1667
  %v1673 = vmul.f32 1.0, %v1672
  %v1674 = vtanh.pop %v1654
  %v1675 = vmul.f32 %v1673, %v1619
  %1677 = vrot.lane.b32.xlu0 %v1674, 64
  %v1678 = vpop.permute.xlu0 %1677
  %v1680 = vmul.f32 %v1673, %v1678
  %1682 = vrot.lane.b32.xlu0 %v1680, 32
  %v1683 = vpop.permute.xlu0 %1682
  %v1685 = vadd.f32 %v1675, %v1683
  %v1686 = vtanh.pop %v1685
  %1688 = vrot.lane.b32.xlu0 %v1686, 64
  %v1689 = vpop.permute.xlu0 %1688
  %v1691 = vmul.f32 %v1673, %v1689
  %1693 = vrot.lane.b32.xlu0 %v1691, 32
  %v1694 = vpop.permute.xlu0 %1693
  %1696 = vst.msk [vmem:[#allocation3 + $0x18] sm:$0xff] %vm154, %v1694
  %v1697 = vld [vmem:[#allocation2 + $0x20] sm:$0xff]
  %v1698 = vsel %vm154, %v1694, 0
  %1700 = vmatpush.msra.mxu0 0.0
  %1701 = vmatpush.msra.mxu0 0.0
  %1702 = vmatpush.msra.mxu0 0.0
  %1703 = vmatpush.msra.mxu0 0.0
  %1704 = vmatpush.msra.mxu0 0.0
  %1705 = vmatpush.msra.mxu0 0.0
  %1706 = vmatpush.msra.mxu0 0.0
  %1707 = vmatpush.msra.mxu0 0.0
  %1708 = vmatpush.msra.mxu0 0.0
  %1709 = vmatpush.msra.mxu0 0.0
  %1710 = vmatpush.msra.mxu0 0.0
  %1711 = vmatpush.msra.mxu0 0.0
  %1712 = vmatpush.msra.mxu0 %v1427
  %1713 = vmatpush.msra.mxu0 %v1426
  %1714 = vmatpush.msra.mxu0 %v1425
  %1715 = vmatpush.msra.mxu0 %v1424
  %1716 = vmatmul.f32.gmra.mxu0 %v1698
  %v1717 = vpop.f32.mrf.mxu0
  %v1718 = vadd.f32 0.0, %v1717
  %1719 = vdwg.mxu0
  %v1720 = vadd.f32 %v1697, %v1718
  %v1721 = vxor.u32 %v1720, 2147483648
  %v1722 = vmul.f32 %v1721, 1.442695
  %v1723 = vpow.pop %v1722
  %v1724 = vadd.f32 %v1723, 1.0
  %v1725 = vrcp.pop %v1724
  %v1726 = vmul.f32 %v1724, %v1725
  %v1727 = vsub.f32 1.0, %v1726
  %v1728 = vmul.f32 %v1725, %v1727
  %v1729 = vadd.f32 %v1725, %v1728
  %vm1730 = vweird.f32 %v1724
  %vm1731 = vweird.f32 %v1725
  %vm1732 = vmor %vm1730, %vm1731
  %v1733 = vsel %vm1732, %v1725, %v1729
  %v1734 = vand.u32 2147483647, %v1724
  %vm1735 = vcmp.eq.f32.partialorder %v1734, 8.507059e+37
  %v1736 = vand.u32 %v1724, 2147483648
  %v1737 = vor.u32 1.1754944e-38, %v1736
  %v1738 = vsel %vm1735, %v1737, %v1733
  %v1739 = vmul.f32 1.0, %v1738
  %v1740 = vtanh.pop %v1720
  %v1741 = vmul.f32 %v1739, %v1685
  %1743 = vrot.lane.b32.xlu0 %v1740, 64
  %v1744 = vpop.permute.xlu0 %1743
  %v1746 = vmul.f32 %v1739, %v1744
  %1748 = vrot.lane.b32.xlu0 %v1746, 32
  %v1749 = vpop.permute.xlu0 %1748
  %v1751 = vadd.f32 %v1741, %v1749
  %v1752 = vtanh.pop %v1751
  %1754 = vrot.lane.b32.xlu0 %v1752, 64
  %v1755 = vpop.permute.xlu0 %1754
  %v1757 = vmul.f32 %v1739, %v1755
  %1759 = vrot.lane.b32.xlu0 %v1757, 32
  %v1760 = vpop.permute.xlu0 %1759
  %1762 = vst.msk [vmem:[#allocation3 + $0x20] sm:$0xff] %vm154, %v1760
  %v1763 = vld [vmem:[#allocation2 + $0x28] sm:$0xff]
  %v1764 = vsel %vm154, %v1760, 0
  %1766 = vmatpush.msra.mxu0 0.0
  %1767 = vmatpush.msra.mxu0 0.0
  %1768 = vmatpush.msra.mxu0 0.0
  %1769 = vmatpush.msra.mxu0 0.0
  %1770 = vmatpush.msra.mxu0 0.0
  %1771 = vmatpush.msra.mxu0 0.0
  %1772 = vmatpush.msra.mxu0 0.0
  %1773 = vmatpush.msra.mxu0 0.0
  %1774 = vmatpush.msra.mxu0 0.0
  %1775 = vmatpush.msra.mxu0 0.0
  %1776 = vmatpush.msra.mxu0 0.0
  %1777 = vmatpush.msra.mxu0 0.0
  %1778 = vmatpush.msra.mxu0 %v1427
  %1779 = vmatpush.msra.mxu0 %v1426
  %1780 = vmatpush.msra.mxu0 %v1425
  %1781 = vmatpush.msra.mxu0 %v1424
  %1782 = vmatmul.f32.gmra.mxu0 %v1764
  %v1783 = vpop.f32.mrf.mxu0
  %v1784 = vadd.f32 0.0, %v1783
  %1785 = vdwg.mxu0
  %v1786 = vadd.f32 %v1763, %v1784
  %v1787 = vxor.u32 %v1786, 2147483648
  %v1788 = vmul.f32 %v1787, 1.442695
  %v1789 = vpow.pop %v1788
  %v1790 = vadd.f32 %v1789, 1.0
  %v1791 = vrcp.pop %v1790
  %v1792 = vmul.f32 %v1790, %v1791
  %v1793 = vsub.f32 1.0, %v1792
  %v1794 = vmul.f32 %v1791, %v1793
  %v1795 = vadd.f32 %v1791, %v1794
  %vm1796 = vweird.f32 %v1790
  %vm1797 = vweird.f32 %v1791
  %vm1798 = vmor %vm1796, %vm1797
  %v1799 = vsel %vm1798, %v1791, %v1795
  %v1800 = vand.u32 2147483647, %v1790
  %vm1801 = vcmp.eq.f32.partialorder %v1800, 8.507059e+37
  %v1802 = vand.u32 %v1790, 2147483648
  %v1803 = vor.u32 1.1754944e-38, %v1802
  %v1804 = vsel %vm1801, %v1803, %v1799
  %v1805 = vmul.f32 1.0, %v1804
  %v1806 = vtanh.pop %v1786
  %v1807 = vmul.f32 %v1805, %v1751
  %1809 = vrot.lane.b32.xlu0 %v1806, 64
  %v1810 = vpop.permute.xlu0 %1809
  %v1812 = vmul.f32 %v1805, %v1810
  %1814 = vrot.lane.b32.xlu0 %v1812, 32
  %v1815 = vpop.permute.xlu0 %1814
  %v1817 = vadd.f32 %v1807, %v1815
  %v1818 = vtanh.pop %v1817
  %1820 = vrot.lane.b32.xlu0 %v1818, 64
  %v1821 = vpop.permute.xlu0 %1820
  %v1823 = vmul.f32 %v1805, %v1821
  %1825 = vrot.lane.b32.xlu0 %v1823, 32
  %v1826 = vpop.permute.xlu0 %1825
  %1828 = vst.msk [vmem:[#allocation3 + $0x28] sm:$0xff] %vm154, %v1826
  %v1829 = vld [vmem:[#allocation2 + $0x30] sm:$0xff]
  %v1830 = vsel %vm154, %v1826, 0
  %1832 = vmatpush.msra.mxu0 0.0
  %1833 = vmatpush.msra.mxu0 0.0
  %1834 = vmatpush.msra.mxu0 0.0
  %1835 = vmatpush.msra.mxu0 0.0
  %1836 = vmatpush.msra.mxu0 0.0
  %1837 = vmatpush.msra.mxu0 0.0
  %1838 = vmatpush.msra.mxu0 0.0
  %1839 = vmatpush.msra.mxu0 0.0
  %1840 = vmatpush.msra.mxu0 0.0
  %1841 = vmatpush.msra.mxu0 0.0
  %1842 = vmatpush.msra.mxu0 0.0
  %1843 = vmatpush.msra.mxu0 0.0
  %1844 = vmatpush.msra.mxu0 %v1427
  %1845 = vmatpush.msra.mxu0 %v1426
  %1846 = vmatpush.msra.mxu0 %v1425
  %1847 = vmatpush.msra.mxu0 %v1424
  %1848 = vmatmul.f32.gmra.mxu0 %v1830
  %v1849 = vpop.f32.mrf.mxu0
  %v1850 = vadd.f32 0.0, %v1849
  %1851 = vdwg.mxu0
  %v1852 = vadd.f32 %v1829, %v1850
  %v1853 = vxor.u32 %v1852, 2147483648
  %v1854 = vmul.f32 %v1853, 1.442695
  %v1855 = vpow.pop %v1854
  %v1856 = vadd.f32 %v1855, 1.0
  %v1857 = vrcp.pop %v1856
  %v1858 = vmul.f32 %v1856, %v1857
  %v1859 = vsub.f32 1.0, %v1858
  %v1860 = vmul.f32 %v1857, %v1859
  %v1861 = vadd.f32 %v1857, %v1860
  %vm1862 = vweird.f32 %v1856
  %vm1863 = vweird.f32 %v1857
  %vm1864 = vmor %vm1862, %vm1863
  %v1865 = vsel %vm1864, %v1857, %v1861
  %v1866 = vand.u32 2147483647, %v1856
  %vm1867 = vcmp.eq.f32.partialorder %v1866, 8.507059e+37
  %v1868 = vand.u32 %v1856, 2147483648
  %v1869 = vor.u32 1.1754944e-38, %v1868
  %v1870 = vsel %vm1867, %v1869, %v1865
  %v1871 = vmul.f32 1.0, %v1870
  %v1872 = vtanh.pop %v1852
  %v1873 = vmul.f32 %v1871, %v1817
  %1875 = vrot.lane.b32.xlu0 %v1872, 64
  %v1876 = vpop.permute.xlu0 %1875
  %v1878 = vmul.f32 %v1871, %v1876
  %1880 = vrot.lane.b32.xlu0 %v1878, 32
  %v1881 = vpop.permute.xlu0 %1880
  %v1883 = vadd.f32 %v1873, %v1881
  %v1884 = vtanh.pop %v1883
  %1886 = vrot.lane.b32.xlu0 %v1884, 64
  %v1887 = vpop.permute.xlu0 %1886
  %v1889 = vmul.f32 %v1871, %v1887
  %1891 = vrot.lane.b32.xlu0 %v1889, 32
  %v1892 = vpop.permute.xlu0 %1891
  %1894 = vst.msk [vmem:[#allocation3 + $0x30] sm:$0xff] %vm154, %v1892
  %v1895 = vld [vmem:[#allocation2 + $0x38] sm:$0xff]
  %v1896 = vsel %vm154, %v1892, 0
  %1898 = vmatpush.msra.mxu0 0.0
  %1899 = vmatpush.msra.mxu0 0.0
  %1900 = vmatpush.msra.mxu0 0.0
  %1901 = vmatpush.msra.mxu0 0.0
  %1902 = vmatpush.msra.mxu0 0.0
  %1903 = vmatpush.msra.mxu0 0.0
  %1904 = vmatpush.msra.mxu0 0.0
  %1905 = vmatpush.msra.mxu0 0.0
  %1906 = vmatpush.msra.mxu0 0.0
  %1907 = vmatpush.msra.mxu0 0.0
  %1908 = vmatpush.msra.mxu0 0.0
  %1909 = vmatpush.msra.mxu0 0.0
  %1910 = vmatpush.msra.mxu0 %v1427
  %1911 = vmatpush.msra.mxu0 %v1426
  %1912 = vmatpush.msra.mxu0 %v1425
  %1913 = vmatpush.msra.mxu0 %v1424
  %1914 = vmatmul.f32.gmra.mxu0 %v1896
  %v1915 = vpop.f32.mrf.mxu0
  %v1916 = vadd.f32 0.0, %v1915
  %1917 = vdwg.mxu0
  %v1918 = vadd.f32 %v1895, %v1916
  %v1919 = vxor.u32 %v1918, 2147483648
  %v1920 = vmul.f32 %v1919, 1.442695
  %v1921 = vpow.pop %v1920
  %v1922 = vadd.f32 %v1921, 1.0
  %v1923 = vrcp.pop %v1922
  %v1924 = vmul.f32 %v1922, %v1923
  %v1925 = vsub.f32 1.0, %v1924
  %v1926 = vmul.f32 %v1923, %v1925
  %v1927 = vadd.f32 %v1923, %v1926
  %vm1928 = vweird.f32 %v1922
  %vm1929 = vweird.f32 %v1923
  %vm1930 = vmor %vm1928, %vm1929
  %v1931 = vsel %vm1930, %v1923, %v1927
  %v1932 = vand.u32 2147483647, %v1922
  %vm1933 = vcmp.eq.f32.partialorder %v1932, 8.507059e+37
  %v1934 = vand.u32 %v1922, 2147483648
  %v1935 = vor.u32 1.1754944e-38, %v1934
  %v1936 = vsel %vm1933, %v1935, %v1931
  %v1937 = vmul.f32 1.0, %v1936
  %v1938 = vtanh.pop %v1918
  %v1939 = vmul.f32 %v1937, %v1883
  %1941 = vrot.lane.b32.xlu0 %v1938, 64
  %v1942 = vpop.permute.xlu0 %1941
  %v1944 = vmul.f32 %v1937, %v1942
  %1946 = vrot.lane.b32.xlu0 %v1944, 32
  %v1947 = vpop.permute.xlu0 %1946
  %v1949 = vadd.f32 %v1939, %v1947
  %v1950 = vtanh.pop %v1949
  %1952 = vrot.lane.b32.xlu0 %v1950, 64
  %v1953 = vpop.permute.xlu0 %1952
  %v1955 = vmul.f32 %v1937, %v1953
  %1957 = vrot.lane.b32.xlu0 %v1955, 32
  %v1958 = vpop.permute.xlu0 %1957
  %1960 = vst.msk [vmem:[#allocation3 + $0x38] sm:$0xff] %vm154, %v1958
  %s1961 = scalar_lea.vmem %s18, 16
  %1962 = vst.msk [vmem:[%s1961] sm:$0xff] %vm154, %v1958
  %1964 = vrot.lane.b32.xlu0 %v1949, 96
  %v1965 = vpop.permute.xlu0 %1964
  %s1967 = scalar_lea.vmem %s19, 16
  %1968 = vst.msk [vmem:[%s1967] sm:$0xff] %vm154, %v1965
  %v1969 = vld [vmem:[#allocation3] sm:$0xff]
  %v1970 = vld [vmem:[#allocation3 + $0x8] sm:$0xff]
  %v1971 = vld [vmem:[#allocation3 + $0x10] sm:$0xff]
  %v1972 = vld [vmem:[#allocation3 + $0x18] sm:$0xff]
  %v1973 = vld [vmem:[#allocation3 + $0x20] sm:$0xff]
  %v1974 = vld [vmem:[#allocation3 + $0x28] sm:$0xff]
  %v1975 = vld [vmem:[#allocation3 + $0x30] sm:$0xff]
  %v1976 = vld [vmem:[#allocation3 + $0x38] sm:$0xff]
  %v1977 = vld [vmem:[%s12] sm:$0xff]
  %v1978 = vld [vmem:[%s12 + $0x8] sm:$0xff]
  %v1979 = vld [vmem:[%s12 + $0x10] sm:$0xff]
  %v1980 = vld [vmem:[%s12 + $0x18] sm:$0xff]
  %v1981 = vld [vmem:[%s14] sm:$0x1]
  %v1983 = vperm.slane %v1981, 0
  %v1986 = vsel %vm154, %v1969, 0
  %v1989 = vsel %vm154, %v1970, 0
  %v1992 = vsel %vm154, %v1971, 0
  %v1995 = vsel %vm154, %v1972, 0
  %v1998 = vsel %vm154, %v1973, 0
  %v2001 = vsel %vm154, %v1974, 0
  %v2004 = vsel %vm154, %v1975, 0
  %v2007 = vsel %vm154, %v1976, 0
  %2009 = vmatpush.msra.mxu0 0.0
  %2010 = vmatpush.msra.mxu0 0.0
  %2011 = vmatpush.msra.mxu0 0.0
  %2012 = vmatpush.msra.mxu0 0.0
  %2013 = vmatpush.msra.mxu0 0.0
  %2014 = vmatpush.msra.mxu0 0.0
  %2015 = vmatpush.msra.mxu0 0.0
  %2016 = vmatpush.msra.mxu0 0.0
  %2017 = vmatpush.msra.mxu0 0.0
  %2018 = vmatpush.msra.mxu0 0.0
  %2019 = vmatpush.msra.mxu0 0.0
  %2020 = vmatpush.msra.mxu0 0.0
  %2021 = vmatpush.msra.mxu0 %v1980
  %2022 = vmatpush.msra.mxu0 %v1979
  %2023 = vmatpush.msra.mxu0 %v1978
  %2024 = vmatpush.msra.mxu0 %v1977
  %2025 = vmatmul.f32.gmra.mxu0 %v1986
  %v2026 = vpop.f32.mrf.mxu0
  %v2027 = vadd.f32 %v1983, %v2026
  %2028 = vmatmul.f32.gmra.mxu0 %v1989
  %v2029 = vpop.f32.mrf.mxu0
  %v2030 = vadd.f32 %v1983, %v2029
  %2031 = vmatmul.f32.gmra.mxu0 %v1992
  %v2032 = vpop.f32.mrf.mxu0
  %v2033 = vadd.f32 %v1983, %v2032
  %2034 = vmatmul.f32.gmra.mxu0 %v1995
  %v2035 = vpop.f32.mrf.mxu0
  %v2036 = vadd.f32 %v1983, %v2035
  %2037 = vmatmul.f32.gmra.mxu0 %v1998
  %v2038 = vpop.f32.mrf.mxu0
  %v2039 = vadd.f32 %v1983, %v2038
  %2040 = vmatmul.f32.gmra.mxu0 %v2001
  %v2041 = vpop.f32.mrf.mxu0
  %v2042 = vadd.f32 %v1983, %v2041
  %2043 = vmatmul.f32.gmra.mxu0 %v2004
  %v2044 = vpop.f32.mrf.mxu0
  %v2045 = vadd.f32 %v1983, %v2044
  %2046 = vmatmul.f32.gmra.mxu0 %v2007
  %v2047 = vpop.f32.mrf.mxu0
  %v2048 = vadd.f32 %v1983, %v2047
  %2049 = vdwg.mxu0
  %2050 = vst [vmem:[#allocation2] sm:$0xff] %v2027
  %2051 = vst [vmem:[#allocation2 + $0x8] sm:$0xff] %v2030
  %2052 = vst [vmem:[#allocation2 + $0x10] sm:$0xff] %v2033
  %2053 = vst [vmem:[#allocation2 + $0x18] sm:$0xff] %v2036
  %2054 = vst [vmem:[#allocation2 + $0x20] sm:$0xff] %v2039
  %2055 = vst [vmem:[#allocation2 + $0x28] sm:$0xff] %v2042
  %2056 = vst [vmem:[#allocation2 + $0x30] sm:$0xff] %v2045
  %2057 = vst [vmem:[#allocation2 + $0x38] sm:$0xff] %v2048
  %s2058 = scalar_lea.vmem %s1, 24
  %v2059 = vld [vmem:[%s2058] sm:$0xff]
  %s2060 = scalar_lea.vmem %s2, 24
  %v2061 = vld [vmem:[%s2060] sm:$0xff]
  %v2062 = vld [vmem:[%s13] sm:$0xff]
  %v2063 = vld [vmem:[%s13 + $0x8] sm:$0xff]
  %v2064 = vld [vmem:[%s13 + $0x10] sm:$0xff]
  %v2065 = vld [vmem:[%s13 + $0x18] sm:$0xff]
  %v2066 = vld [vmem:[#allocation2] sm:$0xff]
  %v2068 = vsel %vm154, %v2059, 0
  %2070 = vmatpush.msra.mxu0 0.0
  %2071 = vmatpush.msra.mxu0 0.0
  %2072 = vmatpush.msra.mxu0 0.0
  %2073 = vmatpush.msra.mxu0 0.0
  %2074 = vmatpush.msra.mxu0 0.0
  %2075 = vmatpush.msra.mxu0 0.0
  %2076 = vmatpush.msra.mxu0 0.0
  %2077 = vmatpush.msra.mxu0 0.0
  %2078 = vmatpush.msra.mxu0 0.0
  %2079 = vmatpush.msra.mxu0 0.0
  %2080 = vmatpush.msra.mxu0 0.0
  %2081 = vmatpush.msra.mxu0 0.0
  %2082 = vmatpush.msra.mxu0 %v2065
  %2083 = vmatpush.msra.mxu0 %v2064
  %2084 = vmatpush.msra.mxu0 %v2063
  %2085 = vmatpush.msra.mxu0 %v2062
  %2086 = vmatmul.f32.gmra.mxu0 %v2068
  %v2087 = vpop.f32.mrf.mxu0
  %v2088 = vadd.f32 0.0, %v2087
  %2089 = vdwg.mxu0
  %v2090 = vadd.f32 %v2066, %v2088
  %v2091 = vxor.u32 %v2090, 2147483648
  %v2092 = vmul.f32 %v2091, 1.442695
  %v2093 = vpow.pop %v2092
  %v2094 = vadd.f32 %v2093, 1.0
  %v2095 = vrcp.pop %v2094
  %v2096 = vmul.f32 %v2094, %v2095
  %v2097 = vsub.f32 1.0, %v2096
  %v2098 = vmul.f32 %v2095, %v2097
  %v2099 = vadd.f32 %v2095, %v2098
  %vm2100 = vweird.f32 %v2094
  %vm2101 = vweird.f32 %v2095
  %vm2102 = vmor %vm2100, %vm2101
  %v2103 = vsel %vm2102, %v2095, %v2099
  %v2104 = vand.u32 2147483647, %v2094
  %vm2105 = vcmp.eq.f32.partialorder %v2104, 8.507059e+37
  %v2106 = vand.u32 %v2094, 2147483648
  %v2107 = vor.u32 1.1754944e-38, %v2106
  %v2108 = vsel %vm2105, %v2107, %v2103
  %v2109 = vmul.f32 1.0, %v2108
  %v2110 = vtanh.pop %v2090
  %2112 = vrot.lane.b32.xlu0 %v2061, 32
  %v2113 = vpop.permute.xlu0 %2112
  %v2115 = vmul.f32 %v2109, %v2113
  %2117 = vrot.lane.b32.xlu0 %v2110, 64
  %v2118 = vpop.permute.xlu0 %2117
  %v2120 = vmul.f32 %v2109, %v2118
  %2122 = vrot.lane.b32.xlu0 %v2120, 32
  %v2123 = vpop.permute.xlu0 %2122
  %v2125 = vadd.f32 %v2115, %v2123
  %v2126 = vtanh.pop %v2125
  %2128 = vrot.lane.b32.xlu0 %v2126, 64
  %v2129 = vpop.permute.xlu0 %2128
  %v2131 = vmul.f32 %v2109, %v2129
  %2133 = vrot.lane.b32.xlu0 %v2131, 32
  %v2134 = vpop.permute.xlu0 %2133
  %2136 = vst.msk [vmem:[#allocation3] sm:$0xff] %vm154, %v2134
  %v2137 = vld [vmem:[#allocation2 + $0x8] sm:$0xff]
  %v2138 = vsel %vm154, %v2134, 0
  %2140 = vmatpush.msra.mxu0 0.0
  %2141 = vmatpush.msra.mxu0 0.0
  %2142 = vmatpush.msra.mxu0 0.0
  %2143 = vmatpush.msra.mxu0 0.0
  %2144 = vmatpush.msra.mxu0 0.0
  %2145 = vmatpush.msra.mxu0 0.0
  %2146 = vmatpush.msra.mxu0 0.0
  %2147 = vmatpush.msra.mxu0 0.0
  %2148 = vmatpush.msra.mxu0 0.0
  %2149 = vmatpush.msra.mxu0 0.0
  %2150 = vmatpush.msra.mxu0 0.0
  %2151 = vmatpush.msra.mxu0 0.0
  %2152 = vmatpush.msra.mxu0 %v2065
  %2153 = vmatpush.msra.mxu0 %v2064
  %2154 = vmatpush.msra.mxu0 %v2063
  %2155 = vmatpush.msra.mxu0 %v2062
  %2156 = vmatmul.f32.gmra.mxu0 %v2138
  %v2157 = vpop.f32.mrf.mxu0
  %v2158 = vadd.f32 0.0, %v2157
  %2159 = vdwg.mxu0
  %v2160 = vadd.f32 %v2137, %v2158
  %v2161 = vxor.u32 %v2160, 2147483648
  %v2162 = vmul.f32 %v2161, 1.442695
  %v2163 = vpow.pop %v2162
  %v2164 = vadd.f32 %v2163, 1.0
  %v2165 = vrcp.pop %v2164
  %v2166 = vmul.f32 %v2164, %v2165
  %v2167 = vsub.f32 1.0, %v2166
  %v2168 = vmul.f32 %v2165, %v2167
  %v2169 = vadd.f32 %v2165, %v2168
  %vm2170 = vweird.f32 %v2164
  %vm2171 = vweird.f32 %v2165
  %vm2172 = vmor %vm2170, %vm2171
  %v2173 = vsel %vm2172, %v2165, %v2169
  %v2174 = vand.u32 2147483647, %v2164
  %vm2175 = vcmp.eq.f32.partialorder %v2174, 8.507059e+37
  %v2176 = vand.u32 %v2164, 2147483648
  %v2177 = vor.u32 1.1754944e-38, %v2176
  %v2178 = vsel %vm2175, %v2177, %v2173
  %v2179 = vmul.f32 1.0, %v2178
  %v2180 = vtanh.pop %v2160
  %v2181 = vmul.f32 %v2179, %v2125
  %2183 = vrot.lane.b32.xlu0 %v2180, 64
  %v2184 = vpop.permute.xlu0 %2183
  %v2186 = vmul.f32 %v2179, %v2184
  %2188 = vrot.lane.b32.xlu0 %v2186, 32
  %v2189 = vpop.permute.xlu0 %2188
  %v2191 = vadd.f32 %v2181, %v2189
  %v2192 = vtanh.pop %v2191
  %2194 = vrot.lane.b32.xlu0 %v2192, 64
  %v2195 = vpop.permute.xlu0 %2194
  %v2197 = vmul.f32 %v2179, %v2195
  %2199 = vrot.lane.b32.xlu0 %v2197, 32
  %v2200 = vpop.permute.xlu0 %2199
  %2202 = vst.msk [vmem:[#allocation3 + $0x8] sm:$0xff] %vm154, %v2200
  %v2203 = vld [vmem:[#allocation2 + $0x10] sm:$0xff]
  %v2204 = vsel %vm154, %v2200, 0
  %2206 = vmatpush.msra.mxu0 0.0
  %2207 = vmatpush.msra.mxu0 0.0
  %2208 = vmatpush.msra.mxu0 0.0
  %2209 = vmatpush.msra.mxu0 0.0
  %2210 = vmatpush.msra.mxu0 0.0
  %2211 = vmatpush.msra.mxu0 0.0
  %2212 = vmatpush.msra.mxu0 0.0
  %2213 = vmatpush.msra.mxu0 0.0
  %2214 = vmatpush.msra.mxu0 0.0
  %2215 = vmatpush.msra.mxu0 0.0
  %2216 = vmatpush.msra.mxu0 0.0
  %2217 = vmatpush.msra.mxu0 0.0
  %2218 = vmatpush.msra.mxu0 %v2065
  %2219 = vmatpush.msra.mxu0 %v2064
  %2220 = vmatpush.msra.mxu0 %v2063
  %2221 = vmatpush.msra.mxu0 %v2062
  %2222 = vmatmul.f32.gmra.mxu0 %v2204
  %v2223 = vpop.f32.mrf.mxu0
  %v2224 = vadd.f32 0.0, %v2223
  %2225 = vdwg.mxu0
  %v2226 = vadd.f32 %v2203, %v2224
  %v2227 = vxor.u32 %v2226, 2147483648
  %v2228 = vmul.f32 %v2227, 1.442695
  %v2229 = vpow.pop %v2228
  %v2230 = vadd.f32 %v2229, 1.0
  %v2231 = vrcp.pop %v2230
  %v2232 = vmul.f32 %v2230, %v2231
  %v2233 = vsub.f32 1.0, %v2232
  %v2234 = vmul.f32 %v2231, %v2233
  %v2235 = vadd.f32 %v2231, %v2234
  %vm2236 = vweird.f32 %v2230
  %vm2237 = vweird.f32 %v2231
  %vm2238 = vmor %vm2236, %vm2237
  %v2239 = vsel %vm2238, %v2231, %v2235
  %v2240 = vand.u32 2147483647, %v2230
  %vm2241 = vcmp.eq.f32.partialorder %v2240, 8.507059e+37
  %v2242 = vand.u32 %v2230, 2147483648
  %v2243 = vor.u32 1.1754944e-38, %v2242
  %v2244 = vsel %vm2241, %v2243, %v2239
  %v2245 = vmul.f32 1.0, %v2244
  %v2246 = vtanh.pop %v2226
  %v2247 = vmul.f32 %v2245, %v2191
  %2249 = vrot.lane.b32.xlu0 %v2246, 64
  %v2250 = vpop.permute.xlu0 %2249
  %v2252 = vmul.f32 %v2245, %v2250
  %2254 = vrot.lane.b32.xlu0 %v2252, 32
  %v2255 = vpop.permute.xlu0 %2254
  %v2257 = vadd.f32 %v2247, %v2255
  %v2258 = vtanh.pop %v2257
  %2260 = vrot.lane.b32.xlu0 %v2258, 64
  %v2261 = vpop.permute.xlu0 %2260
  %v2263 = vmul.f32 %v2245, %v2261
  %2265 = vrot.lane.b32.xlu0 %v2263, 32
  %v2266 = vpop.permute.xlu0 %2265
  %2268 = vst.msk [vmem:[#allocation3 + $0x10] sm:$0xff] %vm154, %v2266
  %v2269 = vld [vmem:[#allocation2 + $0x18] sm:$0xff]
  %v2270 = vsel %vm154, %v2266, 0
  %2272 = vmatpush.msra.mxu0 0.0
  %2273 = vmatpush.msra.mxu0 0.0
  %2274 = vmatpush.msra.mxu0 0.0
  %2275 = vmatpush.msra.mxu0 0.0
  %2276 = vmatpush.msra.mxu0 0.0
  %2277 = vmatpush.msra.mxu0 0.0
  %2278 = vmatpush.msra.mxu0 0.0
  %2279 = vmatpush.msra.mxu0 0.0
  %2280 = vmatpush.msra.mxu0 0.0
  %2281 = vmatpush.msra.mxu0 0.0
  %2282 = vmatpush.msra.mxu0 0.0
  %2283 = vmatpush.msra.mxu0 0.0
  %2284 = vmatpush.msra.mxu0 %v2065
  %2285 = vmatpush.msra.mxu0 %v2064
  %2286 = vmatpush.msra.mxu0 %v2063
  %2287 = vmatpush.msra.mxu0 %v2062
  %2288 = vmatmul.f32.gmra.mxu0 %v2270
  %v2289 = vpop.f32.mrf.mxu0
  %v2290 = vadd.f32 0.0, %v2289
  %2291 = vdwg.mxu0
  %v2292 = vadd.f32 %v2269, %v2290
  %v2293 = vxor.u32 %v2292, 2147483648
  %v2294 = vmul.f32 %v2293, 1.442695
  %v2295 = vpow.pop %v2294
  %v2296 = vadd.f32 %v2295, 1.0
  %v2297 = vrcp.pop %v2296
  %v2298 = vmul.f32 %v2296, %v2297
  %v2299 = vsub.f32 1.0, %v2298
  %v2300 = vmul.f32 %v2297, %v2299
  %v2301 = vadd.f32 %v2297, %v2300
  %vm2302 = vweird.f32 %v2296
  %vm2303 = vweird.f32 %v2297
  %vm2304 = vmor %vm2302, %vm2303
  %v2305 = vsel %vm2304, %v2297, %v2301
  %v2306 = vand.u32 2147483647, %v2296
  %vm2307 = vcmp.eq.f32.partialorder %v2306, 8.507059e+37
  %v2308 = vand.u32 %v2296, 2147483648
  %v2309 = vor.u32 1.1754944e-38, %v2308
  %v2310 = vsel %vm2307, %v2309, %v2305
  %v2311 = vmul.f32 1.0, %v2310
  %v2312 = vtanh.pop %v2292
  %v2313 = vmul.f32 %v2311, %v2257
  %2315 = vrot.lane.b32.xlu0 %v2312, 64
  %v2316 = vpop.permute.xlu0 %2315
  %v2318 = vmul.f32 %v2311, %v2316
  %2320 = vrot.lane.b32.xlu0 %v2318, 32
  %v2321 = vpop.permute.xlu0 %2320
  %v2323 = vadd.f32 %v2313, %v2321
  %v2324 = vtanh.pop %v2323
  %2326 = vrot.lane.b32.xlu0 %v2324, 64
  %v2327 = vpop.permute.xlu0 %2326
  %v2329 = vmul.f32 %v2311, %v2327
  %2331 = vrot.lane.b32.xlu0 %v2329, 32
  %v2332 = vpop.permute.xlu0 %2331
  %2334 = vst.msk [vmem:[#allocation3 + $0x18] sm:$0xff] %vm154, %v2332
  %v2335 = vld [vmem:[#allocation2 + $0x20] sm:$0xff]
  %v2336 = vsel %vm154, %v2332, 0
  %2338 = vmatpush.msra.mxu0 0.0
  %2339 = vmatpush.msra.mxu0 0.0
  %2340 = vmatpush.msra.mxu0 0.0
  %2341 = vmatpush.msra.mxu0 0.0
  %2342 = vmatpush.msra.mxu0 0.0
  %2343 = vmatpush.msra.mxu0 0.0
  %2344 = vmatpush.msra.mxu0 0.0
  %2345 = vmatpush.msra.mxu0 0.0
  %2346 = vmatpush.msra.mxu0 0.0
  %2347 = vmatpush.msra.mxu0 0.0
  %2348 = vmatpush.msra.mxu0 0.0
  %2349 = vmatpush.msra.mxu0 0.0
  %2350 = vmatpush.msra.mxu0 %v2065
  %2351 = vmatpush.msra.mxu0 %v2064
  %2352 = vmatpush.msra.mxu0 %v2063
  %2353 = vmatpush.msra.mxu0 %v2062
  %2354 = vmatmul.f32.gmra.mxu0 %v2336
  %v2355 = vpop.f32.mrf.mxu0
  %v2356 = vadd.f32 0.0, %v2355
  %2357 = vdwg.mxu0
  %v2358 = vadd.f32 %v2335, %v2356
  %v2359 = vxor.u32 %v2358, 2147483648
  %v2360 = vmul.f32 %v2359, 1.442695
  %v2361 = vpow.pop %v2360
  %v2362 = vadd.f32 %v2361, 1.0
  %v2363 = vrcp.pop %v2362
  %v2364 = vmul.f32 %v2362, %v2363
  %v2365 = vsub.f32 1.0, %v2364
  %v2366 = vmul.f32 %v2363, %v2365
  %v2367 = vadd.f32 %v2363, %v2366
  %vm2368 = vweird.f32 %v2362
  %vm2369 = vweird.f32 %v2363
  %vm2370 = vmor %vm2368, %vm2369
  %v2371 = vsel %vm2370, %v2363, %v2367
  %v2372 = vand.u32 2147483647, %v2362
  %vm2373 = vcmp.eq.f32.partialorder %v2372, 8.507059e+37
  %v2374 = vand.u32 %v2362, 2147483648
  %v2375 = vor.u32 1.1754944e-38, %v2374
  %v2376 = vsel %vm2373, %v2375, %v2371
  %v2377 = vmul.f32 1.0, %v2376
  %v2378 = vtanh.pop %v2358
  %v2379 = vmul.f32 %v2377, %v2323
  %2381 = vrot.lane.b32.xlu0 %v2378, 64
  %v2382 = vpop.permute.xlu0 %2381
  %v2384 = vmul.f32 %v2377, %v2382
  %2386 = vrot.lane.b32.xlu0 %v2384, 32
  %v2387 = vpop.permute.xlu0 %2386
  %v2389 = vadd.f32 %v2379, %v2387
  %v2390 = vtanh.pop %v2389
  %2392 = vrot.lane.b32.xlu0 %v2390, 64
  %v2393 = vpop.permute.xlu0 %2392
  %v2395 = vmul.f32 %v2377, %v2393
  %2397 = vrot.lane.b32.xlu0 %v2395, 32
  %v2398 = vpop.permute.xlu0 %2397
  %2400 = vst.msk [vmem:[#allocation3 + $0x20] sm:$0xff] %vm154, %v2398
  %v2401 = vld [vmem:[#allocation2 + $0x28] sm:$0xff]
  %v2402 = vsel %vm154, %v2398, 0
  %2404 = vmatpush.msra.mxu0 0.0
  %2405 = vmatpush.msra.mxu0 0.0
  %2406 = vmatpush.msra.mxu0 0.0
  %2407 = vmatpush.msra.mxu0 0.0
  %2408 = vmatpush.msra.mxu0 0.0
  %2409 = vmatpush.msra.mxu0 0.0
  %2410 = vmatpush.msra.mxu0 0.0
  %2411 = vmatpush.msra.mxu0 0.0
  %2412 = vmatpush.msra.mxu0 0.0
  %2413 = vmatpush.msra.mxu0 0.0
  %2414 = vmatpush.msra.mxu0 0.0
  %2415 = vmatpush.msra.mxu0 0.0
  %2416 = vmatpush.msra.mxu0 %v2065
  %2417 = vmatpush.msra.mxu0 %v2064
  %2418 = vmatpush.msra.mxu0 %v2063
  %2419 = vmatpush.msra.mxu0 %v2062
  %2420 = vmatmul.f32.gmra.mxu0 %v2402
  %v2421 = vpop.f32.mrf.mxu0
  %v2422 = vadd.f32 0.0, %v2421
  %2423 = vdwg.mxu0
  %v2424 = vadd.f32 %v2401, %v2422
  %v2425 = vxor.u32 %v2424, 2147483648
  %v2426 = vmul.f32 %v2425, 1.442695
  %v2427 = vpow.pop %v2426
  %v2428 = vadd.f32 %v2427, 1.0
  %v2429 = vrcp.pop %v2428
  %v2430 = vmul.f32 %v2428, %v2429
  %v2431 = vsub.f32 1.0, %v2430
  %v2432 = vmul.f32 %v2429, %v2431
  %v2433 = vadd.f32 %v2429, %v2432
  %vm2434 = vweird.f32 %v2428
  %vm2435 = vweird.f32 %v2429
  %vm2436 = vmor %vm2434, %vm2435
  %v2437 = vsel %vm2436, %v2429, %v2433
  %v2438 = vand.u32 2147483647, %v2428
  %vm2439 = vcmp.eq.f32.partialorder %v2438, 8.507059e+37
  %v2440 = vand.u32 %v2428, 2147483648
  %v2441 = vor.u32 1.1754944e-38, %v2440
  %v2442 = vsel %vm2439, %v2441, %v2437
  %v2443 = vmul.f32 1.0, %v2442
  %v2444 = vtanh.pop %v2424
  %v2445 = vmul.f32 %v2443, %v2389
  %2447 = vrot.lane.b32.xlu0 %v2444, 64
  %v2448 = vpop.permute.xlu0 %2447
  %v2450 = vmul.f32 %v2443, %v2448
  %2452 = vrot.lane.b32.xlu0 %v2450, 32
  %v2453 = vpop.permute.xlu0 %2452
  %v2455 = vadd.f32 %v2445, %v2453
  %v2456 = vtanh.pop %v2455
  %2458 = vrot.lane.b32.xlu0 %v2456, 64
  %v2459 = vpop.permute.xlu0 %2458
  %v2461 = vmul.f32 %v2443, %v2459
  %2463 = vrot.lane.b32.xlu0 %v2461, 32
  %v2464 = vpop.permute.xlu0 %2463
  %2466 = vst.msk [vmem:[#allocation3 + $0x28] sm:$0xff] %vm154, %v2464
  %v2467 = vld [vmem:[#allocation2 + $0x30] sm:$0xff]
  %v2468 = vsel %vm154, %v2464, 0
  %2470 = vmatpush.msra.mxu0 0.0
  %2471 = vmatpush.msra.mxu0 0.0
  %2472 = vmatpush.msra.mxu0 0.0
  %2473 = vmatpush.msra.mxu0 0.0
  %2474 = vmatpush.msra.mxu0 0.0
  %2475 = vmatpush.msra.mxu0 0.0
  %2476 = vmatpush.msra.mxu0 0.0
  %2477 = vmatpush.msra.mxu0 0.0
  %2478 = vmatpush.msra.mxu0 0.0
  %2479 = vmatpush.msra.mxu0 0.0
  %2480 = vmatpush.msra.mxu0 0.0
  %2481 = vmatpush.msra.mxu0 0.0
  %2482 = vmatpush.msra.mxu0 %v2065
  %2483 = vmatpush.msra.mxu0 %v2064
  %2484 = vmatpush.msra.mxu0 %v2063
  %2485 = vmatpush.msra.mxu0 %v2062
  %2486 = vmatmul.f32.gmra.mxu0 %v2468
  %v2487 = vpop.f32.mrf.mxu0
  %v2488 = vadd.f32 0.0, %v2487
  %2489 = vdwg.mxu0
  %v2490 = vadd.f32 %v2467, %v2488
  %v2491 = vxor.u32 %v2490, 2147483648
  %v2492 = vmul.f32 %v2491, 1.442695
  %v2493 = vpow.pop %v2492
  %v2494 = vadd.f32 %v2493, 1.0
  %v2495 = vrcp.pop %v2494
  %v2496 = vmul.f32 %v2494, %v2495
  %v2497 = vsub.f32 1.0, %v2496
  %v2498 = vmul.f32 %v2495, %v2497
  %v2499 = vadd.f32 %v2495, %v2498
  %vm2500 = vweird.f32 %v2494
  %vm2501 = vweird.f32 %v2495
  %vm2502 = vmor %vm2500, %vm2501
  %v2503 = vsel %vm2502, %v2495, %v2499
  %v2504 = vand.u32 2147483647, %v2494
  %vm2505 = vcmp.eq.f32.partialorder %v2504, 8.507059e+37
  %v2506 = vand.u32 %v2494, 2147483648
  %v2507 = vor.u32 1.1754944e-38, %v2506
  %v2508 = vsel %vm2505, %v2507, %v2503
  %v2509 = vmul.f32 1.0, %v2508
  %v2510 = vtanh.pop %v2490
  %v2511 = vmul.f32 %v2509, %v2455
  %2513 = vrot.lane.b32.xlu0 %v2510, 64
  %v2514 = vpop.permute.xlu0 %2513
  %v2516 = vmul.f32 %v2509, %v2514
  %2518 = vrot.lane.b32.xlu0 %v2516, 32
  %v2519 = vpop.permute.xlu0 %2518
  %v2521 = vadd.f32 %v2511, %v2519
  %v2522 = vtanh.pop %v2521
  %2524 = vrot.lane.b32.xlu0 %v2522, 64
  %v2525 = vpop.permute.xlu0 %2524
  %v2527 = vmul.f32 %v2509, %v2525
  %2529 = vrot.lane.b32.xlu0 %v2527, 32
  %v2530 = vpop.permute.xlu0 %2529
  %2532 = vst.msk [vmem:[#allocation3 + $0x30] sm:$0xff] %vm154, %v2530
  %v2533 = vld [vmem:[#allocation2 + $0x38] sm:$0xff]
  %v2534 = vsel %vm154, %v2530, 0
  %2536 = vmatpush.msra.mxu0 0.0
  %2537 = vmatpush.msra.mxu0 0.0
  %2538 = vmatpush.msra.mxu0 0.0
  %2539 = vmatpush.msra.mxu0 0.0
  %2540 = vmatpush.msra.mxu0 0.0
  %2541 = vmatpush.msra.mxu0 0.0
  %2542 = vmatpush.msra.mxu0 0.0
  %2543 = vmatpush.msra.mxu0 0.0
  %2544 = vmatpush.msra.mxu0 0.0
  %2545 = vmatpush.msra.mxu0 0.0
  %2546 = vmatpush.msra.mxu0 0.0
  %2547 = vmatpush.msra.mxu0 0.0
  %2548 = vmatpush.msra.mxu0 %v2065
  %2549 = vmatpush.msra.mxu0 %v2064
  %2550 = vmatpush.msra.mxu0 %v2063
  %2551 = vmatpush.msra.mxu0 %v2062
  %2552 = vmatmul.f32.gmra.mxu0 %v2534
  %v2553 = vpop.f32.mrf.mxu0
  %v2554 = vadd.f32 0.0, %v2553
  %2555 = vdwg.mxu0
  %v2556 = vadd.f32 %v2533, %v2554
  %v2557 = vxor.u32 %v2556, 2147483648
  %v2558 = vmul.f32 %v2557, 1.442695
  %v2559 = vpow.pop %v2558
  %v2560 = vadd.f32 %v2559, 1.0
  %v2561 = vrcp.pop %v2560
  %v2562 = vmul.f32 %v2560, %v2561
  %v2563 = vsub.f32 1.0, %v2562
  %v2564 = vmul.f32 %v2561, %v2563
  %v2565 = vadd.f32 %v2561, %v2564
  %vm2566 = vweird.f32 %v2560
  %vm2567 = vweird.f32 %v2561
  %vm2568 = vmor %vm2566, %vm2567
  %v2569 = vsel %vm2568, %v2561, %v2565
  %v2570 = vand.u32 2147483647, %v2560
  %vm2571 = vcmp.eq.f32.partialorder %v2570, 8.507059e+37
  %v2572 = vand.u32 %v2560, 2147483648
  %v2573 = vor.u32 1.1754944e-38, %v2572
  %v2574 = vsel %vm2571, %v2573, %v2569
  %v2575 = vmul.f32 1.0, %v2574
  %v2576 = vtanh.pop %v2556
  %v2577 = vmul.f32 %v2575, %v2521
  %2579 = vrot.lane.b32.xlu0 %v2576, 64
  %v2580 = vpop.permute.xlu0 %2579
  %v2582 = vmul.f32 %v2575, %v2580
  %2584 = vrot.lane.b32.xlu0 %v2582, 32
  %v2585 = vpop.permute.xlu0 %2584
  %v2587 = vadd.f32 %v2577, %v2585
  %v2588 = vtanh.pop %v2587
  %2590 = vrot.lane.b32.xlu0 %v2588, 64
  %v2591 = vpop.permute.xlu0 %2590
  %v2593 = vmul.f32 %v2575, %v2591
  %2595 = vrot.lane.b32.xlu0 %v2593, 32
  %v2596 = vpop.permute.xlu0 %2595
  %2598 = vst.msk [vmem:[#allocation3 + $0x38] sm:$0xff] %vm154, %v2596
  %s2599 = scalar_lea.vmem %s18, 24
  %2600 = vst.msk [vmem:[%s2599] sm:$0xff] %vm154, %v2596
  %2602 = vrot.lane.b32.xlu0 %v2587, 96
  %v2603 = vpop.permute.xlu0 %2602
  %s2605 = scalar_lea.vmem %s19, 24
  %2606 = vst.msk [vmem:[%s2605] sm:$0xff] %vm154, %v2603
  %v2607 = vld [vmem:[#allocation3] sm:$0xff]
  %v2608 = vld [vmem:[#allocation3 + $0x8] sm:$0xff]
  %v2609 = vld [vmem:[#allocation3 + $0x10] sm:$0xff]
  %v2610 = vld [vmem:[#allocation3 + $0x18] sm:$0xff]
  %v2611 = vld [vmem:[#allocation3 + $0x20] sm:$0xff]
  %v2612 = vld [vmem:[#allocation3 + $0x28] sm:$0xff]
  %v2613 = vld [vmem:[#allocation3 + $0x30] sm:$0xff]
  %v2614 = vld [vmem:[#allocation3 + $0x38] sm:$0xff]
  %v2615 = vld [vmem:[%s15] sm:$0xff]
  %v2616 = vld [vmem:[%s15 + $0x8] sm:$0xff]
  %v2617 = vld [vmem:[%s15 + $0x10] sm:$0xff]
  %v2618 = vld [vmem:[%s15 + $0x18] sm:$0xff]
  %v2619 = vld [vmem:[%s16] sm:$0x1]
  %v2621 = vperm.slane %v2619, 0
  %v2624 = vsel %vm154, %v2607, 0
  %v2627 = vsel %vm154, %v2608, 0
  %v2630 = vsel %vm154, %v2609, 0
  %v2633 = vsel %vm154, %v2610, 0
  %v2636 = vsel %vm154, %v2611, 0
  %v2639 = vsel %vm154, %v2612, 0
  %v2642 = vsel %vm154, %v2613, 0
  %v2645 = vsel %vm154, %v2614, 0
  %2647 = vmatpush.msra.mxu0 0.0
  %2648 = vmatpush.msra.mxu0 0.0
  %2649 = vmatpush.msra.mxu0 0.0
  %2650 = vmatpush.msra.mxu0 0.0
  %2651 = vmatpush.msra.mxu0 0.0
  %2652 = vmatpush.msra.mxu0 0.0
  %2653 = vmatpush.msra.mxu0 0.0
  %2654 = vmatpush.msra.mxu0 0.0
  %2655 = vmatpush.msra.mxu0 0.0
  %2656 = vmatpush.msra.mxu0 0.0
  %2657 = vmatpush.msra.mxu0 0.0
  %2658 = vmatpush.msra.mxu0 0.0
  %2659 = vmatpush.msra.mxu0 %v2618
  %2660 = vmatpush.msra.mxu0 %v2617
  %2661 = vmatpush.msra.mxu0 %v2616
  %2662 = vmatpush.msra.mxu0 %v2615
  %2663 = vmatmul.f32.gmra.mxu0 %v2624
  %v2664 = vpop.f32.mrf.mxu0
  %v2665 = vadd.f32 %v2621, %v2664
  %2666 = vmatmul.f32.gmra.mxu0 %v2627
  %v2667 = vpop.f32.mrf.mxu0
  %v2668 = vadd.f32 %v2621, %v2667
  %2669 = vmatmul.f32.gmra.mxu0 %v2630
  %v2670 = vpop.f32.mrf.mxu0
  %v2671 = vadd.f32 %v2621, %v2670
  %2672 = vmatmul.f32.gmra.mxu0 %v2633
  %v2673 = vpop.f32.mrf.mxu0
  %v2674 = vadd.f32 %v2621, %v2673
  %2675 = vmatmul.f32.gmra.mxu0 %v2636
  %v2676 = vpop.f32.mrf.mxu0
  %v2677 = vadd.f32 %v2621, %v2676
  %2678 = vmatmul.f32.gmra.mxu0 %v2639
  %v2679 = vpop.f32.mrf.mxu0
  %v2680 = vadd.f32 %v2621, %v2679
  %2681 = vmatmul.f32.gmra.mxu0 %v2642
  %v2682 = vpop.f32.mrf.mxu0
  %v2683 = vadd.f32 %v2621, %v2682
  %2684 = vmatmul.f32.gmra.mxu0 %v2645
  %v2685 = vpop.f32.mrf.mxu0
  %v2686 = vadd.f32 %v2621, %v2685
  %2687 = vdwg.mxu0
  %2688 = vst [vmem:[%s17] sm:$0xff] %v2665
  %2689 = vst [vmem:[%s17 + $0x8] sm:$0xff] %v2668
  %2690 = vst [vmem:[%s17 + $0x10] sm:$0xff] %v2671
  %2691 = vst [vmem:[%s17 + $0x18] sm:$0xff] %v2674
  %2692 = vst [vmem:[%s17 + $0x20] sm:$0xff] %v2677
  %2693 = vst [vmem:[%s17 + $0x28] sm:$0xff] %v2680
  %2694 = vst [vmem:[%s17 + $0x30] sm:$0xff] %v2683
  %2695 = vst [vmem:[%s17 + $0x38] sm:$0xff] %v2686
  // Predicated region
  $region70: #{char_model_forward.1} parent=0 // pred_check
    _
  $region71: #{char_model_forward.1} parent=0 // pred_check_branch
    %2697 = sbr.rel (0) target = $region73
  $region72: #{char_model_forward.1} parent=0 // pred_region
    _
  $region73: #{char_model_forward.1} parent=0 // pred_fallthru
    _
  // Predicated region
  $region74: #{char_model_forward.1} parent=0 // pred_check
    _
  $region75: #{char_model_forward.1} parent=0 // pred_check_branch
    %2699 = sbr.rel (0) target = $region77
  $region76: #{char_model_forward.1} parent=0 // pred_region
    _
  $region77: #{char_model_forward.1} parent=0 // pred_fallthru
    _
  // Predicated region
  $region78: #{char_model_forward.1} parent=0 // pred_check
    _
  $region79: #{char_model_forward.1} parent=0 // pred_check_branch
    %2701 = sbr.rel (0) target = $region81
  $region80: #{char_model_forward.1} parent=0 // pred_region
    _
  $region81: #{char_model_forward.1} parent=0 // pred_fallthru
    _
  // Predicated region
  $region82: #{char_model_forward.1} parent=0 // pred_check
    _
  $region83: #{char_model_forward.1} parent=0 // pred_check_branch
    %2703 = sbr.rel (0) target = $region85
  $region84: #{char_model_forward.1} parent=0 // pred_region
    _
  $region85: #{char_model_forward.1} parent=0 // pred_fallthru
    _
  // Predicated region
  $region86: #{char_model_forward.1} parent=0 // pred_check
    _
  $region87: #{char_model_forward.1} parent=0 // pred_check_branch
    %2705 = sbr.rel (0) target = $region89
  $region88: #{char_model_forward.1} parent=0 // pred_region
    _
  $region89: #{char_model_forward.1} parent=0 // pred_fallthru
    _
  // Predicated region
  $region90: #{char_model_forward.1} parent=0 // pred_check
    _
  $region91: #{char_model_forward.1} parent=0 // pred_check_branch
    %2707 = sbr.rel (0) target = $region93
  $region92: #{char_model_forward.1} parent=0 // pred_region
    _
  $region93: #{char_model_forward.1} parent=0 // pred_fallthru
    _

</llo_original>
